<compile_context>
chip_gen: v7x
topology: tpu7x:2x2x1
jax: 0.10.0
libtpu: 0.0.40
codegen_flags: <defaults>
</compile_context>

<pallas_src>
import functools

import jax
import jax.numpy as jnp
from jax import lax
from jax.experimental import pallas as pl
from jax.experimental.pallas import tpu as pltpu

LANE = 128


# ----------------------------- Pallas kernel -------------------------------

def _mm_fused_kernel(a_ref, b_ref, bias_ref, o_ref, *, epilogue, n_valid):
    # bf16 MXU operands, f32 accumulation (native MXU path on v5e/v6e/v7x).
    a = a_ref[...].astype(jnp.bfloat16)
    acc = jnp.dot(a, b_ref[...], preferred_element_type=jnp.float32)
    acc = acc + bias_ref[...]                       # f32 VPU epilogue (v5e-safe)
    if epilogue == "relu":
        acc = jnp.maximum(acc, 0.0)
    elif epilogue == "log_softmax":
        # Padded columns (>= n_valid) are masked out of the softmax.
        col = lax.broadcasted_iota(jnp.int32, acc.shape, 1)
        x = jnp.where(col < n_valid, acc, -1e30)
        m = jnp.max(x, axis=-1, keepdims=True)
        s = x - m
        lse = jnp.log(jnp.sum(jnp.exp(s), axis=-1, keepdims=True))
        acc = s - lse
    o_ref[...] = acc


def pallas_matmul_fused(a, b_bf16, bias, *, epilogue="none", n_valid=0):
    """(M,K)f32 @ (K,128)bf16 + bias[1,128], fused relu / log_softmax epilogue."""
    M, K = a.shape
    K2, N = b_bf16.shape
    assert K == K2 and bias.shape == (1, N)
    kernel = functools.partial(_mm_fused_kernel, epilogue=epilogue, n_valid=n_valid)
    # TODO(synk): at large batch, tile over M with a 'parallel' grid axis and
    # generate im2col patches in-kernel instead of full-array grid=(1,) blocks.
    return pl.pallas_call(
        kernel,
        grid=(1,),
        in_specs=[
            pl.BlockSpec((M, K), lambda i: (0, 0)),
            pl.BlockSpec((K, N), lambda i: (0, 0)),
            pl.BlockSpec((1, N), lambda i: (0, 0)),
        ],
        out_specs=pl.BlockSpec((M, N), lambda i: (0, 0)),
        out_shape=jax.ShapeDtypeStruct((M, N), jnp.float32),
        compiler_params=pltpu.CompilerParams(dimension_semantics=("arbitrary",)),
    )(a.astype(jnp.float32), b_bf16, bias)


# ------------------------------- JAX glue ----------------------------------

def im2col(x, kh, kw):
    """x: (N,H,W,C) NHWC -> (N*OH*OW, kh*kw*C) patches (kh, kw, C ordering)."""
    N, H, W, C = x.shape
    OH, OW = H - kh + 1, W - kw + 1
    cols = []
    for i in range(kh):
        for j in range(kw):
            cols.append(x[:, i:i + OH, j:j + OW, :])
    patches = jnp.stack(cols, axis=3)           # (N, OH, OW, kh*kw, C)
    return patches.reshape(N * OH * OW, kh * kw * C), (N, OH, OW)


def conv2d_valid(x, w_mat_bf16, bias, cout, kh, kw, *, relu=False):
    """Valid (no pad), stride-1 conv as im2col + fused MXU matmul.
    w_mat_bf16: (kh*kw*Cin, 128) pre-built at prepare time; slice to cout after."""
    patches, (N, OH, OW) = im2col(x, kh, kw)
    out = pallas_matmul_fused(patches, w_mat_bf16, bias,
                              epilogue="relu" if relu else "none")
    return out[:, :cout].reshape(N, OH, OW, cout)


def maxpool2(x):
    """MaxPool2d(kernel=2, stride=2); drops trailing odd row/col like PyTorch."""
    N, H, W, C = x.shape
    H2, W2 = H // 2, W // 2
    x = x[:, :H2 * 2, :W2 * 2, :].reshape(N, H2, 2, W2, 2, C)
    return jnp.max(x, axis=(2, 4))


def make_grid_base(H, W):
    """Constant base for F.affine_grid(..., align_corners=False): (H,W,3)=(x,y,1)."""
    xs = (2.0 * (jnp.arange(W, dtype=jnp.float32) + 0.5) / W) - 1.0
    ys = (2.0 * (jnp.arange(H, dtype=jnp.float32) + 0.5) / H) - 1.0
    gx, gy = jnp.meshgrid(xs, ys)                       # (H, W) each
    return jnp.stack([gx, gy, jnp.ones_like(gx)], -1)   # (H, W, 3)


def grid_sample_border(x, grid):
    """F.grid_sample(x, grid, mode='bilinear', padding_mode='border',
    align_corners=False). x: NHWC, grid: (N,H,W,2). Plain JAX gather."""
    # TODO(synk): data-dependent 4-point gather left to XLA; could be a small
    # in-VMEM Pallas gather / one-hot matmul if it becomes the latency tail.
    N, H, W, C = x.shape
    gx, gy = grid[..., 0], grid[..., 1]
    ix = jnp.clip(((gx + 1.0) * W - 1.0) * 0.5, 0.0, W - 1.0)
    iy = jnp.clip(((gy + 1.0) * H - 1.0) * 0.5, 0.0, H - 1.0)
    ix0f, iy0f = jnp.floor(ix), jnp.floor(iy)
    wx, wy = (ix - ix0f)[..., None], (iy - iy0f)[..., None]
    ix0 = ix0f.astype(jnp.int32)
    iy0 = iy0f.astype(jnp.int32)
    ix1 = jnp.clip(ix0 + 1, 0, W - 1)
    iy1 = jnp.clip(iy0 + 1, 0, H - 1)
    b = jnp.arange(N)[:, None, None]
    v00 = x[b, iy0, ix0]
    v01 = x[b, iy0, ix1]
    v10 = x[b, iy1, ix0]
    v11 = x[b, iy1, ix1]
    return (v00 * (1 - wx) * (1 - wy) + v01 * wx * (1 - wy) +
            v10 * (1 - wx) * wy + v11 * wx * wy)


# ------------------------------- Forward ------------------------------------

def net_forward(prepped, x_nchw):
    x = jnp.transpose(x_nchw, (0, 2, 3, 1)).astype(jnp.float32)     # NHWC
    N = x.shape[0]

    # ---- STN: localization network (relu fused into conv epilogues) ----
    h = conv2d_valid(x, prepped['loc_c1_w'], prepped['loc_c1_b'], 8, 7, 7, relu=True)
    h = maxpool2(h)                                                 # (N,11,11,8)
    h = conv2d_valid(h, prepped['loc_c2_w'], prepped['loc_c2_b'], 10, 5, 5, relu=True)
    h = maxpool2(h)                                                 # (N,3,3,10)
    xs = h.reshape(N, -1)                                           # NHWC flatten (90)
    h = pallas_matmul_fused(xs, prepped['fcloc1_w'], prepped['fcloc1_b'],
                            epilogue="relu")                        # (N,128), cols>=32 are 0
    theta = pallas_matmul_fused(h, prepped['fcloc2_w'], prepped['fcloc2_b'])[:, :6]
    theta = theta.reshape(N, 2, 3)
    grid = jnp.einsum('hwk,nck->nhwc', prepped['grid_base'], theta)
    x = grid_sample_border(x, grid)                                 # (N,28,28,1)

    # ---- main classifier ----
    # conv1 + relu (maxpool commutes); bn1 is folded into conv2's weights.
    h = conv2d_valid(x, prepped['c1_w'], prepped['c1_b'], 10, 5, 5, relu=True)
    h = maxpool2(h)                                                 # (N,12,12,10)
    # TODO(synk): nn.Dropout2d is identity in eval mode (training not implemented).
    h = conv2d_valid(h, prepped['c2_w'], prepped['c2_b'], 20, 5, 5, relu=True)
    h = maxpool2(h)                                                 # (N,4,4,20)
    h = h.reshape(N, -1)                                            # NHWC flatten (320)
    # bn2 is folded into fc1; fc1 columns pre-permuted to NHWC ordering.
    h = pallas_matmul_fused(h, prepped['fc1_w'], prepped['fc1_b'],
                            epilogue="relu")                        # (N,128), cols>=50 are 0
    # TODO(synk): F.dropout is identity in eval mode.
    out = pallas_matmul_fused(h, prepped['fc2_w'], prepped['fc2_b'],
                              epilogue="log_softmax", n_valid=10)
    return out[:, :10]


# --------------------------- Parameter handling ------------------------------

def init_params(key):
    """Raw parameters in PyTorch layouts (Cout,Cin,KH,KW) / (out,in)."""
    ks = jax.random.split(key, 20)

    def rn(k, shape, s=0.1):
        return (s * jax.random.normal(k, shape)).astype(jnp.float32)

    p = {}
    p['c1_w'] = rn(ks[0], (10, 1, 5, 5));   p['c1_b'] = rn(ks[1], (10,))
    p['c2_w'] = rn(ks[2], (20, 10, 5, 5));  p['c2_b'] = rn(ks[3], (20,))
    p['bn1_g'] = 1.0 + rn(ks[4], (10,));    p['bn1_b'] = rn(ks[5], (10,))
    p['bn1_m'] = jnp.zeros((10,), jnp.float32)
    p['bn1_v'] = jnp.ones((10,), jnp.float32)
    p['bn2_g'] = 1.0 + rn(ks[6], (20,));    p['bn2_b'] = rn(ks[7], (20,))
    p['bn2_m'] = jnp.zeros((20,), jnp.float32)
    p['bn2_v'] = jnp.ones((20,), jnp.float32)
    p['fc1_w'] = rn(ks[8], (50, 320));      p['fc1_b'] = rn(ks[9], (50,))
    p['fc2_w'] = rn(ks[10], (10, 50));      p['fc2_b'] = rn(ks[11], (10,))
    p['loc_c1_w'] = rn(ks[12], (8, 1, 7, 7));   p['loc_c1_b'] = rn(ks[13], (8,))
    p['loc_c2_w'] = rn(ks[14], (10, 8, 5, 5));  p['loc_c2_b'] = rn(ks[15], (10,))
    p['fcloc1_w'] = rn(ks[16], (32, 90));   p['fcloc1_b'] = rn(ks[17], (32,))
    # fc_loc[2] initialized to the identity affine transform (as in Net.__init__).
    p['fcloc2_w'] = jnp.zeros((6, 32), jnp.float32)
    p['fcloc2_b'] = jnp.array([1, 0, 0, 0, 1, 0], jnp.float32)
    return p


def prepare_params(p, eps=1e-5):
    """One-time (hoisted out of the forward) preprocessing:
    conv weights -> matmul form, BN folded into the next layer (exact),
    fc columns permuted to NHWC flatten ordering, everything zero-padded to a
    lane-dense N=128, matmul operands pre-cast to bf16."""
    q = {}

    def pad_n(mat_f32, bias_f32):
        K, N = mat_f32.shape
        wp = jnp.zeros((K, LANE), jnp.float32).at[:, :N].set(mat_f32)
        bp = jnp.zeros((1, LANE), jnp.float32).at[:, :N].set(bias_f32.reshape(1, N))
        return wp.astype(jnp.bfloat16), bp

    def conv_wmat(w_pt):
        cout, cin, kh, kw = w_pt.shape
        return jnp.transpose(w_pt, (2, 3, 1, 0)).reshape(kh * kw * cin, cout)

    # STN localization convs (relu fused in-kernel, no folding needed).
    q['loc_c1_w'], q['loc_c1_b'] = pad_n(conv_wmat(p['loc_c1_w']), p['loc_c1_b'])
    q['loc_c2_w'], q['loc_c2_b'] = pad_n(conv_wmat(p['loc_c2_w']), p['loc_c2_b'])

    # fc_loc[0]: permute columns NCHW->NHWC (C=10,H=3,W=3), transpose, pad.
    wl1 = p['fcloc1_w'].reshape(32, 10, 3, 3).transpose(0, 2, 3, 1).reshape(32, 90)
    q['fcloc1_w'], q['fcloc1_b'] = pad_n(wl1.T, p['fcloc1_b'])

    # fc_loc[2]: consumes the padded 128-wide relu output (padded cols are 0).
    wl2 = jnp.zeros((LANE, LANE), jnp.float32).at[:32, :6].set(p['fcloc2_w'].T)
    bl2 = jnp.zeros((1, LANE), jnp.float32).at[:, :6].set(p['fcloc2_b'][None])
    q['fcloc2_w'] = wl2.astype(jnp.bfloat16); q['fcloc2_b'] = bl2

    # Main conv1.
    q['c1_w'], q['c1_b'] = pad_n(conv_wmat(p['c1_w']), p['c1_b'])

    # Fold eval-BN1 (applied right before conv2) into conv2's weights/bias.
    s1 = p['bn1_g'] / jnp.sqrt(p['bn1_v'] + eps)
    t1 = p['bn1_b'] - p['bn1_m'] * s1
    c2w = p['c2_w'] * s1[None, :, None, None]
    c2b = p['c2_b'] + jnp.einsum('oikl,i->o', p['c2_w'], t1)
    q['c2_w'], q['c2_b'] = pad_n(conv_wmat(c2w), c2b)

    # Fold eval-BN2 into fc1; permute fc1 columns NCHW->NHWC (C=20,H=4,W=4).
    s2 = p['bn2_g'] / jnp.sqrt(p['bn2_v'] + eps)
    t2 = p['bn2_b'] - p['bn2_m'] * s2
    w1 = p['fc1_w'].reshape(50, 20, 4, 4)
    fc1_b = p['fc1_b'] + jnp.einsum('ochw,c->o', w1, t2)
    w1f = (w1 * s2[None, :, None, None]).transpose(0, 2, 3, 1).reshape(50, 320)
    q['fc1_w'], q['fc1_b'] = pad_n(w1f.T, fc1_b)

    # fc2: consumes the padded 128-wide relu(fc1) output (padded cols are 0).
    wf2 = jnp.zeros((LANE, LANE), jnp.float32).at[:50, :10].set(p['fc2_w'].T)
    bf2 = jnp.zeros((1, LANE), jnp.float32).at[:, :10].set(p['fc2_b'][None])
    q['fc2_w'] = wf2.astype(jnp.bfloat16); q['fc2_b'] = bf2

    # Constant affine_grid base for 28x28 (align_corners=False).
    q['grid_base'] = make_grid_base(28, 28)
    return q


if __name__ == "__main__":
    params = init_params(jax.random.PRNGKey(0))
    prepped = prepare_params(params)            # hoisted out of the hot path
    # Architecture (320 = 20*4*4 and 90 = 10*3*3) fixes spatial size to 28x28,
    # 1 input channel (MNIST-style); small batch of 2.
    x = jax.random.normal(jax.random.PRNGKey(0), (2, 1, 28, 28), jnp.float32)
    fwd = jax.jit(net_forward)
    out = fwd(prepped, x)
    out = jax.block_until_ready(out)
    assert out.shape == (2, 10)
    assert bool(jnp.all(jnp.isfinite(out)))
    print("KERNEL_OK")
</pallas_src>

<mosaic_0001>
module attributes {stable_mosaic.version = 11 : i64} {
  func.func private @main(%arg0: i32) attributes {dimension_semantics = [#tpu.dimension_semantics<core_parallel>], iteration_bounds = array<i64: 2>, tpu.core_type = #tpu.core_type<sc_scalar_subcore>, window_params = []} {
    return
  }
}

module attributes {stable_mosaic.version = 11 : i64} {
  func.func private @main(%arg0: i32) attributes {dimension_semantics = [#tpu.dimension_semantics<core_parallel>], iteration_bounds = array<i64: 2>, tpu.core_type = #tpu.core_type<sc_scalar_subcore>, window_params = []} {
    return
  }
}

module attributes {stable_mosaic.version = 11 : i64} {
  func.func @_mm_fused_kernel(%arg0: i32, %arg1: memref<968x49xf32, #tpu.memory_space<vmem>>, %arg2: memref<49x128xbf16, #tpu.memory_space<vmem>>, %arg3: memref<1x128xf32, #tpu.memory_space<vmem>>, %arg4: memref<968x128xf32, #tpu.memory_space<vmem>>) attributes {dimension_semantics = [#tpu.dimension_semantics<arbitrary>], iteration_bounds = array<i64: 1>, scalar_prefetch = 0 : i64, scratch_operands = 0 : i64, tpu.core_type = #tpu.core_type<tc>, window_params = [{pipeline_mode = #tpu.pipeline_mode<synchronous>, transform_indices = @transform_0, window_bounds = array<i64: 968, 49>}, {pipeline_mode = #tpu.pipeline_mode<synchronous>, transform_indices = @transform_1, window_bounds = array<i64: 49, 128>}, {pipeline_mode = #tpu.pipeline_mode<synchronous>, transform_indices = @transform_2, window_bounds = array<i64: 1, 128>}, {pipeline_mode = #tpu.pipeline_mode<synchronous>, transform_indices = @transform_3, window_bounds = array<i64: 968, 128>}]} {
    %c0 = arith.constant 0 : index
    %c0_0 = arith.constant 0 : index
    %0 = vector.load %arg1[%c0, %c0_0] : memref<968x49xf32, #tpu.memory_space<vmem>>, vector<968x49xf32>
    %1 = arith.truncf %0 : vector<968x49xf32> to vector<968x49xbf16>
    %c0_1 = arith.constant 0 : index
    %c0_2 = arith.constant 0 : index
    %2 = vector.load %arg2[%c0_1, %c0_2] : memref<49x128xbf16, #tpu.memory_space<vmem>>, vector<49x128xbf16>
    %cst = arith.constant dense<0.000000e+00> : vector<968x128xf32>
    %3 = tpu.matmul %1, %2, %cst {dimension_numbers = #tpu.dot_dimension_numbers<[1], [0], [0], [1], [0, 0, 1, 1], [], []>} : vector<968x49xbf16>, vector<49x128xbf16>, vector<968x128xf32> -> vector<968x128xf32>
    %c0_3 = arith.constant 0 : index
    %c0_4 = arith.constant 0 : index
    %4 = vector.load %arg3[%c0_3, %c0_4] : memref<1x128xf32, #tpu.memory_space<vmem>>, vector<1x128xf32>
    %5 = vector.broadcast %4 : vector<1x128xf32> to vector<968x128xf32>
    %6 = arith.addf %3, %5 : vector<968x128xf32>
    %cst_5 = arith.constant 0.000000e+00 : f32
    %7 = vector.broadcast %cst_5 : f32 to vector<968x128xf32>
    %8 = arith.maximumf %6, %7 : vector<968x128xf32>
    %c0_6 = arith.constant 0 : index
    %c0_7 = arith.constant 0 : index
    %9 = vector.load %arg4[%c0_6, %c0_7] : memref<968x128xf32, #tpu.memory_space<vmem>>, vector<968x128xf32>
    tpu.vector_store %arg4[%c0_6, %c0_7], %8 {strides = array<i32>} : memref<968x128xf32, #tpu.memory_space<vmem>>, vector<968x128xf32>,
    return
  }
  func.func @transform_0(%arg0: i32) -> (i32, i32) {
    %c0_i32 = arith.constant 0 : i32
    %c0_i32_0 = arith.constant 0 : i32
    %c0_i32_1 = arith.constant 0 : i32
    return %c0_i32, %c0_i32_0 : i32, i32
  }
  func.func @transform_1(%arg0: i32) -> (i32, i32) {
    %c0_i32 = arith.constant 0 : i32
    %c0_i32_0 = arith.constant 0 : i32
    %c0_i32_1 = arith.constant 0 : i32
    return %c0_i32, %c0_i32_0 : i32, i32
  }
  func.func @transform_2(%arg0: i32) -> (i32, i32) {
    %c0_i32 = arith.constant 0 : i32
    %c0_i32_0 = arith.constant 0 : i32
    %c0_i32_1 = arith.constant 0 : i32
    return %c0_i32, %c0_i32_0 : i32, i32
  }
  func.func @transform_3(%arg0: i32) -> (i32, i32) {
    %c0_i32 = arith.constant 0 : i32
    %c0_i32_0 = arith.constant 0 : i32
    %c0_i32_1 = arith.constant 0 : i32
    return %c0_i32, %c0_i32_0 : i32, i32
  }
}

module attributes {stable_mosaic.version = 11 : i64} {
  func.func @_mm_fused_kernel(%arg0: i32, %arg1: memref<98x200xf32, #tpu.memory_space<vmem>>, %arg2: memref<200x128xbf16, #tpu.memory_space<vmem>>, %arg3: memref<1x128xf32, #tpu.memory_space<vmem>>, %arg4: memref<98x128xf32, #tpu.memory_space<vmem>>) attributes {dimension_semantics = [#tpu.dimension_semantics<arbitrary>], iteration_bounds = array<i64: 1>, scalar_prefetch = 0 : i64, scratch_operands = 0 : i64, tpu.core_type = #tpu.core_type<tc>, window_params = [{pipeline_mode = #tpu.pipeline_mode<synchronous>, transform_indices = @transform_0, window_bounds = array<i64: 98, 200>}, {pipeline_mode = #tpu.pipeline_mode<synchronous>, transform_indices = @transform_1, window_bounds = array<i64: 200, 128>}, {pipeline_mode = #tpu.pipeline_mode<synchronous>, transform_indices = @transform_2, window_bounds = array<i64: 1, 128>}, {pipeline_mode = #tpu.pipeline_mode<synchronous>, transform_indices = @transform_3, window_bounds = array<i64: 98, 128>}]} {
    %c0 = arith.constant 0 : index
    %c0_0 = arith.constant 0 : index
    %0 = vector.load %arg1[%c0, %c0_0] : memref<98x200xf32, #tpu.memory_space<vmem>>, vector<98x200xf32>
    %1 = arith.truncf %0 : vector<98x200xf32> to vector<98x200xbf16>
    %c0_1 = arith.constant 0 : index
    %c0_2 = arith.constant 0 : index
    %2 = vector.load %arg2[%c0_1, %c0_2] : memref<200x128xbf16, #tpu.memory_space<vmem>>, vector<200x128xbf16>
    %cst = arith.constant dense<0.000000e+00> : vector<98x128xf32>
    %3 = tpu.matmul %1, %2, %cst {dimension_numbers = #tpu.dot_dimension_numbers<[1], [0], [0], [1], [0, 0, 1, 1], [], []>} : vector<98x200xbf16>, vector<200x128xbf16>, vector<98x128xf32> -> vector<98x128xf32>
    %c0_3 = arith.constant 0 : index
    %c0_4 = arith.constant 0 : index
    %4 = vector.load %arg3[%c0_3, %c0_4] : memref<1x128xf32, #tpu.memory_space<vmem>>, vector<1x128xf32>
    %5 = vector.broadcast %4 : vector<1x128xf32> to vector<98x128xf32>
    %6 = arith.addf %3, %5 : vector<98x128xf32>
    %cst_5 = arith.constant 0.000000e+00 : f32
    %7 = vector.broadcast %cst_5 : f32 to vector<98x128xf32>
    %8 = arith.maximumf %6, %7 : vector<98x128xf32>
    %c0_6 = arith.constant 0 : index
    %c0_7 = arith.constant 0 : index
    %9 = vector.load %arg4[%c0_6, %c0_7] : memref<98x128xf32, #tpu.memory_space<vmem>>, vector<98x128xf32>
    tpu.vector_store %arg4[%c0_6, %c0_7], %8 {strides = array<i32>} : memref<98x128xf32, #tpu.memory_space<vmem>>, vector<98x128xf32>,
    return
  }
  func.func @transform_0(%arg0: i32) -> (i32, i32) {
    %c0_i32 = arith.constant 0 : i32
    %c0_i32_0 = arith.constant 0 : i32
    %c0_i32_1 = arith.constant 0 : i32
    return %c0_i32, %c0_i32_0 : i32, i32
  }
  func.func @transform_1(%arg0: i32) -> (i32, i32) {
    %c0_i32 = arith.constant 0 : i32
    %c0_i32_0 = arith.constant 0 : i32
    %c0_i32_1 = arith.constant 0 : i32
    return %c0_i32, %c0_i32_0 : i32, i32
  }
  func.func @transform_2(%arg0: i32) -> (i32, i32) {
    %c0_i32 = arith.constant 0 : i32
    %c0_i32_0 = arith.constant 0 : i32
    %c0_i32_1 = arith.constant 0 : i32
    return %c0_i32, %c0_i32_0 : i32, i32
  }
  func.func @transform_3(%arg0: i32) -> (i32, i32) {
    %c0_i32 = arith.constant 0 : i32
    %c0_i32_0 = arith.constant 0 : i32
    %c0_i32_1 = arith.constant 0 : i32
    return %c0_i32, %c0_i32_0 : i32, i32
  }
}

module attributes {stable_mosaic.version = 11 : i64} {
  func.func @_mm_fused_kernel(%arg0: i32, %arg1: memref<2x90xf32, #tpu.memory_space<vmem>>, %arg2: memref<90x128xbf16, #tpu.memory_space<vmem>>, %arg3: memref<1x128xf32, #tpu.memory_space<vmem>>, %arg4: memref<2x128xf32, #tpu.memory_space<vmem>>) attributes {dimension_semantics = [#tpu.dimension_semantics<arbitrary>], iteration_bounds = array<i64: 1>, scalar_prefetch = 0 : i64, scratch_operands = 0 : i64, tpu.core_type = #tpu.core_type<tc>, window_params = [{pipeline_mode = #tpu.pipeline_mode<synchronous>, transform_indices = @transform_0, window_bounds = array<i64: 2, 90>}, {pipeline_mode = #tpu.pipeline_mode<synchronous>, transform_indices = @transform_1, window_bounds = array<i64: 90, 128>}, {pipeline_mode = #tpu.pipeline_mode<synchronous>, transform_indices = @transform_2, window_bounds = array<i64: 1, 128>}, {pipeline_mode = #tpu.pipeline_mode<synchronous>, transform_indices = @transform_3, window_bounds = array<i64: 2, 128>}]} {
    %c0 = arith.constant 0 : index
    %c0_0 = arith.constant 0 : index
    %0 = vector.load %arg1[%c0, %c0_0] : memref<2x90xf32, #tpu.memory_space<vmem>>, vector<2x90xf32>
    %1 = arith.truncf %0 : vector<2x90xf32> to vector<2x90xbf16>
    %c0_1 = arith.constant 0 : index
    %c0_2 = arith.constant 0 : index
    %2 = vector.load %arg2[%c0_1, %c0_2] : memref<90x128xbf16, #tpu.memory_space<vmem>>, vector<90x128xbf16>
    %cst = arith.constant dense<0.000000e+00> : vector<2x128xf32>
    %3 = tpu.matmul %1, %2, %cst {dimension_numbers = #tpu.dot_dimension_numbers<[1], [0], [0], [1], [0, 0, 1, 1], [], []>} : vector<2x90xbf16>, vector<90x128xbf16>, vector<2x128xf32> -> vector<2x128xf32>
    %c0_3 = arith.constant 0 : index
    %c0_4 = arith.constant 0 : index
    %4 = vector.load %arg3[%c0_3, %c0_4] : memref<1x128xf32, #tpu.memory_space<vmem>>, vector<1x128xf32>
    %5 = vector.broadcast %4 : vector<1x128xf32> to vector<2x128xf32>
    %6 = arith.addf %3, %5 : vector<2x128xf32>
    %cst_5 = arith.constant 0.000000e+00 : f32
    %7 = vector.broadcast %cst_5 : f32 to vector<2x128xf32>
    %8 = arith.maximumf %6, %7 : vector<2x128xf32>
    %c0_6 = arith.constant 0 : index
    %c0_7 = arith.constant 0 : index
    %9 = vector.load %arg4[%c0_6, %c0_7] : memref<2x128xf32, #tpu.memory_space<vmem>>, vector<2x128xf32>
    tpu.vector_store %arg4[%c0_6, %c0_7], %8 {strides = array<i32>} : memref<2x128xf32, #tpu.memory_space<vmem>>, vector<2x128xf32>,
    return
  }
  func.func @transform_0(%arg0: i32) -> (i32, i32) {
    %c0_i32 = arith.constant 0 : i32
    %c0_i32_0 = arith.constant 0 : i32
    %c0_i32_1 = arith.constant 0 : i32
    return %c0_i32, %c0_i32_0 : i32, i32
  }
  func.func @transform_1(%arg0: i32) -> (i32, i32) {
    %c0_i32 = arith.constant 0 : i32
    %c0_i32_0 = arith.constant 0 : i32
    %c0_i32_1 = arith.constant 0 : i32
    return %c0_i32, %c0_i32_0 : i32, i32
  }
  func.func @transform_2(%arg0: i32) -> (i32, i32) {
    %c0_i32 = arith.constant 0 : i32
    %c0_i32_0 = arith.constant 0 : i32
    %c0_i32_1 = arith.constant 0 : i32
    return %c0_i32, %c0_i32_0 : i32, i32
  }
  func.func @transform_3(%arg0: i32) -> (i32, i32) {
    %c0_i32 = arith.constant 0 : i32
    %c0_i32_0 = arith.constant 0 : i32
    %c0_i32_1 = arith.constant 0 : i32
    return %c0_i32, %c0_i32_0 : i32, i32
  }
}

module attributes {stable_mosaic.version = 11 : i64} {
  func.func @_mm_fused_kernel(%arg0: i32, %arg1: memref<2x128xf32, #tpu.memory_space<vmem>>, %arg2: memref<128x128xbf16, #tpu.memory_space<vmem>>, %arg3: memref<1x128xf32, #tpu.memory_space<vmem>>, %arg4: memref<2x128xf32, #tpu.memory_space<vmem>>) attributes {dimension_semantics = [#tpu.dimension_semantics<arbitrary>], iteration_bounds = array<i64: 1>, scalar_prefetch = 0 : i64, scratch_operands = 0 : i64, tpu.core_type = #tpu.core_type<tc>, window_params = [{pipeline_mode = #tpu.pipeline_mode<synchronous>, transform_indices = @transform_0, window_bounds = array<i64: 2, 128>}, {pipeline_mode = #tpu.pipeline_mode<synchronous>, transform_indices = @transform_1, window_bounds = array<i64: 128, 128>}, {pipeline_mode = #tpu.pipeline_mode<synchronous>, transform_indices = @transform_2, window_bounds = array<i64: 1, 128>}, {pipeline_mode = #tpu.pipeline_mode<synchronous>, transform_indices = @transform_3, window_bounds = array<i64: 2, 128>}]} {
    %c0 = arith.constant 0 : index
    %c0_0 = arith.constant 0 : index
    %0 = vector.load %arg1[%c0, %c0_0] : memref<2x128xf32, #tpu.memory_space<vmem>>, vector<2x128xf32>
    %1 = arith.truncf %0 : vector<2x128xf32> to vector<2x128xbf16>
    %c0_1 = arith.constant 0 : index
    %c0_2 = arith.constant 0 : index
    %2 = vector.load %arg2[%c0_1, %c0_2] : memref<128x128xbf16, #tpu.memory_space<vmem>>, vector<128x128xbf16>
    %cst = arith.constant dense<0.000000e+00> : vector<2x128xf32>
    %3 = tpu.matmul %1, %2, %cst {dimension_numbers = #tpu.dot_dimension_numbers<[1], [0], [0], [1], [0, 0, 1, 1], [], []>} : vector<2x128xbf16>, vector<128x128xbf16>, vector<2x128xf32> -> vector<2x128xf32>
    %c0_3 = arith.constant 0 : index
    %c0_4 = arith.constant 0 : index
    %4 = vector.load %arg3[%c0_3, %c0_4] : memref<1x128xf32, #tpu.memory_space<vmem>>, vector<1x128xf32>
    %5 = vector.broadcast %4 : vector<1x128xf32> to vector<2x128xf32>
    %6 = arith.addf %3, %5 : vector<2x128xf32>
    %c0_5 = arith.constant 0 : index
    %c0_6 = arith.constant 0 : index
    %7 = vector.load %arg4[%c0_5, %c0_6] : memref<2x128xf32, #tpu.memory_space<vmem>>, vector<2x128xf32>
    tpu.vector_store %arg4[%c0_5, %c0_6], %6 {strides = array<i32>} : memref<2x128xf32, #tpu.memory_space<vmem>>, vector<2x128xf32>,
    return
  }
  func.func @transform_0(%arg0: i32) -> (i32, i32) {
    %c0_i32 = arith.constant 0 : i32
    %c0_i32_0 = arith.constant 0 : i32
    %c0_i32_1 = arith.constant 0 : i32
    return %c0_i32, %c0_i32_0 : i32, i32
  }
  func.func @transform_1(%arg0: i32) -> (i32, i32) {
    %c0_i32 = arith.constant 0 : i32
    %c0_i32_0 = arith.constant 0 : i32
    %c0_i32_1 = arith.constant 0 : i32
    return %c0_i32, %c0_i32_0 : i32, i32
  }
  func.func @transform_2(%arg0: i32) -> (i32, i32) {
    %c0_i32 = arith.constant 0 : i32
    %c0_i32_0 = arith.constant 0 : i32
    %c0_i32_1 = arith.constant 0 : i32
    return %c0_i32, %c0_i32_0 : i32, i32
  }
  func.func @transform_3(%arg0: i32) -> (i32, i32) {
    %c0_i32 = arith.constant 0 : i32
    %c0_i32_0 = arith.constant 0 : i32
    %c0_i32_1 = arith.constant 0 : i32
    return %c0_i32, %c0_i32_0 : i32, i32
  }
}

module attributes {stable_mosaic.version = 11 : i64} {
  func.func @_mm_fused_kernel(%arg0: i32, %arg1: memref<1152x25xf32, #tpu.memory_space<vmem>>, %arg2: memref<25x128xbf16, #tpu.memory_space<vmem>>, %arg3: memref<1x128xf32, #tpu.memory_space<vmem>>, %arg4: memref<1152x128xf32, #tpu.memory_space<vmem>>) attributes {dimension_semantics = [#tpu.dimension_semantics<arbitrary>], iteration_bounds = array<i64: 1>, scalar_prefetch = 0 : i64, scratch_operands = 0 : i64, tpu.core_type = #tpu.core_type<tc>, window_params = [{pipeline_mode = #tpu.pipeline_mode<synchronous>, transform_indices = @transform_0, window_bounds = array<i64: 1152, 25>}, {pipeline_mode = #tpu.pipeline_mode<synchronous>, transform_indices = @transform_1, window_bounds = array<i64: 25, 128>}, {pipeline_mode = #tpu.pipeline_mode<synchronous>, transform_indices = @transform_2, window_bounds = array<i64: 1, 128>}, {pipeline_mode = #tpu.pipeline_mode<synchronous>, transform_indices = @transform_3, window_bounds = array<i64: 1152, 128>}]} {
    %c0 = arith.constant 0 : index
    %c0_0 = arith.constant 0 : index
    %0 = vector.load %arg1[%c0, %c0_0] : memref<1152x25xf32, #tpu.memory_space<vmem>>, vector<1152x25xf32>
    %1 = arith.truncf %0 : vector<1152x25xf32> to vector<1152x25xbf16>
    %c0_1 = arith.constant 0 : index
    %c0_2 = arith.constant 0 : index
    %2 = vector.load %arg2[%c0_1, %c0_2] : memref<25x128xbf16, #tpu.memory_space<vmem>>, vector<25x128xbf16>
    %cst = arith.constant dense<0.000000e+00> : vector<1152x128xf32>
    %3 = tpu.matmul %1, %2, %cst {dimension_numbers = #tpu.dot_dimension_numbers<[1], [0], [0], [1], [0, 0, 1, 1], [], []>} : vector<1152x25xbf16>, vector<25x128xbf16>, vector<1152x128xf32> -> vector<1152x128xf32>
    %c0_3 = arith.constant 0 : index
    %c0_4 = arith.constant 0 : index
    %4 = vector.load %arg3[%c0_3, %c0_4] : memref<1x128xf32, #tpu.memory_space<vmem>>, vector<1x128xf32>
    %5 = vector.broadcast %4 : vector<1x128xf32> to vector<1152x128xf32>
    %6 = arith.addf %3, %5 : vector<1152x128xf32>
    %cst_5 = arith.constant 0.000000e+00 : f32
    %7 = vector.broadcast %cst_5 : f32 to vector<1152x128xf32>
    %8 = arith.maximumf %6, %7 : vector<1152x128xf32>
    %c0_6 = arith.constant 0 : index
    %c0_7 = arith.constant 0 : index
    %9 = vector.load %arg4[%c0_6, %c0_7] : memref<1152x128xf32, #tpu.memory_space<vmem>>, vector<1152x128xf32>
    tpu.vector_store %arg4[%c0_6, %c0_7], %8 {strides = array<i32>} : memref<1152x128xf32, #tpu.memory_space<vmem>>, vector<1152x128xf32>,
    return
  }
  func.func @transform_0(%arg0: i32) -> (i32, i32) {
    %c0_i32 = arith.constant 0 : i32
    %c0_i32_0 = arith.constant 0 : i32
    %c0_i32_1 = arith.constant 0 : i32
    return %c0_i32, %c0_i32_0 : i32, i32
  }
  func.func @transform_1(%arg0: i32) -> (i32, i32) {
    %c0_i32 = arith.constant 0 : i32
    %c0_i32_0 = arith.constant 0 : i32
    %c0_i32_1 = arith.constant 0 : i32
    return %c0_i32, %c0_i32_0 : i32, i32
  }
  func.func @transform_2(%arg0: i32) -> (i32, i32) {
    %c0_i32 = arith.constant 0 : i32
    %c0_i32_0 = arith.constant 0 : i32
    %c0_i32_1 = arith.constant 0 : i32
    return %c0_i32, %c0_i32_0 : i32, i32
  }
  func.func @transform_3(%arg0: i32) -> (i32, i32) {
    %c0_i32 = arith.constant 0 : i32
    %c0_i32_0 = arith.constant 0 : i32
    %c0_i32_1 = arith.constant 0 : i32
    return %c0_i32, %c0_i32_0 : i32, i32
  }
}

module attributes {stable_mosaic.version = 11 : i64} {
  func.func @_mm_fused_kernel(%arg0: i32, %arg1: memref<128x250xf32, #tpu.memory_space<vmem>>, %arg2: memref<250x128xbf16, #tpu.memory_space<vmem>>, %arg3: memref<1x128xf32, #tpu.memory_space<vmem>>, %arg4: memref<128x128xf32, #tpu.memory_space<vmem>>) attributes {dimension_semantics = [#tpu.dimension_semantics<arbitrary>], iteration_bounds = array<i64: 1>, scalar_prefetch = 0 : i64, scratch_operands = 0 : i64, tpu.core_type = #tpu.core_type<tc>, window_params = [{pipeline_mode = #tpu.pipeline_mode<synchronous>, transform_indices = @transform_0, window_bounds = array<i64: 128, 250>}, {pipeline_mode = #tpu.pipeline_mode<synchronous>, transform_indices = @transform_1, window_bounds = array<i64: 250, 128>}, {pipeline_mode = #tpu.pipeline_mode<synchronous>, transform_indices = @transform_2, window_bounds = array<i64: 1, 128>}, {pipeline_mode = #tpu.pipeline_mode<synchronous>, transform_indices = @transform_3, window_bounds = array<i64: 128, 128>}]} {
    %c0 = arith.constant 0 : index
    %c0_0 = arith.constant 0 : index
    %0 = vector.load %arg1[%c0, %c0_0] : memref<128x250xf32, #tpu.memory_space<vmem>>, vector<128x250xf32>
    %1 = arith.truncf %0 : vector<128x250xf32> to vector<128x250xbf16>
    %c0_1 = arith.constant 0 : index
    %c0_2 = arith.constant 0 : index
    %2 = vector.load %arg2[%c0_1, %c0_2] : memref<250x128xbf16, #tpu.memory_space<vmem>>, vector<250x128xbf16>
    %cst = arith.constant dense<0.000000e+00> : vector<128x128xf32>
    %3 = tpu.matmul %1, %2, %cst {dimension_numbers = #tpu.dot_dimension_numbers<[1], [0], [0], [1], [0, 0, 1, 1], [], []>} : vector<128x250xbf16>, vector<250x128xbf16>, vector<128x128xf32> -> vector<128x128xf32>
    %c0_3 = arith.constant 0 : index
    %c0_4 = arith.constant 0 : index
    %4 = vector.load %arg3[%c0_3, %c0_4] : memref<1x128xf32, #tpu.memory_space<vmem>>, vector<1x128xf32>
    %5 = vector.broadcast %4 : vector<1x128xf32> to vector<128x128xf32>
    %6 = arith.addf %3, %5 : vector<128x128xf32>
    %cst_5 = arith.constant 0.000000e+00 : f32
    %7 = vector.broadcast %cst_5 : f32 to vector<128x128xf32>
    %8 = arith.maximumf %6, %7 : vector<128x128xf32>
    %c0_6 = arith.constant 0 : index
    %c0_7 = arith.constant 0 : index
    %9 = vector.load %arg4[%c0_6, %c0_7] : memref<128x128xf32, #tpu.memory_space<vmem>>, vector<128x128xf32>
    tpu.vector_store %arg4[%c0_6, %c0_7], %8 {strides = array<i32>} : memref<128x128xf32, #tpu.memory_space<vmem>>, vector<128x128xf32>,
    return
  }
  func.func @transform_0(%arg0: i32) -> (i32, i32) {
    %c0_i32 = arith.constant 0 : i32
    %c0_i32_0 = arith.constant 0 : i32
    %c0_i32_1 = arith.constant 0 : i32
    return %c0_i32, %c0_i32_0 : i32, i32
  }
  func.func @transform_1(%arg0: i32) -> (i32, i32) {
    %c0_i32 = arith.constant 0 : i32
    %c0_i32_0 = arith.constant 0 : i32
    %c0_i32_1 = arith.constant 0 : i32
    return %c0_i32, %c0_i32_0 : i32, i32
  }
  func.func @transform_2(%arg0: i32) -> (i32, i32) {
    %c0_i32 = arith.constant 0 : i32
    %c0_i32_0 = arith.constant 0 : i32
    %c0_i32_1 = arith.constant 0 : i32
    return %c0_i32, %c0_i32_0 : i32, i32
  }
  func.func @transform_3(%arg0: i32) -> (i32, i32) {
    %c0_i32 = arith.constant 0 : i32
    %c0_i32_0 = arith.constant 0 : i32
    %c0_i32_1 = arith.constant 0 : i32
    return %c0_i32, %c0_i32_0 : i32, i32
  }
}

module attributes {stable_mosaic.version = 11 : i64} {
  func.func @_mm_fused_kernel(%arg0: i32, %arg1: memref<2x320xf32, #tpu.memory_space<vmem>>, %arg2: memref<320x128xbf16, #tpu.memory_space<vmem>>, %arg3: memref<1x128xf32, #tpu.memory_space<vmem>>, %arg4: memref<2x128xf32, #tpu.memory_space<vmem>>) attributes {dimension_semantics = [#tpu.dimension_semantics<arbitrary>], iteration_bounds = array<i64: 1>, scalar_prefetch = 0 : i64, scratch_operands = 0 : i64, tpu.core_type = #tpu.core_type<tc>, window_params = [{pipeline_mode = #tpu.pipeline_mode<synchronous>, transform_indices = @transform_0, window_bounds = array<i64: 2, 320>}, {pipeline_mode = #tpu.pipeline_mode<synchronous>, transform_indices = @transform_1, window_bounds = array<i64: 320, 128>}, {pipeline_mode = #tpu.pipeline_mode<synchronous>, transform_indices = @transform_2, window_bounds = array<i64: 1, 128>}, {pipeline_mode = #tpu.pipeline_mode<synchronous>, transform_indices = @transform_3, window_bounds = array<i64: 2, 128>}]} {
    %c0 = arith.constant 0 : index
    %c0_0 = arith.constant 0 : index
    %0 = vector.load %arg1[%c0, %c0_0] : memref<2x320xf32, #tpu.memory_space<vmem>>, vector<2x320xf32>
    %1 = arith.truncf %0 : vector<2x320xf32> to vector<2x320xbf16>
    %c0_1 = arith.constant 0 : index
    %c0_2 = arith.constant 0 : index
    %2 = vector.load %arg2[%c0_1, %c0_2] : memref<320x128xbf16, #tpu.memory_space<vmem>>, vector<320x128xbf16>
    %cst = arith.constant dense<0.000000e+00> : vector<2x128xf32>
    %3 = tpu.matmul %1, %2, %cst {dimension_numbers = #tpu.dot_dimension_numbers<[1], [0], [0], [1], [0, 0, 1, 1], [], []>} : vector<2x320xbf16>, vector<320x128xbf16>, vector<2x128xf32> -> vector<2x128xf32>
    %c0_3 = arith.constant 0 : index
    %c0_4 = arith.constant 0 : index
    %4 = vector.load %arg3[%c0_3, %c0_4] : memref<1x128xf32, #tpu.memory_space<vmem>>, vector<1x128xf32>
    %5 = vector.broadcast %4 : vector<1x128xf32> to vector<2x128xf32>
    %6 = arith.addf %3, %5 : vector<2x128xf32>
    %cst_5 = arith.constant 0.000000e+00 : f32
    %7 = vector.broadcast %cst_5 : f32 to vector<2x128xf32>
    %8 = arith.maximumf %6, %7 : vector<2x128xf32>
    %c0_6 = arith.constant 0 : index
    %c0_7 = arith.constant 0 : index
    %9 = vector.load %arg4[%c0_6, %c0_7] : memref<2x128xf32, #tpu.memory_space<vmem>>, vector<2x128xf32>
    tpu.vector_store %arg4[%c0_6, %c0_7], %8 {strides = array<i32>} : memref<2x128xf32, #tpu.memory_space<vmem>>, vector<2x128xf32>,
    return
  }
  func.func @transform_0(%arg0: i32) -> (i32, i32) {
    %c0_i32 = arith.constant 0 : i32
    %c0_i32_0 = arith.constant 0 : i32
    %c0_i32_1 = arith.constant 0 : i32
    return %c0_i32, %c0_i32_0 : i32, i32
  }
  func.func @transform_1(%arg0: i32) -> (i32, i32) {
    %c0_i32 = arith.constant 0 : i32
    %c0_i32_0 = arith.constant 0 : i32
    %c0_i32_1 = arith.constant 0 : i32
    return %c0_i32, %c0_i32_0 : i32, i32
  }
  func.func @transform_2(%arg0: i32) -> (i32, i32) {
    %c0_i32 = arith.constant 0 : i32
    %c0_i32_0 = arith.constant 0 : i32
    %c0_i32_1 = arith.constant 0 : i32
    return %c0_i32, %c0_i32_0 : i32, i32
  }
  func.func @transform_3(%arg0: i32) -> (i32, i32) {
    %c0_i32 = arith.constant 0 : i32
    %c0_i32_0 = arith.constant 0 : i32
    %c0_i32_1 = arith.constant 0 : i32
    return %c0_i32, %c0_i32_0 : i32, i32
  }
}

module attributes {stable_mosaic.version = 11 : i64} {
  func.func @_mm_fused_kernel(%arg0: i32, %arg1: memref<2x128xf32, #tpu.memory_space<vmem>>, %arg2: memref<128x128xbf16, #tpu.memory_space<vmem>>, %arg3: memref<1x128xf32, #tpu.memory_space<vmem>>, %arg4: memref<2x128xf32, #tpu.memory_space<vmem>>) attributes {dimension_semantics = [#tpu.dimension_semantics<arbitrary>], iteration_bounds = array<i64: 1>, scalar_prefetch = 0 : i64, scratch_operands = 0 : i64, tpu.core_type = #tpu.core_type<tc>, window_params = [{pipeline_mode = #tpu.pipeline_mode<synchronous>, transform_indices = @transform_0, window_bounds = array<i64: 2, 128>}, {pipeline_mode = #tpu.pipeline_mode<synchronous>, transform_indices = @transform_1, window_bounds = array<i64: 128, 128>}, {pipeline_mode = #tpu.pipeline_mode<synchronous>, transform_indices = @transform_2, window_bounds = array<i64: 1, 128>}, {pipeline_mode = #tpu.pipeline_mode<synchronous>, transform_indices = @transform_3, window_bounds = array<i64: 2, 128>}]} {
    %c0 = arith.constant 0 : index
    %c0_0 = arith.constant 0 : index
    %0 = vector.load %arg1[%c0, %c0_0] : memref<2x128xf32, #tpu.memory_space<vmem>>, vector<2x128xf32>
    %1 = arith.truncf %0 : vector<2x128xf32> to vector<2x128xbf16>
    %c0_1 = arith.constant 0 : index
    %c0_2 = arith.constant 0 : index
    %2 = vector.load %arg2[%c0_1, %c0_2] : memref<128x128xbf16, #tpu.memory_space<vmem>>, vector<128x128xbf16>
    %cst = arith.constant dense<0.000000e+00> : vector<2x128xf32>
    %3 = tpu.matmul %1, %2, %cst {dimension_numbers = #tpu.dot_dimension_numbers<[1], [0], [0], [1], [0, 0, 1, 1], [], []>} : vector<2x128xbf16>, vector<128x128xbf16>, vector<2x128xf32> -> vector<2x128xf32>
    %c0_3 = arith.constant 0 : index
    %c0_4 = arith.constant 0 : index
    %4 = vector.load %arg3[%c0_3, %c0_4] : memref<1x128xf32, #tpu.memory_space<vmem>>, vector<1x128xf32>
    %5 = vector.broadcast %4 : vector<1x128xf32> to vector<2x128xf32>
    %6 = arith.addf %3, %5 : vector<2x128xf32>
    %7 = tpu.iota {dimensions = array<i32: 1>} : vector<2x128xi32>
    %c10_i32 = arith.constant 10 : i32
    %8 = vector.broadcast %c10_i32 : i32 to vector<2x128xi32>
    %9 = arith.cmpi slt, %7, %8 : vector<2x128xi32>
    %cst_5 = arith.constant -1.000000e+30 : f32
    %10 = vector.broadcast %cst_5 : f32 to vector<2x128xf32>
    %11 = arith.select %9, %6, %10 : vector<2x128xi1>, vector<2x128xf32>
    %cst_6 = arith.constant dense<0xFF800000> : vector<2xf32>
    %12 = vector.multi_reduction <maximumf>, %11, %cst_6 [1] : vector<2x128xf32> to vector<2xf32>
    %13 = vector.shape_cast %12 : vector<2xf32> to vector<2x1xf32>
    %14 = vector.broadcast %13 : vector<2x1xf32> to vector<2x128xf32>
    %15 = arith.subf %11, %14 : vector<2x128xf32>
    %16 = math.exp %15 : vector<2x128xf32>
    %cst_7 = arith.constant dense<0.000000e+00> : vector<2xf32>
    %17 = vector.multi_reduction <add>, %16, %cst_7 [1] : vector<2x128xf32> to vector<2xf32>
    %18 = vector.shape_cast %17 : vector<2xf32> to vector<2x1xf32>
    %19 = math.log %18 : vector<2x1xf32>
    %20 = vector.broadcast %19 : vector<2x1xf32> to vector<2x128xf32>
    %21 = arith.subf %15, %20 : vector<2x128xf32>
    %c0_8 = arith.constant 0 : index
    %c0_9 = arith.constant 0 : index
    %22 = vector.load %arg4[%c0_8, %c0_9] : memref<2x128xf32, #tpu.memory_space<vmem>>, vector<2x128xf32>
    tpu.vector_store %arg4[%c0_8, %c0_9], %21 {strides = array<i32>} : memref<2x128xf32, #tpu.memory_space<vmem>>, vector<2x128xf32>,
    return
  }
  func.func @transform_0(%arg0: i32) -> (i32, i32) {
    %c0_i32 = arith.constant 0 : i32
    %c0_i32_0 = arith.constant 0 : i32
    %c0_i32_1 = arith.constant 0 : i32
    return %c0_i32, %c0_i32_0 : i32, i32
  }
  func.func @transform_1(%arg0: i32) -> (i32, i32) {
    %c0_i32 = arith.constant 0 : i32
    %c0_i32_0 = arith.constant 0 : i32
    %c0_i32_1 = arith.constant 0 : i32
    return %c0_i32, %c0_i32_0 : i32, i32
  }
  func.func @transform_2(%arg0: i32) -> (i32, i32) {
    %c0_i32 = arith.constant 0 : i32
    %c0_i32_0 = arith.constant 0 : i32
    %c0_i32_1 = arith.constant 0 : i32
    return %c0_i32, %c0_i32_0 : i32, i32
  }
  func.func @transform_3(%arg0: i32) -> (i32, i32) {
    %c0_i32 = arith.constant 0 : i32
    %c0_i32_0 = arith.constant 0 : i32
    %c0_i32_1 = arith.constant 0 : i32
    return %c0_i32, %c0_i32_0 : i32, i32
  }
}

</mosaic_0001>

<llo_original>
// kernel: net_forward.8
$region0: #{net_forward.8}
  #allocation0 [shape = 'u32[]', space=smem, size = 0x4, offset = 0x4, fixed_abs, tag = 'smem constant byte address 0x4 - core index']
  #allocation1 [shape = 'u32[144,128]{1,0:T(1,128)}', space=vmem, size = 0x12000, scoped, tag = 'internal scratch']
  %s0 = inlined_call_operand.vmem [shape: f32[968,49], index: 0, kind: input, shape index: {}]
  %s1 = inlined_call_operand.vmem [shape: bf16[49,128], index: 1, kind: input, shape index: {}]
  %s2 = inlined_call_operand.vmem [shape: f32[1,128], index: 2, kind: input, shape index: {}]
  %s3 = inlined_call_operand.vmem [shape: f32[968,128], index: 3, kind: output, shape index: {}]
  %s4 = sld [smem:[#allocation0]]
  $region22: #{net_forward.8} parent=0
    _
  %s6 = ssub.s32 1, %s4
  %s7 = scalar_select 0, %s6, %s4
  // Predicated region
  $region2: #{net_forward.8} parent=0 // pred_check
    _
  $region3: #{net_forward.8} parent=0 // pred_check_branch
    %9 = sbr.rel (0) target = $region5
  $region4: #{net_forward.8} parent=0 // pred_region
    _
  $region5: #{net_forward.8} parent=0 // pred_fallthru
    _
  // Predicated region
  $region6: #{net_forward.8} parent=0 // pred_check
    _
  $region7: #{net_forward.8} parent=0 // pred_check_branch
    %11 = sbr.rel (0) target = $region9
  $region8: #{net_forward.8} parent=0 // pred_region
    _
  $region9: #{net_forward.8} parent=0 // pred_fallthru
    _
  // Predicated region
  $region10: #{net_forward.8} parent=0 // pred_check
    _
  $region11: #{net_forward.8} parent=0 // pred_check_branch
    %13 = sbr.rel (0) target = $region13
  $region12: #{net_forward.8} parent=0 // pred_region
    _
  $region13: #{net_forward.8} parent=0 // pred_fallthru
    _
  %v15 = vld [vmem:[%s0] sm:$0xff]
  %v16 = vld [vmem:[%s0 + $0x8] sm:$0xff]
  %v17 = vld [vmem:[%s0 + $0x10] sm:$0xff]
  %v18 = vld [vmem:[%s0 + $0x18] sm:$0xff]
  %v19 = vld [vmem:[%s0 + $0x20] sm:$0xff]
  %v20 = vld [vmem:[%s0 + $0x28] sm:$0xff]
  %v21 = vld [vmem:[%s0 + $0x30] sm:$0xff]
  %v22 = vld [vmem:[%s0 + $0x38] sm:$0xff]
  %v23 = vld [vmem:[%s0 + $0x40] sm:$0xff]
  %v24 = vld [vmem:[%s0 + $0x48] sm:$0xff]
  %v25 = vld [vmem:[%s0 + $0x50] sm:$0xff]
  %v26 = vld [vmem:[%s0 + $0x58] sm:$0xff]
  %v27 = vld [vmem:[%s0 + $0x60] sm:$0xff]
  %v28 = vld [vmem:[%s0 + $0x68] sm:$0xff]
  %v29 = vld [vmem:[%s0 + $0x70] sm:$0xff]
  %v30 = vld [vmem:[%s0 + $0x78] sm:$0xff]
  %v31 = vld [vmem:[%s0 + $0x80] sm:$0xff]
  %v32 = vld [vmem:[%s0 + $0x88] sm:$0xff]
  %v33 = vld [vmem:[%s0 + $0x90] sm:$0xff]
  %v34 = vld [vmem:[%s0 + $0x98] sm:$0xff]
  %v35 = vld [vmem:[%s0 + $0xa0] sm:$0xff]
  %v36 = vld [vmem:[%s0 + $0xa8] sm:$0xff]
  %v37 = vld [vmem:[%s0 + $0xb0] sm:$0xff]
  %v38 = vld [vmem:[%s0 + $0xb8] sm:$0xff]
  %v39 = vld [vmem:[%s0 + $0xc0] sm:$0xff]
  %v40 = vld [vmem:[%s0 + $0xc8] sm:$0xff]
  %v41 = vld [vmem:[%s0 + $0xd0] sm:$0xff]
  %v42 = vld [vmem:[%s0 + $0xd8] sm:$0xff]
  %v43 = vld [vmem:[%s0 + $0xe0] sm:$0xff]
  %v44 = vld [vmem:[%s0 + $0xe8] sm:$0xff]
  %v45 = vld [vmem:[%s0 + $0xf0] sm:$0xff]
  %v46 = vld [vmem:[%s0 + $0xf8] sm:$0xff]
  %v47 = vld [vmem:[%s0 + $0x100] sm:$0xff]
  %v48 = vld [vmem:[%s0 + $0x108] sm:$0xff]
  %v49 = vld [vmem:[%s0 + $0x110] sm:$0xff]
  %v50 = vld [vmem:[%s0 + $0x118] sm:$0xff]
  %v51 = vld [vmem:[%s0 + $0x120] sm:$0xff]
  %v52 = vld [vmem:[%s0 + $0x128] sm:$0xff]
  %v53 = vld [vmem:[%s0 + $0x130] sm:$0xff]
  %v54 = vld [vmem:[%s0 + $0x138] sm:$0xff]
  %v55 = vld [vmem:[%s0 + $0x140] sm:$0xff]
  %v56 = vld [vmem:[%s0 + $0x148] sm:$0xff]
  %v57 = vld [vmem:[%s0 + $0x150] sm:$0xff]
  %v58 = vld [vmem:[%s0 + $0x158] sm:$0xff]
  %v59 = vld [vmem:[%s0 + $0x160] sm:$0xff]
  %v60 = vld [vmem:[%s0 + $0x168] sm:$0xff]
  %v61 = vld [vmem:[%s0 + $0x170] sm:$0xff]
  %v62 = vld [vmem:[%s0 + $0x178] sm:$0xff]
  %v63 = vld [vmem:[%s0 + $0x180] sm:$0xff]
  %v64 = vld [vmem:[%s0 + $0x188] sm:$0xff]
  %v65 = vld [vmem:[%s0 + $0x190] sm:$0xff]
  %v66 = vld [vmem:[%s0 + $0x198] sm:$0xff]
  %v67 = vld [vmem:[%s0 + $0x1a0] sm:$0xff]
  %v68 = vld [vmem:[%s0 + $0x1a8] sm:$0xff]
  %v69 = vld [vmem:[%s0 + $0x1b0] sm:$0xff]
  %v70 = vld [vmem:[%s0 + $0x1b8] sm:$0xff]
  %v71 = vld [vmem:[%s0 + $0x1c0] sm:$0xff]
  %v72 = vld [vmem:[%s0 + $0x1c8] sm:$0xff]
  %v73 = vld [vmem:[%s0 + $0x1d0] sm:$0xff]
  %v74 = vld [vmem:[%s0 + $0x1d8] sm:$0xff]
  %v75 = vld [vmem:[%s0 + $0x1e0] sm:$0xff]
  %v76 = vld [vmem:[%s0 + $0x1e8] sm:$0xff]
  %v77 = vld [vmem:[%s0 + $0x1f0] sm:$0xff]
  %v78 = vld [vmem:[%s0 + $0x1f8] sm:$0xff]
  %v79 = vld [vmem:[%s0 + $0x200] sm:$0xff]
  %v80 = vld [vmem:[%s0 + $0x208] sm:$0xff]
  %v81 = vld [vmem:[%s0 + $0x210] sm:$0xff]
  %v82 = vld [vmem:[%s0 + $0x218] sm:$0xff]
  %v83 = vld [vmem:[%s0 + $0x220] sm:$0xff]
  %v84 = vld [vmem:[%s0 + $0x228] sm:$0xff]
  %v85 = vld [vmem:[%s0 + $0x230] sm:$0xff]
  %v86 = vld [vmem:[%s0 + $0x238] sm:$0xff]
  %v87 = vld [vmem:[%s0 + $0x240] sm:$0xff]
  %v88 = vld [vmem:[%s0 + $0x248] sm:$0xff]
  %v89 = vld [vmem:[%s0 + $0x250] sm:$0xff]
  %v90 = vld [vmem:[%s0 + $0x258] sm:$0xff]
  %v91 = vld [vmem:[%s0 + $0x260] sm:$0xff]
  %v92 = vld [vmem:[%s0 + $0x268] sm:$0xff]
  %v93 = vld [vmem:[%s0 + $0x270] sm:$0xff]
  %v94 = vld [vmem:[%s0 + $0x278] sm:$0xff]
  %v95 = vld [vmem:[%s0 + $0x280] sm:$0xff]
  %v96 = vld [vmem:[%s0 + $0x288] sm:$0xff]
  %v97 = vld [vmem:[%s0 + $0x290] sm:$0xff]
  %v98 = vld [vmem:[%s0 + $0x298] sm:$0xff]
  %v99 = vld [vmem:[%s0 + $0x2a0] sm:$0xff]
  %v100 = vld [vmem:[%s0 + $0x2a8] sm:$0xff]
  %v101 = vld [vmem:[%s0 + $0x2b0] sm:$0xff]
  %v102 = vld [vmem:[%s0 + $0x2b8] sm:$0xff]
  %v103 = vld [vmem:[%s0 + $0x2c0] sm:$0xff]
  %v104 = vld [vmem:[%s0 + $0x2c8] sm:$0xff]
  %v105 = vld [vmem:[%s0 + $0x2d0] sm:$0xff]
  %v106 = vld [vmem:[%s0 + $0x2d8] sm:$0xff]
  %v107 = vld [vmem:[%s0 + $0x2e0] sm:$0xff]
  %v108 = vld [vmem:[%s0 + $0x2e8] sm:$0xff]
  %v109 = vld [vmem:[%s0 + $0x2f0] sm:$0xff]
  %v110 = vld [vmem:[%s0 + $0x2f8] sm:$0xff]
  %v111 = vld [vmem:[%s0 + $0x300] sm:$0xff]
  %v112 = vld [vmem:[%s0 + $0x308] sm:$0xff]
  %v113 = vld [vmem:[%s0 + $0x310] sm:$0xff]
  %v114 = vld [vmem:[%s0 + $0x318] sm:$0xff]
  %v115 = vld [vmem:[%s0 + $0x320] sm:$0xff]
  %v116 = vld [vmem:[%s0 + $0x328] sm:$0xff]
  %v117 = vld [vmem:[%s0 + $0x330] sm:$0xff]
  %v118 = vld [vmem:[%s0 + $0x338] sm:$0xff]
  %v119 = vld [vmem:[%s0 + $0x340] sm:$0xff]
  %v120 = vld [vmem:[%s0 + $0x348] sm:$0xff]
  %v121 = vld [vmem:[%s0 + $0x350] sm:$0xff]
  %v122 = vld [vmem:[%s0 + $0x358] sm:$0xff]
  %v123 = vld [vmem:[%s0 + $0x360] sm:$0xff]
  %v124 = vld [vmem:[%s0 + $0x368] sm:$0xff]
  %v125 = vld [vmem:[%s0 + $0x370] sm:$0xff]
  %v126 = vld [vmem:[%s0 + $0x378] sm:$0xff]
  %v127 = vld [vmem:[%s0 + $0x380] sm:$0xff]
  %v128 = vld [vmem:[%s0 + $0x388] sm:$0xff]
  %v129 = vld [vmem:[%s0 + $0x390] sm:$0xff]
  %v130 = vld [vmem:[%s0 + $0x398] sm:$0xff]
  %v131 = vld [vmem:[%s0 + $0x3a0] sm:$0xff]
  %v132 = vld [vmem:[%s0 + $0x3a8] sm:$0xff]
  %v133 = vld [vmem:[%s0 + $0x3b0] sm:$0xff]
  %v134 = vld [vmem:[%s0 + $0x3b8] sm:$0xff]
  %v135 = vld [vmem:[%s0 + $0x3c0] sm:$0xff]
  %v136 = vpack.c.bf16 %v16, %v15
  %v137 = vpack.c.bf16 %v18, %v17
  %v138 = vpack.c.bf16 %v20, %v19
  %v139 = vpack.c.bf16 %v22, %v21
  %v140 = vpack.c.bf16 %v24, %v23
  %v141 = vpack.c.bf16 %v26, %v25
  %v142 = vpack.c.bf16 %v28, %v27
  %v143 = vpack.c.bf16 %v30, %v29
  %v144 = vpack.c.bf16 %v32, %v31
  %v145 = vpack.c.bf16 %v34, %v33
  %v146 = vpack.c.bf16 %v36, %v35
  %v147 = vpack.c.bf16 %v38, %v37
  %v148 = vpack.c.bf16 %v40, %v39
  %v149 = vpack.c.bf16 %v42, %v41
  %v150 = vpack.c.bf16 %v44, %v43
  %v151 = vpack.c.bf16 %v46, %v45
  %v152 = vpack.c.bf16 %v48, %v47
  %v153 = vpack.c.bf16 %v50, %v49
  %v154 = vpack.c.bf16 %v52, %v51
  %v155 = vpack.c.bf16 %v54, %v53
  %v156 = vpack.c.bf16 %v56, %v55
  %v157 = vpack.c.bf16 %v58, %v57
  %v158 = vpack.c.bf16 %v60, %v59
  %v159 = vpack.c.bf16 %v62, %v61
  %v160 = vpack.c.bf16 %v64, %v63
  %v161 = vpack.c.bf16 %v66, %v65
  %v162 = vpack.c.bf16 %v68, %v67
  %v163 = vpack.c.bf16 %v70, %v69
  %v164 = vpack.c.bf16 %v72, %v71
  %v165 = vpack.c.bf16 %v74, %v73
  %v166 = vpack.c.bf16 %v76, %v75
  %v167 = vpack.c.bf16 %v78, %v77
  %v168 = vpack.c.bf16 %v80, %v79
  %v169 = vpack.c.bf16 %v82, %v81
  %v170 = vpack.c.bf16 %v84, %v83
  %v171 = vpack.c.bf16 %v86, %v85
  %v172 = vpack.c.bf16 %v88, %v87
  %v173 = vpack.c.bf16 %v90, %v89
  %v174 = vpack.c.bf16 %v92, %v91
  %v175 = vpack.c.bf16 %v94, %v93
  %v176 = vpack.c.bf16 %v96, %v95
  %v177 = vpack.c.bf16 %v98, %v97
  %v178 = vpack.c.bf16 %v100, %v99
  %v179 = vpack.c.bf16 %v102, %v101
  %v180 = vpack.c.bf16 %v104, %v103
  %v181 = vpack.c.bf16 %v106, %v105
  %v182 = vpack.c.bf16 %v108, %v107
  %v183 = vpack.c.bf16 %v110, %v109
  %v184 = vpack.c.bf16 %v112, %v111
  %v185 = vpack.c.bf16 %v114, %v113
  %v186 = vpack.c.bf16 %v116, %v115
  %v187 = vpack.c.bf16 %v118, %v117
  %v188 = vpack.c.bf16 %v120, %v119
  %v189 = vpack.c.bf16 %v122, %v121
  %v190 = vpack.c.bf16 %v124, %v123
  %v191 = vpack.c.bf16 %v126, %v125
  %v192 = vpack.c.bf16 %v128, %v127
  %v193 = vpack.c.bf16 %v130, %v129
  %v194 = vpack.c.bf16 %v132, %v131
  %v195 = vpack.c.bf16 %v134, %v133
  %v196 = vpack.c.bf16 %v135, %v135
  %v197 = vld [vmem:[%s1] sm:$0xf]
  %v198 = vld [vmem:[%s1 + $0x4] sm:$0xf]
  %v199 = vld [vmem:[%s1 + $0x8] sm:$0xf]
  %v200 = vld [vmem:[%s1 + $0xc] sm:$0xf]
  %v201 = vld [vmem:[%s1 + $0x10] sm:$0xf]
  %v202 = vld [vmem:[%s1 + $0x14] sm:$0xf]
  %v203 = vld [vmem:[%s1 + $0x18] sm:$0x1]
  %v204 = vld [vmem:[%s2] sm:$0x1]
  %v206 = vlaneseq
  %v207 = vshrl.u32 %v206, 7
  %v208 = vsub.s32 0, %v207
  %v209 = vrot.slane %v204, %v208
  %v218 = vunpack.c.l.b16 %v197
  %v219 = vunpack.c.l.b16 %v198
  %v220 = vunpack.c.l.b16 %v199
  %v221 = vunpack.c.l.b16 %v200
  %v222 = vunpack.c.l.b16 %v201
  %v223 = vunpack.c.l.b16 %v202
  %v224 = vunpack.c.l.b16 %v203
  %v225 = vpack.c.b16 %v219, %v218
  %v226 = vpack.c.b16 %v221, %v220
  %v227 = vpack.c.b16 %v223, %v222
  %v228 = vpack.c.b16 %v224, %v224
  %vm232 = vcmask 400384
  %v234 = vsel %vm232, %v136, 0
  %v237 = vsel %vm232, %v137, 0
  %v240 = vsel %vm232, %v138, 0
  %v243 = vsel %vm232, %v139, 0
  %v246 = vsel %vm232, %v140, 0
  %v249 = vsel %vm232, %v141, 0
  %v252 = vsel %vm232, %v142, 0
  %v255 = vsel %vm232, %v143, 0
  %v258 = vsel %vm232, %v144, 0
  %v261 = vsel %vm232, %v145, 0
  %v264 = vsel %vm232, %v146, 0
  %v267 = vsel %vm232, %v147, 0
  %v270 = vsel %vm232, %v148, 0
  %v273 = vsel %vm232, %v149, 0
  %v276 = vsel %vm232, %v150, 0
  %v279 = vsel %vm232, %v151, 0
  %v282 = vsel %vm232, %v152, 0
  %v285 = vsel %vm232, %v153, 0
  %v288 = vsel %vm232, %v154, 0
  %v291 = vsel %vm232, %v155, 0
  %v294 = vsel %vm232, %v156, 0
  %v297 = vsel %vm232, %v157, 0
  %v300 = vsel %vm232, %v158, 0
  %v303 = vsel %vm232, %v159, 0
  %v306 = vsel %vm232, %v160, 0
  %v309 = vsel %vm232, %v161, 0
  %v312 = vsel %vm232, %v162, 0
  %v315 = vsel %vm232, %v163, 0
  %v318 = vsel %vm232, %v164, 0
  %v321 = vsel %vm232, %v165, 0
  %v324 = vsel %vm232, %v166, 0
  %v327 = vsel %vm232, %v167, 0
  %v330 = vsel %vm232, %v168, 0
  %v333 = vsel %vm232, %v169, 0
  %v336 = vsel %vm232, %v170, 0
  %v339 = vsel %vm232, %v171, 0
  %v342 = vsel %vm232, %v172, 0
  %v345 = vsel %vm232, %v173, 0
  %v348 = vsel %vm232, %v174, 0
  %v351 = vsel %vm232, %v175, 0
  %v354 = vsel %vm232, %v176, 0
  %v357 = vsel %vm232, %v177, 0
  %v360 = vsel %vm232, %v178, 0
  %v363 = vsel %vm232, %v179, 0
  %v366 = vsel %vm232, %v180, 0
  %v369 = vsel %vm232, %v181, 0
  %v372 = vsel %vm232, %v182, 0
  %v375 = vsel %vm232, %v183, 0
  %v378 = vsel %vm232, %v184, 0
  %v381 = vsel %vm232, %v185, 0
  %v384 = vsel %vm232, %v186, 0
  %v387 = vsel %vm232, %v187, 0
  %v390 = vsel %vm232, %v188, 0
  %v393 = vsel %vm232, %v189, 0
  %v396 = vsel %vm232, %v190, 0
  %v399 = vsel %vm232, %v191, 0
  %v402 = vsel %vm232, %v192, 0
  %v405 = vsel %vm232, %v193, 0
  %v408 = vsel %vm232, %v194, 0
  %v411 = vsel %vm232, %v195, 0
  %v414 = vsel %vm232, %v196, 0
  %vm416 = vcmask 1040384
  %v417 = vsel 0, 4294967295, 65535
  %v418 = vsel %vm416, %v417, 0
  %v420 = vand.u32 %v228, %v418
  %422 = vmatprep.subr.bf16.mxu0 0
  %423 = vmatpush1.bf16.msra.mxu0 %v225
  %424 = vmatprep.subr.bf16.mxu0 0
  %425 = vmatpush1.bf16.msra.mxu0 %v226
  %426 = vmatprep.subr.bf16.mxu0 0
  %427 = vmatpush1.bf16.msra.mxu0 %v227
  %428 = vmatprep.subr.bf16.mxu0 0
  %429 = vmatpush1.bf16.msra.mxu0 %v420
  %430 = vmatprep.subr.bf16.mxu0 0
  %431 = vmatpush1.bf16.msra.mxu0 0
  %432 = vmatprep.subr.bf16.mxu0 0
  %433 = vmatpush1.bf16.msra.mxu0 0
  %434 = vmatprep.subr.bf16.mxu0 0
  %435 = vmatpush1.bf16.msra.mxu0 0
  %436 = vmatprep.subr.bf16.mxu0 0
  %437 = vmatpush1.bf16.msra.mxu0 0
  %438 = vmatprep.subr.bf16.mxu0 0
  %439 = vmatpush1.bf16.msra.mxu0 0
  %440 = vmatprep.subr.bf16.mxu0 0
  %441 = vmatpush1.bf16.msra.mxu0 0
  %442 = vmatprep.subr.bf16.mxu0 0
  %443 = vmatpush1.bf16.msra.mxu0 0
  %444 = vmatprep.subr.bf16.mxu0 0
  %445 = vmatpush1.bf16.msra.mxu0 0
  %446 = vmatprep.subr.bf16.mxu0 0
  %447 = vmatpush1.bf16.msra.mxu0 0
  %448 = vmatprep.subr.bf16.mxu0 0
  %449 = vmatpush1.bf16.msra.mxu0 0
  %450 = vmatprep.subr.bf16.mxu0 0
  %451 = vmatpush1.bf16.msra.mxu0 0
  %452 = vmatprep.subr.bf16.mxu0 0
  %453 = vmatpush1.bf16.msra.mxu0 0
  %454 = vmatprep.mubr.bf16.mxu0 0
  %455 = vmatmul.mubr.bf16.gmra.mrb[0].mxu0 %v234
  %v456 = vpop.f32.mrb[0].mxu0
  %v457 = vadd.f32 %v209, %v456
  %v458 = vpop.f32.mrb[0].mxu0
  %v459 = vpop.f32.mrb[0].mxu0
  %v460 = vadd.f32 %v209, %v459
  %v461 = vpop.f32.mrb[0].mxu0
  %462 = vmatprep.mubr.bf16.mxu0 0
  %463 = vmatmul.mubr.bf16.gmra.mrb[0].mxu0 %v237
  %v464 = vpop.f32.mrb[0].mxu0
  %v465 = vadd.f32 %v209, %v464
  %v466 = vpop.f32.mrb[0].mxu0
  %v467 = vpop.f32.mrb[0].mxu0
  %v468 = vadd.f32 %v209, %v467
  %v469 = vpop.f32.mrb[0].mxu0
  %470 = vmatprep.mubr.bf16.mxu0 0
  %471 = vmatmul.mubr.bf16.gmra.mrb[0].mxu0 %v240
  %v472 = vpop.f32.mrb[0].mxu0
  %v473 = vadd.f32 %v209, %v472
  %v474 = vpop.f32.mrb[0].mxu0
  %v475 = vpop.f32.mrb[0].mxu0
  %v476 = vadd.f32 %v209, %v475
  %v477 = vpop.f32.mrb[0].mxu0
  %478 = vmatprep.mubr.bf16.mxu0 0
  %479 = vmatmul.mubr.bf16.gmra.mrb[0].mxu0 %v243
  %v480 = vpop.f32.mrb[0].mxu0
  %v481 = vadd.f32 %v209, %v480
  %v482 = vpop.f32.mrb[0].mxu0
  %v483 = vpop.f32.mrb[0].mxu0
  %v484 = vadd.f32 %v209, %v483
  %v485 = vpop.f32.mrb[0].mxu0
  %486 = vmatprep.mubr.bf16.mxu0 0
  %487 = vmatmul.mubr.bf16.gmra.mrb[0].mxu0 %v246
  %v488 = vpop.f32.mrb[0].mxu0
  %v489 = vadd.f32 %v209, %v488
  %v490 = vpop.f32.mrb[0].mxu0
  %v491 = vpop.f32.mrb[0].mxu0
  %v492 = vadd.f32 %v209, %v491
  %v493 = vpop.f32.mrb[0].mxu0
  %494 = vmatprep.mubr.bf16.mxu0 0
  %495 = vmatmul.mubr.bf16.gmra.mrb[0].mxu0 %v249
  %v496 = vpop.f32.mrb[0].mxu0
  %v497 = vadd.f32 %v209, %v496
  %v498 = vpop.f32.mrb[0].mxu0
  %v499 = vpop.f32.mrb[0].mxu0
  %v500 = vadd.f32 %v209, %v499
  %v501 = vpop.f32.mrb[0].mxu0
  %502 = vmatprep.mubr.bf16.mxu0 0
  %503 = vmatmul.mubr.bf16.gmra.mrb[0].mxu0 %v252
  %v504 = vpop.f32.mrb[0].mxu0
  %v505 = vadd.f32 %v209, %v504
  %v506 = vpop.f32.mrb[0].mxu0
  %v507 = vpop.f32.mrb[0].mxu0
  %v508 = vadd.f32 %v209, %v507
  %v509 = vpop.f32.mrb[0].mxu0
  %510 = vmatprep.mubr.bf16.mxu0 0
  %511 = vmatmul.mubr.bf16.gmra.mrb[0].mxu0 %v255
  %v512 = vpop.f32.mrb[0].mxu0
  %v513 = vadd.f32 %v209, %v512
  %v514 = vpop.f32.mrb[0].mxu0
  %v515 = vpop.f32.mrb[0].mxu0
  %v516 = vadd.f32 %v209, %v515
  %v517 = vpop.f32.mrb[0].mxu0
  %518 = vmatprep.mubr.bf16.mxu0 0
  %519 = vmatmul.mubr.bf16.gmra.mrb[0].mxu0 %v258
  %v520 = vpop.f32.mrb[0].mxu0
  %v521 = vadd.f32 %v209, %v520
  %v522 = vpop.f32.mrb[0].mxu0
  %v523 = vpop.f32.mrb[0].mxu0
  %v524 = vadd.f32 %v209, %v523
  %v525 = vpop.f32.mrb[0].mxu0
  %526 = vmatprep.mubr.bf16.mxu0 0
  %527 = vmatmul.mubr.bf16.gmra.mrb[0].mxu0 %v261
  %v528 = vpop.f32.mrb[0].mxu0
  %v529 = vadd.f32 %v209, %v528
  %v530 = vpop.f32.mrb[0].mxu0
  %v531 = vpop.f32.mrb[0].mxu0
  %v532 = vadd.f32 %v209, %v531
  %v533 = vpop.f32.mrb[0].mxu0
  %534 = vmatprep.mubr.bf16.mxu0 0
  %535 = vmatmul.mubr.bf16.gmra.mrb[0].mxu0 %v264
  %v536 = vpop.f32.mrb[0].mxu0
  %v537 = vadd.f32 %v209, %v536
  %v538 = vpop.f32.mrb[0].mxu0
  %v539 = vpop.f32.mrb[0].mxu0
  %v540 = vadd.f32 %v209, %v539
  %v541 = vpop.f32.mrb[0].mxu0
  %542 = vmatprep.mubr.bf16.mxu0 0
  %543 = vmatmul.mubr.bf16.gmra.mrb[0].mxu0 %v267
  %v544 = vpop.f32.mrb[0].mxu0
  %v545 = vadd.f32 %v209, %v544
  %v546 = vpop.f32.mrb[0].mxu0
  %v547 = vpop.f32.mrb[0].mxu0
  %v548 = vadd.f32 %v209, %v547
  %v549 = vpop.f32.mrb[0].mxu0
  %550 = vmatprep.mubr.bf16.mxu0 0
  %551 = vmatmul.mubr.bf16.gmra.mrb[0].mxu0 %v270
  %v552 = vpop.f32.mrb[0].mxu0
  %v553 = vadd.f32 %v209, %v552
  %v554 = vpop.f32.mrb[0].mxu0
  %v555 = vpop.f32.mrb[0].mxu0
  %v556 = vadd.f32 %v209, %v555
  %v557 = vpop.f32.mrb[0].mxu0
  %558 = vmatprep.mubr.bf16.mxu0 0
  %559 = vmatmul.mubr.bf16.gmra.mrb[0].mxu0 %v273
  %v560 = vpop.f32.mrb[0].mxu0
  %v561 = vadd.f32 %v209, %v560
  %v562 = vpop.f32.mrb[0].mxu0
  %v563 = vpop.f32.mrb[0].mxu0
  %v564 = vadd.f32 %v209, %v563
  %v565 = vpop.f32.mrb[0].mxu0
  %566 = vmatprep.mubr.bf16.mxu0 0
  %567 = vmatmul.mubr.bf16.gmra.mrb[0].mxu0 %v276
  %v568 = vpop.f32.mrb[0].mxu0
  %v569 = vadd.f32 %v209, %v568
  %v570 = vpop.f32.mrb[0].mxu0
  %v571 = vpop.f32.mrb[0].mxu0
  %v572 = vadd.f32 %v209, %v571
  %v573 = vpop.f32.mrb[0].mxu0
  %574 = vmatprep.mubr.bf16.mxu0 0
  %575 = vmatmul.mubr.bf16.gmra.mrb[0].mxu0 %v279
  %v576 = vpop.f32.mrb[0].mxu0
  %v577 = vadd.f32 %v209, %v576
  %v578 = vpop.f32.mrb[0].mxu0
  %v579 = vpop.f32.mrb[0].mxu0
  %v580 = vadd.f32 %v209, %v579
  %v581 = vpop.f32.mrb[0].mxu0
  %582 = vmatprep.mubr.bf16.mxu0 0
  %583 = vmatmul.mubr.bf16.gmra.mrb[0].mxu0 %v282
  %v584 = vpop.f32.mrb[0].mxu0
  %v585 = vadd.f32 %v209, %v584
  %v586 = vpop.f32.mrb[0].mxu0
  %v587 = vpop.f32.mrb[0].mxu0
  %v588 = vadd.f32 %v209, %v587
  %v589 = vpop.f32.mrb[0].mxu0
  %590 = vmatprep.mubr.bf16.mxu0 0
  %591 = vmatmul.mubr.bf16.gmra.mrb[0].mxu0 %v285
  %v592 = vpop.f32.mrb[0].mxu0
  %v593 = vadd.f32 %v209, %v592
  %v594 = vpop.f32.mrb[0].mxu0
  %v595 = vpop.f32.mrb[0].mxu0
  %v596 = vadd.f32 %v209, %v595
  %v597 = vpop.f32.mrb[0].mxu0
  %598 = vmatprep.mubr.bf16.mxu0 0
  %599 = vmatmul.mubr.bf16.gmra.mrb[0].mxu0 %v288
  %v600 = vpop.f32.mrb[0].mxu0
  %v601 = vadd.f32 %v209, %v600
  %v602 = vpop.f32.mrb[0].mxu0
  %v603 = vpop.f32.mrb[0].mxu0
  %v604 = vadd.f32 %v209, %v603
  %v605 = vpop.f32.mrb[0].mxu0
  %606 = vmatprep.mubr.bf16.mxu0 0
  %607 = vmatmul.mubr.bf16.gmra.mrb[0].mxu0 %v291
  %v608 = vpop.f32.mrb[0].mxu0
  %v609 = vadd.f32 %v209, %v608
  %v610 = vpop.f32.mrb[0].mxu0
  %v611 = vpop.f32.mrb[0].mxu0
  %v612 = vadd.f32 %v209, %v611
  %v613 = vpop.f32.mrb[0].mxu0
  %614 = vmatprep.mubr.bf16.mxu0 0
  %615 = vmatmul.mubr.bf16.gmra.mrb[0].mxu0 %v294
  %v616 = vpop.f32.mrb[0].mxu0
  %v617 = vadd.f32 %v209, %v616
  %v618 = vpop.f32.mrb[0].mxu0
  %v619 = vpop.f32.mrb[0].mxu0
  %v620 = vadd.f32 %v209, %v619
  %v621 = vpop.f32.mrb[0].mxu0
  %622 = vmatprep.mubr.bf16.mxu0 0
  %623 = vmatmul.mubr.bf16.gmra.mrb[0].mxu0 %v297
  %v624 = vpop.f32.mrb[0].mxu0
  %v625 = vadd.f32 %v209, %v624
  %v626 = vpop.f32.mrb[0].mxu0
  %v627 = vpop.f32.mrb[0].mxu0
  %v628 = vadd.f32 %v209, %v627
  %v629 = vpop.f32.mrb[0].mxu0
  %630 = vmatprep.mubr.bf16.mxu0 0
  %631 = vmatmul.mubr.bf16.gmra.mrb[0].mxu0 %v300
  %v632 = vpop.f32.mrb[0].mxu0
  %v633 = vadd.f32 %v209, %v632
  %v634 = vpop.f32.mrb[0].mxu0
  %v635 = vpop.f32.mrb[0].mxu0
  %v636 = vadd.f32 %v209, %v635
  %v637 = vpop.f32.mrb[0].mxu0
  %638 = vmatprep.mubr.bf16.mxu0 0
  %639 = vmatmul.mubr.bf16.gmra.mrb[0].mxu0 %v303
  %v640 = vpop.f32.mrb[0].mxu0
  %v641 = vadd.f32 %v209, %v640
  %v642 = vpop.f32.mrb[0].mxu0
  %v643 = vpop.f32.mrb[0].mxu0
  %v644 = vadd.f32 %v209, %v643
  %v645 = vpop.f32.mrb[0].mxu0
  %646 = vmatprep.mubr.bf16.mxu0 0
  %647 = vmatmul.mubr.bf16.gmra.mrb[0].mxu0 %v306
  %v648 = vpop.f32.mrb[0].mxu0
  %v649 = vadd.f32 %v209, %v648
  %v650 = vpop.f32.mrb[0].mxu0
  %v651 = vpop.f32.mrb[0].mxu0
  %v652 = vadd.f32 %v209, %v651
  %v653 = vpop.f32.mrb[0].mxu0
  %654 = vmatprep.mubr.bf16.mxu0 0
  %655 = vmatmul.mubr.bf16.gmra.mrb[0].mxu0 %v309
  %v656 = vpop.f32.mrb[0].mxu0
  %v657 = vadd.f32 %v209, %v656
  %v658 = vpop.f32.mrb[0].mxu0
  %v659 = vpop.f32.mrb[0].mxu0
  %v660 = vadd.f32 %v209, %v659
  %v661 = vpop.f32.mrb[0].mxu0
  %662 = vmatprep.mubr.bf16.mxu0 0
  %663 = vmatmul.mubr.bf16.gmra.mrb[0].mxu0 %v312
  %v664 = vpop.f32.mrb[0].mxu0
  %v665 = vadd.f32 %v209, %v664
  %v666 = vpop.f32.mrb[0].mxu0
  %v667 = vpop.f32.mrb[0].mxu0
  %v668 = vadd.f32 %v209, %v667
  %v669 = vpop.f32.mrb[0].mxu0
  %670 = vmatprep.mubr.bf16.mxu0 0
  %671 = vmatmul.mubr.bf16.gmra.mrb[0].mxu0 %v315
  %v672 = vpop.f32.mrb[0].mxu0
  %v673 = vadd.f32 %v209, %v672
  %v674 = vpop.f32.mrb[0].mxu0
  %v675 = vpop.f32.mrb[0].mxu0
  %v676 = vadd.f32 %v209, %v675
  %v677 = vpop.f32.mrb[0].mxu0
  %678 = vmatprep.mubr.bf16.mxu0 0
  %679 = vmatmul.mubr.bf16.gmra.mrb[0].mxu0 %v318
  %v680 = vpop.f32.mrb[0].mxu0
  %v681 = vadd.f32 %v209, %v680
  %v682 = vpop.f32.mrb[0].mxu0
  %v683 = vpop.f32.mrb[0].mxu0
  %v684 = vadd.f32 %v209, %v683
  %v685 = vpop.f32.mrb[0].mxu0
  %686 = vmatprep.mubr.bf16.mxu0 0
  %687 = vmatmul.mubr.bf16.gmra.mrb[0].mxu0 %v321
  %v688 = vpop.f32.mrb[0].mxu0
  %v689 = vadd.f32 %v209, %v688
  %v690 = vpop.f32.mrb[0].mxu0
  %v691 = vpop.f32.mrb[0].mxu0
  %v692 = vadd.f32 %v209, %v691
  %v693 = vpop.f32.mrb[0].mxu0
  %694 = vmatprep.mubr.bf16.mxu0 0
  %695 = vmatmul.mubr.bf16.gmra.mrb[0].mxu0 %v324
  %v696 = vpop.f32.mrb[0].mxu0
  %v697 = vadd.f32 %v209, %v696
  %v698 = vpop.f32.mrb[0].mxu0
  %v699 = vpop.f32.mrb[0].mxu0
  %v700 = vadd.f32 %v209, %v699
  %v701 = vpop.f32.mrb[0].mxu0
  %702 = vmatprep.mubr.bf16.mxu0 0
  %703 = vmatmul.mubr.bf16.gmra.mrb[0].mxu0 %v327
  %v704 = vpop.f32.mrb[0].mxu0
  %v705 = vadd.f32 %v209, %v704
  %v706 = vpop.f32.mrb[0].mxu0
  %v707 = vpop.f32.mrb[0].mxu0
  %v708 = vadd.f32 %v209, %v707
  %v709 = vpop.f32.mrb[0].mxu0
  %710 = vmatprep.mubr.bf16.mxu0 0
  %711 = vmatmul.mubr.bf16.gmra.mrb[0].mxu0 %v330
  %v712 = vpop.f32.mrb[0].mxu0
  %v713 = vadd.f32 %v209, %v712
  %v714 = vpop.f32.mrb[0].mxu0
  %v715 = vpop.f32.mrb[0].mxu0
  %v716 = vadd.f32 %v209, %v715
  %v717 = vpop.f32.mrb[0].mxu0
  %718 = vmatprep.mubr.bf16.mxu0 0
  %719 = vmatmul.mubr.bf16.gmra.mrb[0].mxu0 %v333
  %v720 = vpop.f32.mrb[0].mxu0
  %v721 = vadd.f32 %v209, %v720
  %v722 = vpop.f32.mrb[0].mxu0
  %v723 = vpop.f32.mrb[0].mxu0
  %v724 = vadd.f32 %v209, %v723
  %v725 = vpop.f32.mrb[0].mxu0
  %726 = vmatprep.mubr.bf16.mxu0 0
  %727 = vmatmul.mubr.bf16.gmra.mrb[0].mxu0 %v336
  %v728 = vpop.f32.mrb[0].mxu0
  %v729 = vadd.f32 %v209, %v728
  %v730 = vpop.f32.mrb[0].mxu0
  %v731 = vpop.f32.mrb[0].mxu0
  %v732 = vadd.f32 %v209, %v731
  %v733 = vpop.f32.mrb[0].mxu0
  %734 = vmatprep.mubr.bf16.mxu0 0
  %735 = vmatmul.mubr.bf16.gmra.mrb[0].mxu0 %v339
  %v736 = vpop.f32.mrb[0].mxu0
  %v737 = vadd.f32 %v209, %v736
  %v738 = vpop.f32.mrb[0].mxu0
  %v739 = vpop.f32.mrb[0].mxu0
  %v740 = vadd.f32 %v209, %v739
  %v741 = vpop.f32.mrb[0].mxu0
  %742 = vmatprep.mubr.bf16.mxu0 0
  %743 = vmatmul.mubr.bf16.gmra.mrb[0].mxu0 %v342
  %v744 = vpop.f32.mrb[0].mxu0
  %v745 = vadd.f32 %v209, %v744
  %v746 = vpop.f32.mrb[0].mxu0
  %v747 = vpop.f32.mrb[0].mxu0
  %v748 = vadd.f32 %v209, %v747
  %v749 = vpop.f32.mrb[0].mxu0
  %750 = vmatprep.mubr.bf16.mxu0 0
  %751 = vmatmul.mubr.bf16.gmra.mrb[0].mxu0 %v345
  %v752 = vpop.f32.mrb[0].mxu0
  %v753 = vadd.f32 %v209, %v752
  %v754 = vpop.f32.mrb[0].mxu0
  %v755 = vpop.f32.mrb[0].mxu0
  %v756 = vadd.f32 %v209, %v755
  %v757 = vpop.f32.mrb[0].mxu0
  %758 = vmatprep.mubr.bf16.mxu0 0
  %759 = vmatmul.mubr.bf16.gmra.mrb[0].mxu0 %v348
  %v760 = vpop.f32.mrb[0].mxu0
  %v761 = vadd.f32 %v209, %v760
  %v762 = vpop.f32.mrb[0].mxu0
  %v763 = vpop.f32.mrb[0].mxu0
  %v764 = vadd.f32 %v209, %v763
  %v765 = vpop.f32.mrb[0].mxu0
  %766 = vmatprep.mubr.bf16.mxu0 0
  %767 = vmatmul.mubr.bf16.gmra.mrb[0].mxu0 %v351
  %v768 = vpop.f32.mrb[0].mxu0
  %v769 = vadd.f32 %v209, %v768
  %v770 = vpop.f32.mrb[0].mxu0
  %v771 = vpop.f32.mrb[0].mxu0
  %v772 = vadd.f32 %v209, %v771
  %v773 = vpop.f32.mrb[0].mxu0
  %774 = vmatprep.mubr.bf16.mxu0 0
  %775 = vmatmul.mubr.bf16.gmra.mrb[0].mxu0 %v354
  %v776 = vpop.f32.mrb[0].mxu0
  %v777 = vadd.f32 %v209, %v776
  %v778 = vpop.f32.mrb[0].mxu0
  %v779 = vpop.f32.mrb[0].mxu0
  %v780 = vadd.f32 %v209, %v779
  %v781 = vpop.f32.mrb[0].mxu0
  %782 = vmatprep.mubr.bf16.mxu0 0
  %783 = vmatmul.mubr.bf16.gmra.mrb[0].mxu0 %v357
  %v784 = vpop.f32.mrb[0].mxu0
  %v785 = vadd.f32 %v209, %v784
  %v786 = vpop.f32.mrb[0].mxu0
  %v787 = vpop.f32.mrb[0].mxu0
  %v788 = vadd.f32 %v209, %v787
  %v789 = vpop.f32.mrb[0].mxu0
  %790 = vmatprep.mubr.bf16.mxu0 0
  %791 = vmatmul.mubr.bf16.gmra.mrb[0].mxu0 %v360
  %v792 = vpop.f32.mrb[0].mxu0
  %v793 = vadd.f32 %v209, %v792
  %v794 = vpop.f32.mrb[0].mxu0
  %v795 = vpop.f32.mrb[0].mxu0
  %v796 = vadd.f32 %v209, %v795
  %v797 = vpop.f32.mrb[0].mxu0
  %798 = vmatprep.mubr.bf16.mxu0 0
  %799 = vmatmul.mubr.bf16.gmra.mrb[0].mxu0 %v363
  %v800 = vpop.f32.mrb[0].mxu0
  %v801 = vadd.f32 %v209, %v800
  %v802 = vpop.f32.mrb[0].mxu0
  %v803 = vpop.f32.mrb[0].mxu0
  %v804 = vadd.f32 %v209, %v803
  %v805 = vpop.f32.mrb[0].mxu0
  %806 = vmatprep.mubr.bf16.mxu0 0
  %807 = vmatmul.mubr.bf16.gmra.mrb[0].mxu0 %v366
  %v808 = vpop.f32.mrb[0].mxu0
  %v809 = vadd.f32 %v209, %v808
  %v810 = vpop.f32.mrb[0].mxu0
  %v811 = vpop.f32.mrb[0].mxu0
  %v812 = vadd.f32 %v209, %v811
  %v813 = vpop.f32.mrb[0].mxu0
  %814 = vmatprep.mubr.bf16.mxu0 0
  %815 = vmatmul.mubr.bf16.gmra.mrb[0].mxu0 %v369
  %v816 = vpop.f32.mrb[0].mxu0
  %v817 = vadd.f32 %v209, %v816
  %v818 = vpop.f32.mrb[0].mxu0
  %v819 = vpop.f32.mrb[0].mxu0
  %v820 = vadd.f32 %v209, %v819
  %v821 = vpop.f32.mrb[0].mxu0
  %822 = vmatprep.mubr.bf16.mxu0 0
  %823 = vmatmul.mubr.bf16.gmra.mrb[0].mxu0 %v372
  %v824 = vpop.f32.mrb[0].mxu0
  %v825 = vadd.f32 %v209, %v824
  %v826 = vpop.f32.mrb[0].mxu0
  %v827 = vpop.f32.mrb[0].mxu0
  %v828 = vadd.f32 %v209, %v827
  %v829 = vpop.f32.mrb[0].mxu0
  %830 = vmatprep.mubr.bf16.mxu0 0
  %831 = vmatmul.mubr.bf16.gmra.mrb[0].mxu0 %v375
  %v832 = vpop.f32.mrb[0].mxu0
  %v833 = vadd.f32 %v209, %v832
  %v834 = vpop.f32.mrb[0].mxu0
  %v835 = vpop.f32.mrb[0].mxu0
  %v836 = vadd.f32 %v209, %v835
  %v837 = vpop.f32.mrb[0].mxu0
  %838 = vmatprep.mubr.bf16.mxu0 0
  %839 = vmatmul.mubr.bf16.gmra.mrb[0].mxu0 %v378
  %v840 = vpop.f32.mrb[0].mxu0
  %v841 = vadd.f32 %v209, %v840
  %v842 = vpop.f32.mrb[0].mxu0
  %v843 = vpop.f32.mrb[0].mxu0
  %v844 = vadd.f32 %v209, %v843
  %v845 = vpop.f32.mrb[0].mxu0
  %846 = vmatprep.mubr.bf16.mxu0 0
  %847 = vmatmul.mubr.bf16.gmra.mrb[0].mxu0 %v381
  %v848 = vpop.f32.mrb[0].mxu0
  %v849 = vadd.f32 %v209, %v848
  %v850 = vpop.f32.mrb[0].mxu0
  %v851 = vpop.f32.mrb[0].mxu0
  %v852 = vadd.f32 %v209, %v851
  %v853 = vpop.f32.mrb[0].mxu0
  %854 = vmatprep.mubr.bf16.mxu0 0
  %855 = vmatmul.mubr.bf16.gmra.mrb[0].mxu0 %v384
  %v856 = vpop.f32.mrb[0].mxu0
  %v857 = vadd.f32 %v209, %v856
  %v858 = vpop.f32.mrb[0].mxu0
  %v859 = vpop.f32.mrb[0].mxu0
  %v860 = vadd.f32 %v209, %v859
  %v861 = vpop.f32.mrb[0].mxu0
  %862 = vmatprep.mubr.bf16.mxu0 0
  %863 = vmatmul.mubr.bf16.gmra.mrb[0].mxu0 %v387
  %v864 = vpop.f32.mrb[0].mxu0
  %v865 = vadd.f32 %v209, %v864
  %v866 = vpop.f32.mrb[0].mxu0
  %v867 = vpop.f32.mrb[0].mxu0
  %v868 = vadd.f32 %v209, %v867
  %v869 = vpop.f32.mrb[0].mxu0
  %870 = vmatprep.mubr.bf16.mxu0 0
  %871 = vmatmul.mubr.bf16.gmra.mrb[0].mxu0 %v390
  %v872 = vpop.f32.mrb[0].mxu0
  %v873 = vadd.f32 %v209, %v872
  %v874 = vpop.f32.mrb[0].mxu0
  %v875 = vpop.f32.mrb[0].mxu0
  %v876 = vadd.f32 %v209, %v875
  %v877 = vpop.f32.mrb[0].mxu0
  %878 = vmatprep.mubr.bf16.mxu0 0
  %879 = vmatmul.mubr.bf16.gmra.mrb[0].mxu0 %v393
  %v880 = vpop.f32.mrb[0].mxu0
  %v881 = vadd.f32 %v209, %v880
  %v882 = vpop.f32.mrb[0].mxu0
  %v883 = vpop.f32.mrb[0].mxu0
  %v884 = vadd.f32 %v209, %v883
  %v885 = vpop.f32.mrb[0].mxu0
  %886 = vmatprep.mubr.bf16.mxu0 0
  %887 = vmatmul.mubr.bf16.gmra.mrb[0].mxu0 %v396
  %v888 = vpop.f32.mrb[0].mxu0
  %v889 = vadd.f32 %v209, %v888
  %v890 = vpop.f32.mrb[0].mxu0
  %v891 = vpop.f32.mrb[0].mxu0
  %v892 = vadd.f32 %v209, %v891
  %v893 = vpop.f32.mrb[0].mxu0
  %894 = vmatprep.mubr.bf16.mxu0 0
  %895 = vmatmul.mubr.bf16.gmra.mrb[0].mxu0 %v399
  %v896 = vpop.f32.mrb[0].mxu0
  %v897 = vadd.f32 %v209, %v896
  %v898 = vpop.f32.mrb[0].mxu0
  %v899 = vpop.f32.mrb[0].mxu0
  %v900 = vadd.f32 %v209, %v899
  %v901 = vpop.f32.mrb[0].mxu0
  %902 = vmatprep.mubr.bf16.mxu0 0
  %903 = vmatmul.mubr.bf16.gmra.mrb[0].mxu0 %v402
  %v904 = vpop.f32.mrb[0].mxu0
  %v905 = vadd.f32 %v209, %v904
  %v906 = vpop.f32.mrb[0].mxu0
  %v907 = vpop.f32.mrb[0].mxu0
  %v908 = vadd.f32 %v209, %v907
  %v909 = vpop.f32.mrb[0].mxu0
  %910 = vmatprep.mubr.bf16.mxu0 0
  %911 = vmatmul.mubr.bf16.gmra.mrb[0].mxu0 %v405
  %v912 = vpop.f32.mrb[0].mxu0
  %v913 = vadd.f32 %v209, %v912
  %v914 = vpop.f32.mrb[0].mxu0
  %v915 = vpop.f32.mrb[0].mxu0
  %v916 = vadd.f32 %v209, %v915
  %v917 = vpop.f32.mrb[0].mxu0
  %918 = vmatprep.mubr.bf16.mxu0 0
  %919 = vmatmul.mubr.bf16.gmra.mrb[0].mxu0 %v408
  %v920 = vpop.f32.mrb[0].mxu0
  %v921 = vadd.f32 %v209, %v920
  %v922 = vpop.f32.mrb[0].mxu0
  %v923 = vpop.f32.mrb[0].mxu0
  %v924 = vadd.f32 %v209, %v923
  %v925 = vpop.f32.mrb[0].mxu0
  %926 = vmatprep.mubr.bf16.mxu0 0
  %927 = vmatmul.mubr.bf16.gmra.mrb[0].mxu0 %v411
  %v928 = vpop.f32.mrb[0].mxu0
  %v929 = vadd.f32 %v209, %v928
  %v930 = vpop.f32.mrb[0].mxu0
  %v931 = vpop.f32.mrb[0].mxu0
  %v932 = vadd.f32 %v209, %v931
  %v933 = vpop.f32.mrb[0].mxu0
  %934 = vmatprep.mubr.bf16.mxu0 0
  %935 = vmatmul.mubr.bf16.gmra.mrb[0].mxu0 %v414
  %v936 = vpop.f32.mrb[0].mxu0
  %v937 = vadd.f32 %v209, %v936
  %v938 = vpop.f32.mrb[0].mxu0
  %v939 = vpop.f32.mrb[0].mxu0
  %v940 = vpop.f32.mrb[0].mxu0
  %941 = vdwg.mxu0
  %v942 = vmax.f32 %v457, 0.0
  %v943 = vmax.f32 %v460, 0.0
  %v944 = vmax.f32 %v465, 0.0
  %v945 = vmax.f32 %v468, 0.0
  %v946 = vmax.f32 %v473, 0.0
  %v947 = vmax.f32 %v476, 0.0
  %v948 = vmax.f32 %v481, 0.0
  %v949 = vmax.f32 %v484, 0.0
  %v950 = vmax.f32 %v489, 0.0
  %v951 = vmax.f32 %v492, 0.0
  %v952 = vmax.f32 %v497, 0.0
  %v953 = vmax.f32 %v500, 0.0
  %v954 = vmax.f32 %v505, 0.0
  %v955 = vmax.f32 %v508, 0.0
  %v956 = vmax.f32 %v513, 0.0
  %v957 = vmax.f32 %v516, 0.0
  %v958 = vmax.f32 %v521, 0.0
  %v959 = vmax.f32 %v524, 0.0
  %v960 = vmax.f32 %v529, 0.0
  %v961 = vmax.f32 %v532, 0.0
  %v962 = vmax.f32 %v537, 0.0
  %v963 = vmax.f32 %v540, 0.0
  %v964 = vmax.f32 %v545, 0.0
  %v965 = vmax.f32 %v548, 0.0
  %v966 = vmax.f32 %v553, 0.0
  %v967 = vmax.f32 %v556, 0.0
  %v968 = vmax.f32 %v561, 0.0
  %v969 = vmax.f32 %v564, 0.0
  %v970 = vmax.f32 %v569, 0.0
  %v971 = vmax.f32 %v572, 0.0
  %v972 = vmax.f32 %v577, 0.0
  %v973 = vmax.f32 %v580, 0.0
  %v974 = vmax.f32 %v585, 0.0
  %v975 = vmax.f32 %v588, 0.0
  %v976 = vmax.f32 %v593, 0.0
  %v977 = vmax.f32 %v596, 0.0
  %v978 = vmax.f32 %v601, 0.0
  %v979 = vmax.f32 %v604, 0.0
  %v980 = vmax.f32 %v609, 0.0
  %v981 = vmax.f32 %v612, 0.0
  %v982 = vmax.f32 %v617, 0.0
  %v983 = vmax.f32 %v620, 0.0
  %v984 = vmax.f32 %v625, 0.0
  %v985 = vmax.f32 %v628, 0.0
  %v986 = vmax.f32 %v633, 0.0
  %v987 = vmax.f32 %v636, 0.0
  %v988 = vmax.f32 %v641, 0.0
  %v989 = vmax.f32 %v644, 0.0
  %v990 = vmax.f32 %v649, 0.0
  %v991 = vmax.f32 %v652, 0.0
  %v992 = vmax.f32 %v657, 0.0
  %v993 = vmax.f32 %v660, 0.0
  %v994 = vmax.f32 %v665, 0.0
  %v995 = vmax.f32 %v668, 0.0
  %v996 = vmax.f32 %v673, 0.0
  %v997 = vmax.f32 %v676, 0.0
  %v998 = vmax.f32 %v681, 0.0
  %v999 = vmax.f32 %v684, 0.0
  %v1000 = vmax.f32 %v689, 0.0
  %v1001 = vmax.f32 %v692, 0.0
  %v1002 = vmax.f32 %v697, 0.0
  %v1003 = vmax.f32 %v700, 0.0
  %v1004 = vmax.f32 %v705, 0.0
  %v1005 = vmax.f32 %v708, 0.0
  %v1006 = vmax.f32 %v713, 0.0
  %v1007 = vmax.f32 %v716, 0.0
  %v1008 = vmax.f32 %v721, 0.0
  %v1009 = vmax.f32 %v724, 0.0
  %v1010 = vmax.f32 %v729, 0.0
  %v1011 = vmax.f32 %v732, 0.0
  %v1012 = vmax.f32 %v737, 0.0
  %v1013 = vmax.f32 %v740, 0.0
  %v1014 = vmax.f32 %v745, 0.0
  %v1015 = vmax.f32 %v748, 0.0
  %v1016 = vmax.f32 %v753, 0.0
  %v1017 = vmax.f32 %v756, 0.0
  %v1018 = vmax.f32 %v761, 0.0
  %v1019 = vmax.f32 %v764, 0.0
  %v1020 = vmax.f32 %v769, 0.0
  %v1021 = vmax.f32 %v772, 0.0
  %v1022 = vmax.f32 %v777, 0.0
  %v1023 = vmax.f32 %v780, 0.0
  %v1024 = vmax.f32 %v785, 0.0
  %v1025 = vmax.f32 %v788, 0.0
  %v1026 = vmax.f32 %v793, 0.0
  %v1027 = vmax.f32 %v796, 0.0
  %v1028 = vmax.f32 %v801, 0.0
  %v1029 = vmax.f32 %v804, 0.0
  %v1030 = vmax.f32 %v809, 0.0
  %v1031 = vmax.f32 %v812, 0.0
  %v1032 = vmax.f32 %v817, 0.0
  %v1033 = vmax.f32 %v820, 0.0
  %v1034 = vmax.f32 %v825, 0.0
  %v1035 = vmax.f32 %v828, 0.0
  %v1036 = vmax.f32 %v833, 0.0
  %v1037 = vmax.f32 %v836, 0.0
  %v1038 = vmax.f32 %v841, 0.0
  %v1039 = vmax.f32 %v844, 0.0
  %v1040 = vmax.f32 %v849, 0.0
  %v1041 = vmax.f32 %v852, 0.0
  %v1042 = vmax.f32 %v857, 0.0
  %v1043 = vmax.f32 %v860, 0.0
  %v1044 = vmax.f32 %v865, 0.0
  %v1045 = vmax.f32 %v868, 0.0
  %v1046 = vmax.f32 %v873, 0.0
  %v1047 = vmax.f32 %v876, 0.0
  %v1048 = vmax.f32 %v881, 0.0
  %v1049 = vmax.f32 %v884, 0.0
  %v1050 = vmax.f32 %v889, 0.0
  %v1051 = vmax.f32 %v892, 0.0
  %v1052 = vmax.f32 %v897, 0.0
  %v1053 = vmax.f32 %v900, 0.0
  %v1054 = vmax.f32 %v905, 0.0
  %v1055 = vmax.f32 %v908, 0.0
  %v1056 = vmax.f32 %v913, 0.0
  %v1057 = vmax.f32 %v916, 0.0
  %v1058 = vmax.f32 %v921, 0.0
  %v1059 = vmax.f32 %v924, 0.0
  %v1060 = vmax.f32 %v929, 0.0
  %v1061 = vmax.f32 %v932, 0.0
  %v1062 = vmax.f32 %v937, 0.0
  %1063 = vst [vmem:[%s3] sm:$0xff] %v942
  %1064 = vst [vmem:[%s3 + $0x8] sm:$0xff] %v943
  %1065 = vst [vmem:[%s3 + $0x10] sm:$0xff] %v944
  %1066 = vst [vmem:[%s3 + $0x18] sm:$0xff] %v945
  %1067 = vst [vmem:[%s3 + $0x20] sm:$0xff] %v946
  %1068 = vst [vmem:[%s3 + $0x28] sm:$0xff] %v947
  %1069 = vst [vmem:[%s3 + $0x30] sm:$0xff] %v948
  %1070 = vst [vmem:[%s3 + $0x38] sm:$0xff] %v949
  %1071 = vst [vmem:[%s3 + $0x40] sm:$0xff] %v950
  %1072 = vst [vmem:[%s3 + $0x48] sm:$0xff] %v951
  %1073 = vst [vmem:[%s3 + $0x50] sm:$0xff] %v952
  %1074 = vst [vmem:[%s3 + $0x58] sm:$0xff] %v953
  %1075 = vst [vmem:[%s3 + $0x60] sm:$0xff] %v954
  %1076 = vst [vmem:[%s3 + $0x68] sm:$0xff] %v955
  %1077 = vst [vmem:[%s3 + $0x70] sm:$0xff] %v956
  %1078 = vst [vmem:[%s3 + $0x78] sm:$0xff] %v957
  %1079 = vst [vmem:[%s3 + $0x80] sm:$0xff] %v958
  %1080 = vst [vmem:[%s3 + $0x88] sm:$0xff] %v959
  %1081 = vst [vmem:[%s3 + $0x90] sm:$0xff] %v960
  %1082 = vst [vmem:[%s3 + $0x98] sm:$0xff] %v961
  %1083 = vst [vmem:[%s3 + $0xa0] sm:$0xff] %v962
  %1084 = vst [vmem:[%s3 + $0xa8] sm:$0xff] %v963
  %1085 = vst [vmem:[%s3 + $0xb0] sm:$0xff] %v964
  %1086 = vst [vmem:[%s3 + $0xb8] sm:$0xff] %v965
  %1087 = vst [vmem:[%s3 + $0xc0] sm:$0xff] %v966
  %1088 = vst [vmem:[%s3 + $0xc8] sm:$0xff] %v967
  %1089 = vst [vmem:[%s3 + $0xd0] sm:$0xff] %v968
  %1090 = vst [vmem:[%s3 + $0xd8] sm:$0xff] %v969
  %1091 = vst [vmem:[%s3 + $0xe0] sm:$0xff] %v970
  %1092 = vst [vmem:[%s3 + $0xe8] sm:$0xff] %v971
  %1093 = vst [vmem:[%s3 + $0xf0] sm:$0xff] %v972
  %1094 = vst [vmem:[%s3 + $0xf8] sm:$0xff] %v973
  %1095 = vst [vmem:[%s3 + $0x100] sm:$0xff] %v974
  %1096 = vst [vmem:[%s3 + $0x108] sm:$0xff] %v975
  %1097 = vst [vmem:[%s3 + $0x110] sm:$0xff] %v976
  %1098 = vst [vmem:[%s3 + $0x118] sm:$0xff] %v977
  %1099 = vst [vmem:[%s3 + $0x120] sm:$0xff] %v978
  %1100 = vst [vmem:[%s3 + $0x128] sm:$0xff] %v979
  %1101 = vst [vmem:[%s3 + $0x130] sm:$0xff] %v980
  %1102 = vst [vmem:[%s3 + $0x138] sm:$0xff] %v981
  %1103 = vst [vmem:[%s3 + $0x140] sm:$0xff] %v982
  %1104 = vst [vmem:[%s3 + $0x148] sm:$0xff] %v983
  %1105 = vst [vmem:[%s3 + $0x150] sm:$0xff] %v984
  %1106 = vst [vmem:[%s3 + $0x158] sm:$0xff] %v985
  %1107 = vst [vmem:[%s3 + $0x160] sm:$0xff] %v986
  %1108 = vst [vmem:[%s3 + $0x168] sm:$0xff] %v987
  %1109 = vst [vmem:[%s3 + $0x170] sm:$0xff] %v988
  %1110 = vst [vmem:[%s3 + $0x178] sm:$0xff] %v989
  %1111 = vst [vmem:[%s3 + $0x180] sm:$0xff] %v990
  %1112 = vst [vmem:[%s3 + $0x188] sm:$0xff] %v991
  %1113 = vst [vmem:[%s3 + $0x190] sm:$0xff] %v992
  %1114 = vst [vmem:[%s3 + $0x198] sm:$0xff] %v993
  %1115 = vst [vmem:[%s3 + $0x1a0] sm:$0xff] %v994
  %1116 = vst [vmem:[%s3 + $0x1a8] sm:$0xff] %v995
  %1117 = vst [vmem:[%s3 + $0x1b0] sm:$0xff] %v996
  %1118 = vst [vmem:[%s3 + $0x1b8] sm:$0xff] %v997
  %1119 = vst [vmem:[%s3 + $0x1c0] sm:$0xff] %v998
  %1120 = vst [vmem:[%s3 + $0x1c8] sm:$0xff] %v999
  %1121 = vst [vmem:[%s3 + $0x1d0] sm:$0xff] %v1000
  %1122 = vst [vmem:[%s3 + $0x1d8] sm:$0xff] %v1001
  %1123 = vst [vmem:[%s3 + $0x1e0] sm:$0xff] %v1002
  %1124 = vst [vmem:[%s3 + $0x1e8] sm:$0xff] %v1003
  %1125 = vst [vmem:[%s3 + $0x1f0] sm:$0xff] %v1004
  %1126 = vst [vmem:[%s3 + $0x1f8] sm:$0xff] %v1005
  %1127 = vst [vmem:[%s3 + $0x200] sm:$0xff] %v1006
  %1128 = vst [vmem:[%s3 + $0x208] sm:$0xff] %v1007
  %1129 = vst [vmem:[%s3 + $0x210] sm:$0xff] %v1008
  %1130 = vst [vmem:[%s3 + $0x218] sm:$0xff] %v1009
  %1131 = vst [vmem:[%s3 + $0x220] sm:$0xff] %v1010
  %1132 = vst [vmem:[%s3 + $0x228] sm:$0xff] %v1011
  %1133 = vst [vmem:[%s3 + $0x230] sm:$0xff] %v1012
  %1134 = vst [vmem:[%s3 + $0x238] sm:$0xff] %v1013
  %1135 = vst [vmem:[%s3 + $0x240] sm:$0xff] %v1014
  %1136 = vst [vmem:[%s3 + $0x248] sm:$0xff] %v1015
  %1137 = vst [vmem:[%s3 + $0x250] sm:$0xff] %v1016
  %1138 = vst [vmem:[%s3 + $0x258] sm:$0xff] %v1017
  %1139 = vst [vmem:[%s3 + $0x260] sm:$0xff] %v1018
  %1140 = vst [vmem:[%s3 + $0x268] sm:$0xff] %v1019
  %1141 = vst [vmem:[%s3 + $0x270] sm:$0xff] %v1020
  %1142 = vst [vmem:[%s3 + $0x278] sm:$0xff] %v1021
  %1143 = vst [vmem:[%s3 + $0x280] sm:$0xff] %v1022
  %1144 = vst [vmem:[%s3 + $0x288] sm:$0xff] %v1023
  %1145 = vst [vmem:[%s3 + $0x290] sm:$0xff] %v1024
  %1146 = vst [vmem:[%s3 + $0x298] sm:$0xff] %v1025
  %1147 = vst [vmem:[%s3 + $0x2a0] sm:$0xff] %v1026
  %1148 = vst [vmem:[%s3 + $0x2a8] sm:$0xff] %v1027
  %1149 = vst [vmem:[%s3 + $0x2b0] sm:$0xff] %v1028
  %1150 = vst [vmem:[%s3 + $0x2b8] sm:$0xff] %v1029
  %1151 = vst [vmem:[%s3 + $0x2c0] sm:$0xff] %v1030
  %1152 = vst [vmem:[%s3 + $0x2c8] sm:$0xff] %v1031
  %1153 = vst [vmem:[%s3 + $0x2d0] sm:$0xff] %v1032
  %1154 = vst [vmem:[%s3 + $0x2d8] sm:$0xff] %v1033
  %1155 = vst [vmem:[%s3 + $0x2e0] sm:$0xff] %v1034
  %1156 = vst [vmem:[%s3 + $0x2e8] sm:$0xff] %v1035
  %1157 = vst [vmem:[%s3 + $0x2f0] sm:$0xff] %v1036
  %1158 = vst [vmem:[%s3 + $0x2f8] sm:$0xff] %v1037
  %1159 = vst [vmem:[%s3 + $0x300] sm:$0xff] %v1038
  %1160 = vst [vmem:[%s3 + $0x308] sm:$0xff] %v1039
  %1161 = vst [vmem:[%s3 + $0x310] sm:$0xff] %v1040
  %1162 = vst [vmem:[%s3 + $0x318] sm:$0xff] %v1041
  %1163 = vst [vmem:[%s3 + $0x320] sm:$0xff] %v1042
  %1164 = vst [vmem:[%s3 + $0x328] sm:$0xff] %v1043
  %1165 = vst [vmem:[%s3 + $0x330] sm:$0xff] %v1044
  %1166 = vst [vmem:[%s3 + $0x338] sm:$0xff] %v1045
  %1167 = vst [vmem:[%s3 + $0x340] sm:$0xff] %v1046
  %1168 = vst [vmem:[%s3 + $0x348] sm:$0xff] %v1047
  %1169 = vst [vmem:[%s3 + $0x350] sm:$0xff] %v1048
  %1170 = vst [vmem:[%s3 + $0x358] sm:$0xff] %v1049
  %1171 = vst [vmem:[%s3 + $0x360] sm:$0xff] %v1050
  %1172 = vst [vmem:[%s3 + $0x368] sm:$0xff] %v1051
  %1173 = vst [vmem:[%s3 + $0x370] sm:$0xff] %v1052
  %1174 = vst [vmem:[%s3 + $0x378] sm:$0xff] %v1053
  %1175 = vst [vmem:[%s3 + $0x380] sm:$0xff] %v1054
  %1176 = vst [vmem:[%s3 + $0x388] sm:$0xff] %v1055
  %1177 = vst [vmem:[%s3 + $0x390] sm:$0xff] %v1056
  %1178 = vst [vmem:[%s3 + $0x398] sm:$0xff] %v1057
  %1179 = vst [vmem:[%s3 + $0x3a0] sm:$0xff] %v1058
  %1180 = vst [vmem:[%s3 + $0x3a8] sm:$0xff] %v1059
  %1181 = vst [vmem:[%s3 + $0x3b0] sm:$0xff] %v1060
  %1182 = vst [vmem:[%s3 + $0x3b8] sm:$0xff] %v1061
  %1183 = vst [vmem:[%s3 + $0x3c0] sm:$0xff] %v1062
  // Predicated region
  $region14: #{net_forward.8} parent=0 // pred_check
    _
  $region15: #{net_forward.8} parent=0 // pred_check_branch
    %1185 = sbr.rel (0) target = $region17
  $region16: #{net_forward.8} parent=0 // pred_region
    _
  $region17: #{net_forward.8} parent=0 // pred_fallthru
    _
  // Predicated region
  $region18: #{net_forward.8} parent=0 // pred_check
    _
  $region19: #{net_forward.8} parent=0 // pred_check_branch
    %1187 = sbr.rel (0) target = $region21
  $region20: #{net_forward.8} parent=0 // pred_region
    _
  $region21: #{net_forward.8} parent=0 // pred_fallthru
    _

// kernel: net_forward.9
$region0: #{net_forward.9}
  #allocation0 [shape = 'u32[]', space=smem, size = 0x4, offset = 0x4, fixed_abs, tag = 'smem constant byte address 0x4 - core index']
  #allocation1 [shape = 'u32[144,128]{1,0:T(1,128)}', space=vmem, size = 0x12000, scoped, tag = 'internal scratch']
  %s0 = inlined_call_operand.vmem [shape: f32[98,200], index: 0, kind: input, shape index: {}]
  %s1 = inlined_call_operand.vmem [shape: bf16[200,128], index: 1, kind: input, shape index: {}]
  %s2 = inlined_call_operand.vmem [shape: f32[1,128], index: 2, kind: input, shape index: {}]
  %s3 = inlined_call_operand.vmem [shape: f32[98,128], index: 3, kind: output, shape index: {}]
  %s4 = sld [smem:[#allocation0]]
  $region22: #{net_forward.9} parent=0
    _
  %s6 = ssub.s32 1, %s4
  %s7 = scalar_select 0, %s6, %s4
  // Predicated region
  $region2: #{net_forward.9} parent=0 // pred_check
    _
  $region3: #{net_forward.9} parent=0 // pred_check_branch
    %9 = sbr.rel (0) target = $region5
  $region4: #{net_forward.9} parent=0 // pred_region
    _
  $region5: #{net_forward.9} parent=0 // pred_fallthru
    _
  // Predicated region
  $region6: #{net_forward.9} parent=0 // pred_check
    _
  $region7: #{net_forward.9} parent=0 // pred_check_branch
    %11 = sbr.rel (0) target = $region9
  $region8: #{net_forward.9} parent=0 // pred_region
    _
  $region9: #{net_forward.9} parent=0 // pred_fallthru
    _
  // Predicated region
  $region10: #{net_forward.9} parent=0 // pred_check
    _
  $region11: #{net_forward.9} parent=0 // pred_check_branch
    %13 = sbr.rel (0) target = $region13
  $region12: #{net_forward.9} parent=0 // pred_region
    _
  $region13: #{net_forward.9} parent=0 // pred_fallthru
    _
  %v15 = vld [vmem:[%s0] sm:$0xff]
  %v16 = vld [vmem:[%s0 + $0x8] sm:$0xff]
  %v17 = vld [vmem:[%s0 + $0x10] sm:$0xff]
  %v18 = vld [vmem:[%s0 + $0x18] sm:$0xff]
  %v19 = vld [vmem:[%s0 + $0x20] sm:$0xff]
  %v20 = vld [vmem:[%s0 + $0x28] sm:$0xff]
  %v21 = vld [vmem:[%s0 + $0x30] sm:$0xff]
  %v22 = vld [vmem:[%s0 + $0x38] sm:$0xff]
  %v23 = vld [vmem:[%s0 + $0x40] sm:$0xff]
  %v24 = vld [vmem:[%s0 + $0x48] sm:$0xff]
  %v25 = vld [vmem:[%s0 + $0x50] sm:$0xff]
  %v26 = vld [vmem:[%s0 + $0x58] sm:$0xff]
  %v27 = vld [vmem:[%s0 + $0x60] sm:$0xff]
  %v28 = vld [vmem:[%s0 + $0x68] sm:$0xff]
  %v29 = vld [vmem:[%s0 + $0x70] sm:$0xff]
  %v30 = vld [vmem:[%s0 + $0x78] sm:$0xff]
  %v31 = vld [vmem:[%s0 + $0x80] sm:$0xff]
  %v32 = vld [vmem:[%s0 + $0x88] sm:$0xff]
  %v33 = vld [vmem:[%s0 + $0x90] sm:$0xff]
  %v34 = vld [vmem:[%s0 + $0x98] sm:$0xff]
  %v35 = vld [vmem:[%s0 + $0xa0] sm:$0xff]
  %v36 = vld [vmem:[%s0 + $0xa8] sm:$0xff]
  %v37 = vld [vmem:[%s0 + $0xb0] sm:$0xff]
  %v38 = vld [vmem:[%s0 + $0xb8] sm:$0xff]
  %v39 = vld [vmem:[%s0 + $0xc0] sm:$0x3]
  %v40 = vld [vmem:[%s0 + $0xc8] sm:$0x3]
  %v41 = vpack.c.bf16 %v17, %v15
  %v42 = vpack.c.bf16 %v18, %v16
  %v43 = vpack.c.bf16 %v21, %v19
  %v44 = vpack.c.bf16 %v22, %v20
  %v45 = vpack.c.bf16 %v25, %v23
  %v46 = vpack.c.bf16 %v26, %v24
  %v47 = vpack.c.bf16 %v29, %v27
  %v48 = vpack.c.bf16 %v30, %v28
  %v49 = vpack.c.bf16 %v33, %v31
  %v50 = vpack.c.bf16 %v34, %v32
  %v51 = vpack.c.bf16 %v37, %v35
  %v52 = vpack.c.bf16 %v38, %v36
  %v53 = vpack.c.bf16 %v39, %v39
  %v54 = vpack.c.bf16 %v40, %v40
  %v55 = vld [vmem:[%s1] sm:$0xf]
  %v56 = vld [vmem:[%s1 + $0x4] sm:$0xf]
  %v57 = vld [vmem:[%s1 + $0x8] sm:$0xf]
  %v58 = vld [vmem:[%s1 + $0xc] sm:$0xf]
  %v59 = vld [vmem:[%s1 + $0x10] sm:$0xf]
  %v60 = vld [vmem:[%s1 + $0x14] sm:$0xf]
  %v61 = vld [vmem:[%s1 + $0x18] sm:$0xf]
  %v62 = vld [vmem:[%s1 + $0x1c] sm:$0xf]
  %v63 = vld [vmem:[%s1 + $0x20] sm:$0xf]
  %v64 = vld [vmem:[%s1 + $0x24] sm:$0xf]
  %v65 = vld [vmem:[%s1 + $0x28] sm:$0xf]
  %v66 = vld [vmem:[%s1 + $0x2c] sm:$0xf]
  %v67 = vld [vmem:[%s1 + $0x30] sm:$0xf]
  %v68 = vld [vmem:[%s1 + $0x34] sm:$0xf]
  %v69 = vld [vmem:[%s1 + $0x38] sm:$0xf]
  %v70 = vld [vmem:[%s1 + $0x3c] sm:$0xf]
  %v71 = vld [vmem:[%s1 + $0x40] sm:$0xf]
  %v72 = vld [vmem:[%s1 + $0x44] sm:$0xf]
  %v73 = vld [vmem:[%s1 + $0x48] sm:$0xf]
  %v74 = vld [vmem:[%s1 + $0x4c] sm:$0xf]
  %v75 = vld [vmem:[%s1 + $0x50] sm:$0xf]
  %v76 = vld [vmem:[%s1 + $0x54] sm:$0xf]
  %v77 = vld [vmem:[%s1 + $0x58] sm:$0xf]
  %v78 = vld [vmem:[%s1 + $0x5c] sm:$0xf]
  %v79 = vld [vmem:[%s1 + $0x60] sm:$0xf]
  %v80 = vld [vmem:[%s2] sm:$0x1]
  %v82 = vlaneseq
  %v83 = vshrl.u32 %v82, 7
  %v84 = vsub.s32 0, %v83
  %v85 = vrot.slane %v80, %v84
  %v112 = vunpack.c.l.b16 %v55
  %v113 = vunpack.c.l.b16 %v56
  %v114 = vunpack.c.l.b16 %v57
  %v115 = vunpack.c.l.b16 %v58
  %v116 = vunpack.c.l.b16 %v59
  %v117 = vunpack.c.l.b16 %v60
  %v118 = vunpack.c.l.b16 %v61
  %v119 = vunpack.c.l.b16 %v62
  %v120 = vunpack.c.l.b16 %v63
  %v121 = vunpack.c.l.b16 %v64
  %v122 = vunpack.c.l.b16 %v65
  %v123 = vunpack.c.l.b16 %v66
  %v124 = vunpack.c.l.b16 %v67
  %v125 = vunpack.c.l.b16 %v68
  %v126 = vunpack.c.l.b16 %v69
  %v127 = vunpack.c.l.b16 %v70
  %v128 = vunpack.c.l.b16 %v71
  %v129 = vunpack.c.l.b16 %v72
  %v130 = vunpack.c.l.b16 %v73
  %v131 = vunpack.c.l.b16 %v74
  %v132 = vunpack.c.l.b16 %v75
  %v133 = vunpack.c.l.b16 %v76
  %v134 = vunpack.c.l.b16 %v77
  %v135 = vunpack.c.l.b16 %v78
  %v136 = vunpack.c.l.b16 %v79
  %v137 = vpack.c.b16 %v113, %v112
  %v138 = vpack.c.b16 %v115, %v114
  %v139 = vpack.c.b16 %v117, %v116
  %v140 = vpack.c.b16 %v119, %v118
  %v141 = vpack.c.b16 %v121, %v120
  %v142 = vpack.c.b16 %v123, %v122
  %v143 = vpack.c.b16 %v125, %v124
  %v144 = vpack.c.b16 %v127, %v126
  %v145 = vpack.c.b16 %v129, %v128
  %v146 = vpack.c.b16 %v131, %v130
  %v147 = vpack.c.b16 %v133, %v132
  %v148 = vpack.c.b16 %v135, %v134
  %v149 = vpack.c.b16 %v136, %v136
  %vm162 = vcmask 588800
  %v164 = vsel %vm162, %v42, 0
  %v167 = vsel %vm162, %v44, 0
  %v170 = vsel %vm162, %v46, 0
  %v173 = vsel %vm162, %v48, 0
  %v176 = vsel %vm162, %v50, 0
  %v179 = vsel %vm162, %v52, 0
  %v182 = vsel %vm162, %v54, 0
  %vm184 = vcmask 1043456
  %v186 = vsel %vm184, %v149, 0
  %188 = vmatprep.subr.bf16.mxu0 0
  %189 = vmatpush1.bf16.msra.mxu0 %v137
  %190 = vmatprep.subr.bf16.mxu0 0
  %191 = vmatpush1.bf16.msra.mxu0 %v138
  %192 = vmatprep.subr.bf16.mxu0 0
  %193 = vmatpush1.bf16.msra.mxu0 %v139
  %194 = vmatprep.subr.bf16.mxu0 0
  %195 = vmatpush1.bf16.msra.mxu0 %v140
  %196 = vmatprep.subr.bf16.mxu0 0
  %197 = vmatpush1.bf16.msra.mxu0 %v141
  %198 = vmatprep.subr.bf16.mxu0 0
  %199 = vmatpush1.bf16.msra.mxu0 %v142
  %200 = vmatprep.subr.bf16.mxu0 0
  %201 = vmatpush1.bf16.msra.mxu0 %v143
  %202 = vmatprep.subr.bf16.mxu0 0
  %203 = vmatpush1.bf16.msra.mxu0 %v144
  %204 = vmatprep.subr.bf16.mxu0 0
  %205 = vmatpush1.bf16.msra.mxu0 %v145
  %206 = vmatprep.subr.bf16.mxu0 0
  %207 = vmatpush1.bf16.msra.mxu0 %v146
  %208 = vmatprep.subr.bf16.mxu0 0
  %209 = vmatpush1.bf16.msra.mxu0 %v147
  %210 = vmatprep.subr.bf16.mxu0 0
  %211 = vmatpush1.bf16.msra.mxu0 %v148
  %212 = vmatprep.subr.bf16.mxu0 0
  %213 = vmatpush1.bf16.msra.mxu0 %v186
  %214 = vmatprep.subr.bf16.mxu0 0
  %215 = vmatpush1.bf16.msra.mxu0 0
  %216 = vmatprep.subr.bf16.mxu0 0
  %217 = vmatpush1.bf16.msra.mxu0 0
  %218 = vmatprep.subr.bf16.mxu0 0
  %219 = vmatpush1.bf16.msra.mxu0 0
  %220 = vmatprep.mubr.bf16.mxu0 %v164
  %221 = vmatmul.mubr.bf16.gmra.mrb[0].mxu0 %v41
  %v222 = vpop.f32.mrb[0].mxu0
  %v223 = vadd.f32 %v85, %v222
  %v224 = vpop.f32.mrb[0].mxu0
  %v225 = vpop.f32.mrb[0].mxu0
  %v226 = vadd.f32 %v85, %v225
  %v227 = vpop.f32.mrb[0].mxu0
  %228 = vmatprep.mubr.bf16.mxu0 %v167
  %229 = vmatmul.mubr.bf16.gmra.mrb[0].mxu0 %v43
  %v230 = vpop.f32.mrb[0].mxu0
  %v231 = vadd.f32 %v85, %v230
  %v232 = vpop.f32.mrb[0].mxu0
  %v233 = vpop.f32.mrb[0].mxu0
  %v234 = vadd.f32 %v85, %v233
  %v235 = vpop.f32.mrb[0].mxu0
  %236 = vmatprep.mubr.bf16.mxu0 %v170
  %237 = vmatmul.mubr.bf16.gmra.mrb[0].mxu0 %v45
  %v238 = vpop.f32.mrb[0].mxu0
  %v239 = vadd.f32 %v85, %v238
  %v240 = vpop.f32.mrb[0].mxu0
  %v241 = vpop.f32.mrb[0].mxu0
  %v242 = vadd.f32 %v85, %v241
  %v243 = vpop.f32.mrb[0].mxu0
  %244 = vmatprep.mubr.bf16.mxu0 %v173
  %245 = vmatmul.mubr.bf16.gmra.mrb[0].mxu0 %v47
  %v246 = vpop.f32.mrb[0].mxu0
  %v247 = vadd.f32 %v85, %v246
  %v248 = vpop.f32.mrb[0].mxu0
  %v249 = vpop.f32.mrb[0].mxu0
  %v250 = vadd.f32 %v85, %v249
  %v251 = vpop.f32.mrb[0].mxu0
  %252 = vmatprep.mubr.bf16.mxu0 %v176
  %253 = vmatmul.mubr.bf16.gmra.mrb[0].mxu0 %v49
  %v254 = vpop.f32.mrb[0].mxu0
  %v255 = vadd.f32 %v85, %v254
  %v256 = vpop.f32.mrb[0].mxu0
  %v257 = vpop.f32.mrb[0].mxu0
  %v258 = vadd.f32 %v85, %v257
  %v259 = vpop.f32.mrb[0].mxu0
  %260 = vmatprep.mubr.bf16.mxu0 %v179
  %261 = vmatmul.mubr.bf16.gmra.mrb[0].mxu0 %v51
  %v262 = vpop.f32.mrb[0].mxu0
  %v263 = vadd.f32 %v85, %v262
  %v264 = vpop.f32.mrb[0].mxu0
  %v265 = vpop.f32.mrb[0].mxu0
  %v266 = vadd.f32 %v85, %v265
  %v267 = vpop.f32.mrb[0].mxu0
  %268 = vmatprep.mubr.bf16.mxu0 %v182
  %269 = vmatmul.mubr.bf16.gmra.mrb[0].mxu0 %v53
  %v270 = vpop.f32.mrb[0].mxu0
  %v271 = vadd.f32 %v85, %v270
  %v272 = vpop.f32.mrb[0].mxu0
  %v273 = vpop.f32.mrb[0].mxu0
  %v274 = vpop.f32.mrb[0].mxu0
  %275 = vdwg.mxu0
  %v276 = vmax.f32 %v223, 0.0
  %v277 = vmax.f32 %v226, 0.0
  %v278 = vmax.f32 %v231, 0.0
  %v279 = vmax.f32 %v234, 0.0
  %v280 = vmax.f32 %v239, 0.0
  %v281 = vmax.f32 %v242, 0.0
  %v282 = vmax.f32 %v247, 0.0
  %v283 = vmax.f32 %v250, 0.0
  %v284 = vmax.f32 %v255, 0.0
  %v285 = vmax.f32 %v258, 0.0
  %v286 = vmax.f32 %v263, 0.0
  %v287 = vmax.f32 %v266, 0.0
  %v288 = vmax.f32 %v271, 0.0
  %289 = vst [vmem:[%s3] sm:$0xff] %v276
  %290 = vst [vmem:[%s3 + $0x8] sm:$0xff] %v277
  %291 = vst [vmem:[%s3 + $0x10] sm:$0xff] %v278
  %292 = vst [vmem:[%s3 + $0x18] sm:$0xff] %v279
  %293 = vst [vmem:[%s3 + $0x20] sm:$0xff] %v280
  %294 = vst [vmem:[%s3 + $0x28] sm:$0xff] %v281
  %295 = vst [vmem:[%s3 + $0x30] sm:$0xff] %v282
  %296 = vst [vmem:[%s3 + $0x38] sm:$0xff] %v283
  %297 = vst [vmem:[%s3 + $0x40] sm:$0xff] %v284
  %298 = vst [vmem:[%s3 + $0x48] sm:$0xff] %v285
  %299 = vst [vmem:[%s3 + $0x50] sm:$0xff] %v286
  %300 = vst [vmem:[%s3 + $0x58] sm:$0xff] %v287
  %301 = vst [vmem:[%s3 + $0x60] sm:$0x3] %v288
  // Predicated region
  $region14: #{net_forward.9} parent=0 // pred_check
    _
  $region15: #{net_forward.9} parent=0 // pred_check_branch
    %303 = sbr.rel (0) target = $region17
  $region16: #{net_forward.9} parent=0 // pred_region
    _
  $region17: #{net_forward.9} parent=0 // pred_fallthru
    _
  // Predicated region
  $region18: #{net_forward.9} parent=0 // pred_check
    _
  $region19: #{net_forward.9} parent=0 // pred_check_branch
    %305 = sbr.rel (0) target = $region21
  $region20: #{net_forward.9} parent=0 // pred_region
    _
  $region21: #{net_forward.9} parent=0 // pred_fallthru
    _

// kernel: net_forward.10
$region0: #{net_forward.10}
  #allocation0 [shape = 'u32[]', space=smem, size = 0x4, offset = 0x4, fixed_abs, tag = 'smem constant byte address 0x4 - core index']
  #allocation1 [shape = 'u32[144,128]{1,0:T(1,128)}', space=vmem, size = 0x12000, scoped, tag = 'internal scratch']
  %s0 = inlined_call_operand.vmem [shape: f32[2,90], index: 0, kind: input, shape index: {}]
  %s1 = inlined_call_operand.vmem [shape: bf16[90,128], index: 1, kind: input, shape index: {}]
  %s2 = inlined_call_operand.vmem [shape: f32[1,128], index: 2, kind: input, shape index: {}]
  %s3 = inlined_call_operand.vmem [shape: f32[2,128], index: 3, kind: output, shape index: {}]
  %s4 = sld [smem:[#allocation0]]
  $region22: #{net_forward.10} parent=0
    _
  %s6 = ssub.s32 1, %s4
  %s7 = scalar_select 0, %s6, %s4
  // Predicated region
  $region2: #{net_forward.10} parent=0 // pred_check
    _
  $region3: #{net_forward.10} parent=0 // pred_check_branch
    %9 = sbr.rel (0) target = $region5
  $region4: #{net_forward.10} parent=0 // pred_region
    _
  $region5: #{net_forward.10} parent=0 // pred_fallthru
    _
  // Predicated region
  $region6: #{net_forward.10} parent=0 // pred_check
    _
  $region7: #{net_forward.10} parent=0 // pred_check_branch
    %11 = sbr.rel (0) target = $region9
  $region8: #{net_forward.10} parent=0 // pred_region
    _
  $region9: #{net_forward.10} parent=0 // pred_fallthru
    _
  // Predicated region
  $region10: #{net_forward.10} parent=0 // pred_check
    _
  $region11: #{net_forward.10} parent=0 // pred_check_branch
    %13 = sbr.rel (0) target = $region13
  $region12: #{net_forward.10} parent=0 // pred_region
    _
  $region13: #{net_forward.10} parent=0 // pred_fallthru
    _
  %v15 = vld [vmem:[%s0] sm:$0x3]
  %v16 = vpack.c.bf16 %v15, %v15
  %v17 = vld [vmem:[%s1] sm:$0xf]
  %v18 = vld [vmem:[%s1 + $0x4] sm:$0xf]
  %v19 = vld [vmem:[%s1 + $0x8] sm:$0xf]
  %v20 = vld [vmem:[%s1 + $0xc] sm:$0xf]
  %v21 = vld [vmem:[%s1 + $0x10] sm:$0xf]
  %v22 = vld [vmem:[%s1 + $0x14] sm:$0xf]
  %v23 = vld [vmem:[%s1 + $0x18] sm:$0xf]
  %v24 = vld [vmem:[%s1 + $0x1c] sm:$0xf]
  %v25 = vld [vmem:[%s1 + $0x20] sm:$0xf]
  %v26 = vld [vmem:[%s1 + $0x24] sm:$0xf]
  %v27 = vld [vmem:[%s1 + $0x28] sm:$0xf]
  %v28 = vld [vmem:[%s1 + $0x2c] sm:$0x1]
  %v29 = vld [vmem:[%s2] sm:$0x1]
  %v31 = vlaneseq
  %v32 = vshrl.u32 %v31, 7
  %v33 = vsub.s32 0, %v32
  %v34 = vrot.slane %v29, %v33
  %v48 = vunpack.c.l.b16 %v17
  %v49 = vunpack.c.l.b16 %v18
  %v50 = vunpack.c.l.b16 %v19
  %v51 = vunpack.c.l.b16 %v20
  %v52 = vunpack.c.l.b16 %v21
  %v53 = vunpack.c.l.b16 %v22
  %v54 = vunpack.c.l.b16 %v23
  %v55 = vunpack.c.l.b16 %v24
  %v56 = vunpack.c.l.b16 %v25
  %v57 = vunpack.c.l.b16 %v26
  %v58 = vunpack.c.l.b16 %v27
  %v59 = vunpack.c.l.b16 %v28
  %v60 = vpack.c.b16 %v49, %v48
  %v61 = vpack.c.b16 %v51, %v50
  %v62 = vpack.c.b16 %v53, %v52
  %v63 = vpack.c.b16 %v55, %v54
  %v64 = vpack.c.b16 %v57, %v56
  %v65 = vpack.c.b16 %v59, %v58
  %vm71 = vcmask 736256
  %v73 = vsel %vm71, %v16, 0
  %vm75 = vcmask 1044480
  %v77 = vsel %vm75, %v65, 0
  %79 = vmatprep.subr.bf16.mxu0 0
  %80 = vmatpush1.bf16.msra.mxu0 %v60
  %81 = vmatprep.subr.bf16.mxu0 0
  %82 = vmatpush1.bf16.msra.mxu0 %v61
  %83 = vmatprep.subr.bf16.mxu0 0
  %84 = vmatpush1.bf16.msra.mxu0 %v62
  %85 = vmatprep.subr.bf16.mxu0 0
  %86 = vmatpush1.bf16.msra.mxu0 %v63
  %87 = vmatprep.subr.bf16.mxu0 0
  %88 = vmatpush1.bf16.msra.mxu0 %v64
  %89 = vmatprep.subr.bf16.mxu0 0
  %90 = vmatpush1.bf16.msra.mxu0 %v77
  %91 = vmatprep.subr.bf16.mxu0 0
  %92 = vmatpush1.bf16.msra.mxu0 0
  %93 = vmatprep.subr.bf16.mxu0 0
  %94 = vmatpush1.bf16.msra.mxu0 0
  %95 = vmatprep.subr.bf16.mxu0 0
  %96 = vmatpush1.bf16.msra.mxu0 0
  %97 = vmatprep.subr.bf16.mxu0 0
  %98 = vmatpush1.bf16.msra.mxu0 0
  %99 = vmatprep.subr.bf16.mxu0 0
  %100 = vmatpush1.bf16.msra.mxu0 0
  %101 = vmatprep.subr.bf16.mxu0 0
  %102 = vmatpush1.bf16.msra.mxu0 0
  %103 = vmatprep.subr.bf16.mxu0 0
  %104 = vmatpush1.bf16.msra.mxu0 0
  %105 = vmatprep.subr.bf16.mxu0 0
  %106 = vmatpush1.bf16.msra.mxu0 0
  %107 = vmatprep.subr.bf16.mxu0 0
  %108 = vmatpush1.bf16.msra.mxu0 0
  %109 = vmatprep.subr.bf16.mxu0 0
  %110 = vmatpush1.bf16.msra.mxu0 0
  %111 = vmatprep.mubr.bf16.mxu0 0
  %112 = vmatmul.mubr.bf16.gmra.mrb[0].mxu0 %v73
  %v113 = vpop.f32.mrb[0].mxu0
  %v114 = vadd.f32 %v34, %v113
  %v115 = vpop.f32.mrb[0].mxu0
  %v116 = vpop.f32.mrb[0].mxu0
  %v117 = vpop.f32.mrb[0].mxu0
  %118 = vdwg.mxu0
  %v119 = vmax.f32 %v114, 0.0
  %120 = vst [vmem:[%s3] sm:$0x3] %v119
  // Predicated region
  $region14: #{net_forward.10} parent=0 // pred_check
    _
  $region15: #{net_forward.10} parent=0 // pred_check_branch
    %122 = sbr.rel (0) target = $region17
  $region16: #{net_forward.10} parent=0 // pred_region
    _
  $region17: #{net_forward.10} parent=0 // pred_fallthru
    _
  // Predicated region
  $region18: #{net_forward.10} parent=0 // pred_check
    _
  $region19: #{net_forward.10} parent=0 // pred_check_branch
    %124 = sbr.rel (0) target = $region21
  $region20: #{net_forward.10} parent=0 // pred_region
    _
  $region21: #{net_forward.10} parent=0 // pred_fallthru
    _

// kernel: net_forward.11
$region0: #{net_forward.11}
  #allocation0 [shape = 'u32[]', space=smem, size = 0x4, offset = 0x4, fixed_abs, tag = 'smem constant byte address 0x4 - core index']
  #allocation1 [shape = 'u32[144,128]{1,0:T(1,128)}', space=vmem, size = 0x12000, scoped, tag = 'internal scratch']
  %s0 = inlined_call_operand.vmem [shape: f32[2,128], index: 0, kind: input, shape index: {}]
  %s1 = inlined_call_operand.vmem [shape: bf16[128,128], index: 1, kind: input, shape index: {}]
  %s2 = inlined_call_operand.vmem [shape: f32[1,128], index: 2, kind: input, shape index: {}]
  %s3 = inlined_call_operand.vmem [shape: f32[2,128], index: 3, kind: output, shape index: {}]
  %s4 = sld [smem:[#allocation0]]
  $region22: #{net_forward.11} parent=0
    _
  %s6 = ssub.s32 1, %s4
  %s7 = scalar_select 0, %s6, %s4
  // Predicated region
  $region2: #{net_forward.11} parent=0 // pred_check
    _
  $region3: #{net_forward.11} parent=0 // pred_check_branch
    %9 = sbr.rel (0) target = $region5
  $region4: #{net_forward.11} parent=0 // pred_region
    _
  $region5: #{net_forward.11} parent=0 // pred_fallthru
    _
  // Predicated region
  $region6: #{net_forward.11} parent=0 // pred_check
    _
  $region7: #{net_forward.11} parent=0 // pred_check_branch
    %11 = sbr.rel (0) target = $region9
  $region8: #{net_forward.11} parent=0 // pred_region
    _
  $region9: #{net_forward.11} parent=0 // pred_fallthru
    _
  // Predicated region
  $region10: #{net_forward.11} parent=0 // pred_check
    _
  $region11: #{net_forward.11} parent=0 // pred_check_branch
    %13 = sbr.rel (0) target = $region13
  $region12: #{net_forward.11} parent=0 // pred_region
    _
  $region13: #{net_forward.11} parent=0 // pred_fallthru
    _
  %v15 = vld [vmem:[%s0] sm:$0x3]
  %v16 = vpack.c.bf16 %v15, %v15
  %v17 = vld [vmem:[%s1] sm:$0xf]
  %v18 = vld [vmem:[%s1 + $0x4] sm:$0xf]
  %v19 = vld [vmem:[%s1 + $0x8] sm:$0xf]
  %v20 = vld [vmem:[%s1 + $0xc] sm:$0xf]
  %v21 = vld [vmem:[%s1 + $0x10] sm:$0xf]
  %v22 = vld [vmem:[%s1 + $0x14] sm:$0xf]
  %v23 = vld [vmem:[%s1 + $0x18] sm:$0xf]
  %v24 = vld [vmem:[%s1 + $0x1c] sm:$0xf]
  %v25 = vld [vmem:[%s1 + $0x20] sm:$0xf]
  %v26 = vld [vmem:[%s1 + $0x24] sm:$0xf]
  %v27 = vld [vmem:[%s1 + $0x28] sm:$0xf]
  %v28 = vld [vmem:[%s1 + $0x2c] sm:$0xf]
  %v29 = vld [vmem:[%s1 + $0x30] sm:$0xf]
  %v30 = vld [vmem:[%s1 + $0x34] sm:$0xf]
  %v31 = vld [vmem:[%s1 + $0x38] sm:$0xf]
  %v32 = vld [vmem:[%s1 + $0x3c] sm:$0xf]
  %v33 = vld [vmem:[%s2] sm:$0x1]
  %v35 = vlaneseq
  %v36 = vshrl.u32 %v35, 7
  %v37 = vsub.s32 0, %v36
  %v38 = vrot.slane %v33, %v37
  %v56 = vunpack.c.l.b16 %v17
  %v57 = vunpack.c.l.b16 %v18
  %v58 = vunpack.c.l.b16 %v19
  %v59 = vunpack.c.l.b16 %v20
  %v60 = vunpack.c.l.b16 %v21
  %v61 = vunpack.c.l.b16 %v22
  %v62 = vunpack.c.l.b16 %v23
  %v63 = vunpack.c.l.b16 %v24
  %v64 = vunpack.c.l.b16 %v25
  %v65 = vunpack.c.l.b16 %v26
  %v66 = vunpack.c.l.b16 %v27
  %v67 = vunpack.c.l.b16 %v28
  %v68 = vunpack.c.l.b16 %v29
  %v69 = vunpack.c.l.b16 %v30
  %v70 = vunpack.c.l.b16 %v31
  %v71 = vunpack.c.l.b16 %v32
  %v72 = vpack.c.b16 %v57, %v56
  %v73 = vpack.c.b16 %v59, %v58
  %v74 = vpack.c.b16 %v61, %v60
  %v75 = vpack.c.b16 %v63, %v62
  %v76 = vpack.c.b16 %v65, %v64
  %v77 = vpack.c.b16 %v67, %v66
  %v78 = vpack.c.b16 %v69, %v68
  %v79 = vpack.c.b16 %v71, %v70
  %88 = vmatprep.subr.bf16.mxu0 0
  %89 = vmatpush1.bf16.msra.mxu0 %v72
  %90 = vmatprep.subr.bf16.mxu0 0
  %91 = vmatpush1.bf16.msra.mxu0 %v73
  %92 = vmatprep.subr.bf16.mxu0 0
  %93 = vmatpush1.bf16.msra.mxu0 %v74
  %94 = vmatprep.subr.bf16.mxu0 0
  %95 = vmatpush1.bf16.msra.mxu0 %v75
  %96 = vmatprep.subr.bf16.mxu0 0
  %97 = vmatpush1.bf16.msra.mxu0 %v76
  %98 = vmatprep.subr.bf16.mxu0 0
  %99 = vmatpush1.bf16.msra.mxu0 %v77
  %100 = vmatprep.subr.bf16.mxu0 0
  %101 = vmatpush1.bf16.msra.mxu0 %v78
  %102 = vmatprep.subr.bf16.mxu0 0
  %103 = vmatpush1.bf16.msra.mxu0 %v79
  %104 = vmatprep.subr.bf16.mxu0 0
  %105 = vmatpush1.bf16.msra.mxu0 0
  %106 = vmatprep.subr.bf16.mxu0 0
  %107 = vmatpush1.bf16.msra.mxu0 0
  %108 = vmatprep.subr.bf16.mxu0 0
  %109 = vmatpush1.bf16.msra.mxu0 0
  %110 = vmatprep.subr.bf16.mxu0 0
  %111 = vmatpush1.bf16.msra.mxu0 0
  %112 = vmatprep.subr.bf16.mxu0 0
  %113 = vmatpush1.bf16.msra.mxu0 0
  %114 = vmatprep.subr.bf16.mxu0 0
  %115 = vmatpush1.bf16.msra.mxu0 0
  %116 = vmatprep.subr.bf16.mxu0 0
  %117 = vmatpush1.bf16.msra.mxu0 0
  %118 = vmatprep.subr.bf16.mxu0 0
  %119 = vmatpush1.bf16.msra.mxu0 0
  %120 = vmatprep.mubr.bf16.mxu0 0
  %121 = vmatmul.mubr.bf16.gmra.mrb[0].mxu0 %v16
  %v122 = vpop.f32.mrb[0].mxu0
  %v123 = vadd.f32 %v38, %v122
  %v124 = vpop.f32.mrb[0].mxu0
  %v125 = vpop.f32.mrb[0].mxu0
  %v126 = vpop.f32.mrb[0].mxu0
  %127 = vdwg.mxu0
  %128 = vst [vmem:[%s3] sm:$0x3] %v123
  // Predicated region
  $region14: #{net_forward.11} parent=0 // pred_check
    _
  $region15: #{net_forward.11} parent=0 // pred_check_branch
    %130 = sbr.rel (0) target = $region17
  $region16: #{net_forward.11} parent=0 // pred_region
    _
  $region17: #{net_forward.11} parent=0 // pred_fallthru
    _
  // Predicated region
  $region18: #{net_forward.11} parent=0 // pred_check
    _
  $region19: #{net_forward.11} parent=0 // pred_check_branch
    %132 = sbr.rel (0) target = $region21
  $region20: #{net_forward.11} parent=0 // pred_region
    _
  $region21: #{net_forward.11} parent=0 // pred_fallthru
    _

// kernel: net_forward.12
$region0: #{net_forward.12}
  #allocation0 [shape = 'u32[]', space=smem, size = 0x4, offset = 0x4, fixed_abs, tag = 'smem constant byte address 0x4 - core index']
  #allocation1 [shape = 'u32[144,128]{1,0:T(1,128)}', space=vmem, size = 0x12000, scoped, tag = 'internal scratch']
  %s0 = inlined_call_operand.vmem [shape: f32[1152,25], index: 0, kind: input, shape index: {}]
  %s1 = inlined_call_operand.vmem [shape: bf16[25,128], index: 1, kind: input, shape index: {}]
  %s2 = inlined_call_operand.vmem [shape: f32[1,128], index: 2, kind: input, shape index: {}]
  %s3 = inlined_call_operand.vmem [shape: f32[1152,128], index: 3, kind: output, shape index: {}]
  %s4 = sld [smem:[#allocation0]]
  $region22: #{net_forward.12} parent=0
    _
  %s6 = ssub.s32 1, %s4
  %s7 = scalar_select 0, %s6, %s4
  // Predicated region
  $region2: #{net_forward.12} parent=0 // pred_check
    _
  $region3: #{net_forward.12} parent=0 // pred_check_branch
    %9 = sbr.rel (0) target = $region5
  $region4: #{net_forward.12} parent=0 // pred_region
    _
  $region5: #{net_forward.12} parent=0 // pred_fallthru
    _
  // Predicated region
  $region6: #{net_forward.12} parent=0 // pred_check
    _
  $region7: #{net_forward.12} parent=0 // pred_check_branch
    %11 = sbr.rel (0) target = $region9
  $region8: #{net_forward.12} parent=0 // pred_region
    _
  $region9: #{net_forward.12} parent=0 // pred_fallthru
    _
  // Predicated region
  $region10: #{net_forward.12} parent=0 // pred_check
    _
  $region11: #{net_forward.12} parent=0 // pred_check_branch
    %13 = sbr.rel (0) target = $region13
  $region12: #{net_forward.12} parent=0 // pred_region
    _
  $region13: #{net_forward.12} parent=0 // pred_fallthru
    _
  %v15 = vld [vmem:[%s0] sm:$0xff]
  %v16 = vld [vmem:[%s0 + $0x8] sm:$0xff]
  %v17 = vld [vmem:[%s0 + $0x10] sm:$0xff]
  %v18 = vld [vmem:[%s0 + $0x18] sm:$0xff]
  %v19 = vld [vmem:[%s0 + $0x20] sm:$0xff]
  %v20 = vld [vmem:[%s0 + $0x28] sm:$0xff]
  %v21 = vld [vmem:[%s0 + $0x30] sm:$0xff]
  %v22 = vld [vmem:[%s0 + $0x38] sm:$0xff]
  %v23 = vld [vmem:[%s0 + $0x40] sm:$0xff]
  %v24 = vld [vmem:[%s0 + $0x48] sm:$0xff]
  %v25 = vld [vmem:[%s0 + $0x50] sm:$0xff]
  %v26 = vld [vmem:[%s0 + $0x58] sm:$0xff]
  %v27 = vld [vmem:[%s0 + $0x60] sm:$0xff]
  %v28 = vld [vmem:[%s0 + $0x68] sm:$0xff]
  %v29 = vld [vmem:[%s0 + $0x70] sm:$0xff]
  %v30 = vld [vmem:[%s0 + $0x78] sm:$0xff]
  %v31 = vld [vmem:[%s0 + $0x80] sm:$0xff]
  %v32 = vld [vmem:[%s0 + $0x88] sm:$0xff]
  %v33 = vld [vmem:[%s0 + $0x90] sm:$0xff]
  %v34 = vld [vmem:[%s0 + $0x98] sm:$0xff]
  %v35 = vld [vmem:[%s0 + $0xa0] sm:$0xff]
  %v36 = vld [vmem:[%s0 + $0xa8] sm:$0xff]
  %v37 = vld [vmem:[%s0 + $0xb0] sm:$0xff]
  %v38 = vld [vmem:[%s0 + $0xb8] sm:$0xff]
  %v39 = vld [vmem:[%s0 + $0xc0] sm:$0xff]
  %v40 = vld [vmem:[%s0 + $0xc8] sm:$0xff]
  %v41 = vld [vmem:[%s0 + $0xd0] sm:$0xff]
  %v42 = vld [vmem:[%s0 + $0xd8] sm:$0xff]
  %v43 = vld [vmem:[%s0 + $0xe0] sm:$0xff]
  %v44 = vld [vmem:[%s0 + $0xe8] sm:$0xff]
  %v45 = vld [vmem:[%s0 + $0xf0] sm:$0xff]
  %v46 = vld [vmem:[%s0 + $0xf8] sm:$0xff]
  %v47 = vld [vmem:[%s0 + $0x100] sm:$0xff]
  %v48 = vld [vmem:[%s0 + $0x108] sm:$0xff]
  %v49 = vld [vmem:[%s0 + $0x110] sm:$0xff]
  %v50 = vld [vmem:[%s0 + $0x118] sm:$0xff]
  %v51 = vld [vmem:[%s0 + $0x120] sm:$0xff]
  %v52 = vld [vmem:[%s0 + $0x128] sm:$0xff]
  %v53 = vld [vmem:[%s0 + $0x130] sm:$0xff]
  %v54 = vld [vmem:[%s0 + $0x138] sm:$0xff]
  %v55 = vld [vmem:[%s0 + $0x140] sm:$0xff]
  %v56 = vld [vmem:[%s0 + $0x148] sm:$0xff]
  %v57 = vld [vmem:[%s0 + $0x150] sm:$0xff]
  %v58 = vld [vmem:[%s0 + $0x158] sm:$0xff]
  %v59 = vld [vmem:[%s0 + $0x160] sm:$0xff]
  %v60 = vld [vmem:[%s0 + $0x168] sm:$0xff]
  %v61 = vld [vmem:[%s0 + $0x170] sm:$0xff]
  %v62 = vld [vmem:[%s0 + $0x178] sm:$0xff]
  %v63 = vld [vmem:[%s0 + $0x180] sm:$0xff]
  %v64 = vld [vmem:[%s0 + $0x188] sm:$0xff]
  %v65 = vld [vmem:[%s0 + $0x190] sm:$0xff]
  %v66 = vld [vmem:[%s0 + $0x198] sm:$0xff]
  %v67 = vld [vmem:[%s0 + $0x1a0] sm:$0xff]
  %v68 = vld [vmem:[%s0 + $0x1a8] sm:$0xff]
  %v69 = vld [vmem:[%s0 + $0x1b0] sm:$0xff]
  %v70 = vld [vmem:[%s0 + $0x1b8] sm:$0xff]
  %v71 = vld [vmem:[%s0 + $0x1c0] sm:$0xff]
  %v72 = vld [vmem:[%s0 + $0x1c8] sm:$0xff]
  %v73 = vld [vmem:[%s0 + $0x1d0] sm:$0xff]
  %v74 = vld [vmem:[%s0 + $0x1d8] sm:$0xff]
  %v75 = vld [vmem:[%s0 + $0x1e0] sm:$0xff]
  %v76 = vld [vmem:[%s0 + $0x1e8] sm:$0xff]
  %v77 = vld [vmem:[%s0 + $0x1f0] sm:$0xff]
  %v78 = vld [vmem:[%s0 + $0x1f8] sm:$0xff]
  %v79 = vld [vmem:[%s0 + $0x200] sm:$0xff]
  %v80 = vld [vmem:[%s0 + $0x208] sm:$0xff]
  %v81 = vld [vmem:[%s0 + $0x210] sm:$0xff]
  %v82 = vld [vmem:[%s0 + $0x218] sm:$0xff]
  %v83 = vld [vmem:[%s0 + $0x220] sm:$0xff]
  %v84 = vld [vmem:[%s0 + $0x228] sm:$0xff]
  %v85 = vld [vmem:[%s0 + $0x230] sm:$0xff]
  %v86 = vld [vmem:[%s0 + $0x238] sm:$0xff]
  %v87 = vld [vmem:[%s0 + $0x240] sm:$0xff]
  %v88 = vld [vmem:[%s0 + $0x248] sm:$0xff]
  %v89 = vld [vmem:[%s0 + $0x250] sm:$0xff]
  %v90 = vld [vmem:[%s0 + $0x258] sm:$0xff]
  %v91 = vld [vmem:[%s0 + $0x260] sm:$0xff]
  %v92 = vld [vmem:[%s0 + $0x268] sm:$0xff]
  %v93 = vld [vmem:[%s0 + $0x270] sm:$0xff]
  %v94 = vld [vmem:[%s0 + $0x278] sm:$0xff]
  %v95 = vld [vmem:[%s0 + $0x280] sm:$0xff]
  %v96 = vld [vmem:[%s0 + $0x288] sm:$0xff]
  %v97 = vld [vmem:[%s0 + $0x290] sm:$0xff]
  %v98 = vld [vmem:[%s0 + $0x298] sm:$0xff]
  %v99 = vld [vmem:[%s0 + $0x2a0] sm:$0xff]
  %v100 = vld [vmem:[%s0 + $0x2a8] sm:$0xff]
  %v101 = vld [vmem:[%s0 + $0x2b0] sm:$0xff]
  %v102 = vld [vmem:[%s0 + $0x2b8] sm:$0xff]
  %v103 = vld [vmem:[%s0 + $0x2c0] sm:$0xff]
  %v104 = vld [vmem:[%s0 + $0x2c8] sm:$0xff]
  %v105 = vld [vmem:[%s0 + $0x2d0] sm:$0xff]
  %v106 = vld [vmem:[%s0 + $0x2d8] sm:$0xff]
  %v107 = vld [vmem:[%s0 + $0x2e0] sm:$0xff]
  %v108 = vld [vmem:[%s0 + $0x2e8] sm:$0xff]
  %v109 = vld [vmem:[%s0 + $0x2f0] sm:$0xff]
  %v110 = vld [vmem:[%s0 + $0x2f8] sm:$0xff]
  %v111 = vld [vmem:[%s0 + $0x300] sm:$0xff]
  %v112 = vld [vmem:[%s0 + $0x308] sm:$0xff]
  %v113 = vld [vmem:[%s0 + $0x310] sm:$0xff]
  %v114 = vld [vmem:[%s0 + $0x318] sm:$0xff]
  %v115 = vld [vmem:[%s0 + $0x320] sm:$0xff]
  %v116 = vld [vmem:[%s0 + $0x328] sm:$0xff]
  %v117 = vld [vmem:[%s0 + $0x330] sm:$0xff]
  %v118 = vld [vmem:[%s0 + $0x338] sm:$0xff]
  %v119 = vld [vmem:[%s0 + $0x340] sm:$0xff]
  %v120 = vld [vmem:[%s0 + $0x348] sm:$0xff]
  %v121 = vld [vmem:[%s0 + $0x350] sm:$0xff]
  %v122 = vld [vmem:[%s0 + $0x358] sm:$0xff]
  %v123 = vld [vmem:[%s0 + $0x360] sm:$0xff]
  %v124 = vld [vmem:[%s0 + $0x368] sm:$0xff]
  %v125 = vld [vmem:[%s0 + $0x370] sm:$0xff]
  %v126 = vld [vmem:[%s0 + $0x378] sm:$0xff]
  %v127 = vld [vmem:[%s0 + $0x380] sm:$0xff]
  %v128 = vld [vmem:[%s0 + $0x388] sm:$0xff]
  %v129 = vld [vmem:[%s0 + $0x390] sm:$0xff]
  %v130 = vld [vmem:[%s0 + $0x398] sm:$0xff]
  %v131 = vld [vmem:[%s0 + $0x3a0] sm:$0xff]
  %v132 = vld [vmem:[%s0 + $0x3a8] sm:$0xff]
  %v133 = vld [vmem:[%s0 + $0x3b0] sm:$0xff]
  %v134 = vld [vmem:[%s0 + $0x3b8] sm:$0xff]
  %v135 = vld [vmem:[%s0 + $0x3c0] sm:$0xff]
  %v136 = vld [vmem:[%s0 + $0x3c8] sm:$0xff]
  %v137 = vld [vmem:[%s0 + $0x3d0] sm:$0xff]
  %v138 = vld [vmem:[%s0 + $0x3d8] sm:$0xff]
  %v139 = vld [vmem:[%s0 + $0x3e0] sm:$0xff]
  %v140 = vld [vmem:[%s0 + $0x3e8] sm:$0xff]
  %v141 = vld [vmem:[%s0 + $0x3f0] sm:$0xff]
  %v142 = vld [vmem:[%s0 + $0x3f8] sm:$0xff]
  %v143 = vld [vmem:[%s0 + $0x400] sm:$0xff]
  %v144 = vld [vmem:[%s0 + $0x408] sm:$0xff]
  %v145 = vld [vmem:[%s0 + $0x410] sm:$0xff]
  %v146 = vld [vmem:[%s0 + $0x418] sm:$0xff]
  %v147 = vld [vmem:[%s0 + $0x420] sm:$0xff]
  %v148 = vld [vmem:[%s0 + $0x428] sm:$0xff]
  %v149 = vld [vmem:[%s0 + $0x430] sm:$0xff]
  %v150 = vld [vmem:[%s0 + $0x438] sm:$0xff]
  %v151 = vld [vmem:[%s0 + $0x440] sm:$0xff]
  %v152 = vld [vmem:[%s0 + $0x448] sm:$0xff]
  %v153 = vld [vmem:[%s0 + $0x450] sm:$0xff]
  %v154 = vld [vmem:[%s0 + $0x458] sm:$0xff]
  %v155 = vld [vmem:[%s0 + $0x460] sm:$0xff]
  %v156 = vld [vmem:[%s0 + $0x468] sm:$0xff]
  %v157 = vld [vmem:[%s0 + $0x470] sm:$0xff]
  %v158 = vld [vmem:[%s0 + $0x478] sm:$0xff]
  %v159 = vpack.c.bf16 %v16, %v15
  %v160 = vpack.c.bf16 %v18, %v17
  %v161 = vpack.c.bf16 %v20, %v19
  %v162 = vpack.c.bf16 %v22, %v21
  %v163 = vpack.c.bf16 %v24, %v23
  %v164 = vpack.c.bf16 %v26, %v25
  %v165 = vpack.c.bf16 %v28, %v27
  %v166 = vpack.c.bf16 %v30, %v29
  %v167 = vpack.c.bf16 %v32, %v31
  %v168 = vpack.c.bf16 %v34, %v33
  %v169 = vpack.c.bf16 %v36, %v35
  %v170 = vpack.c.bf16 %v38, %v37
  %v171 = vpack.c.bf16 %v40, %v39
  %v172 = vpack.c.bf16 %v42, %v41
  %v173 = vpack.c.bf16 %v44, %v43
  %v174 = vpack.c.bf16 %v46, %v45
  %v175 = vpack.c.bf16 %v48, %v47
  %v176 = vpack.c.bf16 %v50, %v49
  %v177 = vpack.c.bf16 %v52, %v51
  %v178 = vpack.c.bf16 %v54, %v53
  %v179 = vpack.c.bf16 %v56, %v55
  %v180 = vpack.c.bf16 %v58, %v57
  %v181 = vpack.c.bf16 %v60, %v59
  %v182 = vpack.c.bf16 %v62, %v61
  %v183 = vpack.c.bf16 %v64, %v63
  %v184 = vpack.c.bf16 %v66, %v65
  %v185 = vpack.c.bf16 %v68, %v67
  %v186 = vpack.c.bf16 %v70, %v69
  %v187 = vpack.c.bf16 %v72, %v71
  %v188 = vpack.c.bf16 %v74, %v73
  %v189 = vpack.c.bf16 %v76, %v75
  %v190 = vpack.c.bf16 %v78, %v77
  %v191 = vpack.c.bf16 %v80, %v79
  %v192 = vpack.c.bf16 %v82, %v81
  %v193 = vpack.c.bf16 %v84, %v83
  %v194 = vpack.c.bf16 %v86, %v85
  %v195 = vpack.c.bf16 %v88, %v87
  %v196 = vpack.c.bf16 %v90, %v89
  %v197 = vpack.c.bf16 %v92, %v91
  %v198 = vpack.c.bf16 %v94, %v93
  %v199 = vpack.c.bf16 %v96, %v95
  %v200 = vpack.c.bf16 %v98, %v97
  %v201 = vpack.c.bf16 %v100, %v99
  %v202 = vpack.c.bf16 %v102, %v101
  %v203 = vpack.c.bf16 %v104, %v103
  %v204 = vpack.c.bf16 %v106, %v105
  %v205 = vpack.c.bf16 %v108, %v107
  %v206 = vpack.c.bf16 %v110, %v109
  %v207 = vpack.c.bf16 %v112, %v111
  %v208 = vpack.c.bf16 %v114, %v113
  %v209 = vpack.c.bf16 %v116, %v115
  %v210 = vpack.c.bf16 %v118, %v117
  %v211 = vpack.c.bf16 %v120, %v119
  %v212 = vpack.c.bf16 %v122, %v121
  %v213 = vpack.c.bf16 %v124, %v123
  %v214 = vpack.c.bf16 %v126, %v125
  %v215 = vpack.c.bf16 %v128, %v127
  %v216 = vpack.c.bf16 %v130, %v129
  %v217 = vpack.c.bf16 %v132, %v131
  %v218 = vpack.c.bf16 %v134, %v133
  %v219 = vpack.c.bf16 %v136, %v135
  %v220 = vpack.c.bf16 %v138, %v137
  %v221 = vpack.c.bf16 %v140, %v139
  %v222 = vpack.c.bf16 %v142, %v141
  %v223 = vpack.c.bf16 %v144, %v143
  %v224 = vpack.c.bf16 %v146, %v145
  %v225 = vpack.c.bf16 %v148, %v147
  %v226 = vpack.c.bf16 %v150, %v149
  %v227 = vpack.c.bf16 %v152, %v151
  %v228 = vpack.c.bf16 %v154, %v153
  %v229 = vpack.c.bf16 %v156, %v155
  %v230 = vpack.c.bf16 %v158, %v157
  %v231 = vld [vmem:[%s1] sm:$0xf]
  %v232 = vld [vmem:[%s1 + $0x4] sm:$0xf]
  %v233 = vld [vmem:[%s1 + $0x8] sm:$0xf]
  %v234 = vld [vmem:[%s1 + $0xc] sm:$0x1]
  %v235 = vld [vmem:[%s2] sm:$0x1]
  %v237 = vlaneseq
  %v238 = vshrl.u32 %v237, 7
  %v239 = vsub.s32 0, %v238
  %v240 = vrot.slane %v235, %v239
  %v246 = vunpack.c.l.b16 %v231
  %v247 = vunpack.c.l.b16 %v232
  %v248 = vunpack.c.l.b16 %v233
  %v249 = vunpack.c.l.b16 %v234
  %v250 = vpack.c.b16 %v247, %v246
  %v251 = vpack.c.b16 %v249, %v248
  %vm253 = vcmask 203776
  %v255 = vsel %vm253, %v159, 0
  %v258 = vsel %vm253, %v160, 0
  %v261 = vsel %vm253, %v161, 0
  %v264 = vsel %vm253, %v162, 0
  %v267 = vsel %vm253, %v163, 0
  %v270 = vsel %vm253, %v164, 0
  %v273 = vsel %vm253, %v165, 0
  %v276 = vsel %vm253, %v166, 0
  %v279 = vsel %vm253, %v167, 0
  %v282 = vsel %vm253, %v168, 0
  %v285 = vsel %vm253, %v169, 0
  %v288 = vsel %vm253, %v170, 0
  %v291 = vsel %vm253, %v171, 0
  %v294 = vsel %vm253, %v172, 0
  %v297 = vsel %vm253, %v173, 0
  %v300 = vsel %vm253, %v174, 0
  %v303 = vsel %vm253, %v175, 0
  %v306 = vsel %vm253, %v176, 0
  %v309 = vsel %vm253, %v177, 0
  %v312 = vsel %vm253, %v178, 0
  %v315 = vsel %vm253, %v179, 0
  %v318 = vsel %vm253, %v180, 0
  %v321 = vsel %vm253, %v181, 0
  %v324 = vsel %vm253, %v182, 0
  %v327 = vsel %vm253, %v183, 0
  %v330 = vsel %vm253, %v184, 0
  %v333 = vsel %vm253, %v185, 0
  %v336 = vsel %vm253, %v186, 0
  %v339 = vsel %vm253, %v187, 0
  %v342 = vsel %vm253, %v188, 0
  %v345 = vsel %vm253, %v189, 0
  %v348 = vsel %vm253, %v190, 0
  %v351 = vsel %vm253, %v191, 0
  %v354 = vsel %vm253, %v192, 0
  %v357 = vsel %vm253, %v193, 0
  %v360 = vsel %vm253, %v194, 0
  %v363 = vsel %vm253, %v195, 0
  %v366 = vsel %vm253, %v196, 0
  %v369 = vsel %vm253, %v197, 0
  %v372 = vsel %vm253, %v198, 0
  %v375 = vsel %vm253, %v199, 0
  %v378 = vsel %vm253, %v200, 0
  %v381 = vsel %vm253, %v201, 0
  %v384 = vsel %vm253, %v202, 0
  %v387 = vsel %vm253, %v203, 0
  %v390 = vsel %vm253, %v204, 0
  %v393 = vsel %vm253, %v205, 0
  %v396 = vsel %vm253, %v206, 0
  %v399 = vsel %vm253, %v207, 0
  %v402 = vsel %vm253, %v208, 0
  %v405 = vsel %vm253, %v209, 0
  %v408 = vsel %vm253, %v210, 0
  %v411 = vsel %vm253, %v211, 0
  %v414 = vsel %vm253, %v212, 0
  %v417 = vsel %vm253, %v213, 0
  %v420 = vsel %vm253, %v214, 0
  %v423 = vsel %vm253, %v215, 0
  %v426 = vsel %vm253, %v216, 0
  %v429 = vsel %vm253, %v217, 0
  %v432 = vsel %vm253, %v218, 0
  %v435 = vsel %vm253, %v219, 0
  %v438 = vsel %vm253, %v220, 0
  %v441 = vsel %vm253, %v221, 0
  %v444 = vsel %vm253, %v222, 0
  %v447 = vsel %vm253, %v223, 0
  %v450 = vsel %vm253, %v224, 0
  %v453 = vsel %vm253, %v225, 0
  %v456 = vsel %vm253, %v226, 0
  %v459 = vsel %vm253, %v227, 0
  %v462 = vsel %vm253, %v228, 0
  %v465 = vsel %vm253, %v229, 0
  %v468 = vsel %vm253, %v230, 0
  %vm470 = vcmask 1043456
  %vm471 = vcmask 1044480
  %v472 = vsel %vm470, 4294967295, 65535
  %v473 = vsel %vm471, %v472, 0
  %v475 = vand.u32 %v251, %v473
  %477 = vmatprep.subr.bf16.mxu0 0
  %478 = vmatpush1.bf16.msra.mxu0 %v250
  %479 = vmatprep.subr.bf16.mxu0 0
  %480 = vmatpush1.bf16.msra.mxu0 %v475
  %481 = vmatprep.subr.bf16.mxu0 0
  %482 = vmatpush1.bf16.msra.mxu0 0
  %483 = vmatprep.subr.bf16.mxu0 0
  %484 = vmatpush1.bf16.msra.mxu0 0
  %485 = vmatprep.subr.bf16.mxu0 0
  %486 = vmatpush1.bf16.msra.mxu0 0
  %487 = vmatprep.subr.bf16.mxu0 0
  %488 = vmatpush1.bf16.msra.mxu0 0
  %489 = vmatprep.subr.bf16.mxu0 0
  %490 = vmatpush1.bf16.msra.mxu0 0
  %491 = vmatprep.subr.bf16.mxu0 0
  %492 = vmatpush1.bf16.msra.mxu0 0
  %493 = vmatprep.subr.bf16.mxu0 0
  %494 = vmatpush1.bf16.msra.mxu0 0
  %495 = vmatprep.subr.bf16.mxu0 0
  %496 = vmatpush1.bf16.msra.mxu0 0
  %497 = vmatprep.subr.bf16.mxu0 0
  %498 = vmatpush1.bf16.msra.mxu0 0
  %499 = vmatprep.subr.bf16.mxu0 0
  %500 = vmatpush1.bf16.msra.mxu0 0
  %501 = vmatprep.subr.bf16.mxu0 0
  %502 = vmatpush1.bf16.msra.mxu0 0
  %503 = vmatprep.subr.bf16.mxu0 0
  %504 = vmatpush1.bf16.msra.mxu0 0
  %505 = vmatprep.subr.bf16.mxu0 0
  %506 = vmatpush1.bf16.msra.mxu0 0
  %507 = vmatprep.subr.bf16.mxu0 0
  %508 = vmatpush1.bf16.msra.mxu0 0
  %509 = vmatprep.mubr.bf16.mxu0 0
  %510 = vmatmul.mubr.bf16.gmra.mrb[0].mxu0 %v255
  %v511 = vpop.f32.mrb[0].mxu0
  %v512 = vadd.f32 %v240, %v511
  %v513 = vpop.f32.mrb[0].mxu0
  %v514 = vpop.f32.mrb[0].mxu0
  %v515 = vadd.f32 %v240, %v514
  %v516 = vpop.f32.mrb[0].mxu0
  %517 = vmatprep.mubr.bf16.mxu0 0
  %518 = vmatmul.mubr.bf16.gmra.mrb[0].mxu0 %v258
  %v519 = vpop.f32.mrb[0].mxu0
  %v520 = vadd.f32 %v240, %v519
  %v521 = vpop.f32.mrb[0].mxu0
  %v522 = vpop.f32.mrb[0].mxu0
  %v523 = vadd.f32 %v240, %v522
  %v524 = vpop.f32.mrb[0].mxu0
  %525 = vmatprep.mubr.bf16.mxu0 0
  %526 = vmatmul.mubr.bf16.gmra.mrb[0].mxu0 %v261
  %v527 = vpop.f32.mrb[0].mxu0
  %v528 = vadd.f32 %v240, %v527
  %v529 = vpop.f32.mrb[0].mxu0
  %v530 = vpop.f32.mrb[0].mxu0
  %v531 = vadd.f32 %v240, %v530
  %v532 = vpop.f32.mrb[0].mxu0
  %533 = vmatprep.mubr.bf16.mxu0 0
  %534 = vmatmul.mubr.bf16.gmra.mrb[0].mxu0 %v264
  %v535 = vpop.f32.mrb[0].mxu0
  %v536 = vadd.f32 %v240, %v535
  %v537 = vpop.f32.mrb[0].mxu0
  %v538 = vpop.f32.mrb[0].mxu0
  %v539 = vadd.f32 %v240, %v538
  %v540 = vpop.f32.mrb[0].mxu0
  %541 = vmatprep.mubr.bf16.mxu0 0
  %542 = vmatmul.mubr.bf16.gmra.mrb[0].mxu0 %v267
  %v543 = vpop.f32.mrb[0].mxu0
  %v544 = vadd.f32 %v240, %v543
  %v545 = vpop.f32.mrb[0].mxu0
  %v546 = vpop.f32.mrb[0].mxu0
  %v547 = vadd.f32 %v240, %v546
  %v548 = vpop.f32.mrb[0].mxu0
  %549 = vmatprep.mubr.bf16.mxu0 0
  %550 = vmatmul.mubr.bf16.gmra.mrb[0].mxu0 %v270
  %v551 = vpop.f32.mrb[0].mxu0
  %v552 = vadd.f32 %v240, %v551
  %v553 = vpop.f32.mrb[0].mxu0
  %v554 = vpop.f32.mrb[0].mxu0
  %v555 = vadd.f32 %v240, %v554
  %v556 = vpop.f32.mrb[0].mxu0
  %557 = vmatprep.mubr.bf16.mxu0 0
  %558 = vmatmul.mubr.bf16.gmra.mrb[0].mxu0 %v273
  %v559 = vpop.f32.mrb[0].mxu0
  %v560 = vadd.f32 %v240, %v559
  %v561 = vpop.f32.mrb[0].mxu0
  %v562 = vpop.f32.mrb[0].mxu0
  %v563 = vadd.f32 %v240, %v562
  %v564 = vpop.f32.mrb[0].mxu0
  %565 = vmatprep.mubr.bf16.mxu0 0
  %566 = vmatmul.mubr.bf16.gmra.mrb[0].mxu0 %v276
  %v567 = vpop.f32.mrb[0].mxu0
  %v568 = vadd.f32 %v240, %v567
  %v569 = vpop.f32.mrb[0].mxu0
  %v570 = vpop.f32.mrb[0].mxu0
  %v571 = vadd.f32 %v240, %v570
  %v572 = vpop.f32.mrb[0].mxu0
  %573 = vmatprep.mubr.bf16.mxu0 0
  %574 = vmatmul.mubr.bf16.gmra.mrb[0].mxu0 %v279
  %v575 = vpop.f32.mrb[0].mxu0
  %v576 = vadd.f32 %v240, %v575
  %v577 = vpop.f32.mrb[0].mxu0
  %v578 = vpop.f32.mrb[0].mxu0
  %v579 = vadd.f32 %v240, %v578
  %v580 = vpop.f32.mrb[0].mxu0
  %581 = vmatprep.mubr.bf16.mxu0 0
  %582 = vmatmul.mubr.bf16.gmra.mrb[0].mxu0 %v282
  %v583 = vpop.f32.mrb[0].mxu0
  %v584 = vadd.f32 %v240, %v583
  %v585 = vpop.f32.mrb[0].mxu0
  %v586 = vpop.f32.mrb[0].mxu0
  %v587 = vadd.f32 %v240, %v586
  %v588 = vpop.f32.mrb[0].mxu0
  %589 = vmatprep.mubr.bf16.mxu0 0
  %590 = vmatmul.mubr.bf16.gmra.mrb[0].mxu0 %v285
  %v591 = vpop.f32.mrb[0].mxu0
  %v592 = vadd.f32 %v240, %v591
  %v593 = vpop.f32.mrb[0].mxu0
  %v594 = vpop.f32.mrb[0].mxu0
  %v595 = vadd.f32 %v240, %v594
  %v596 = vpop.f32.mrb[0].mxu0
  %597 = vmatprep.mubr.bf16.mxu0 0
  %598 = vmatmul.mubr.bf16.gmra.mrb[0].mxu0 %v288
  %v599 = vpop.f32.mrb[0].mxu0
  %v600 = vadd.f32 %v240, %v599
  %v601 = vpop.f32.mrb[0].mxu0
  %v602 = vpop.f32.mrb[0].mxu0
  %v603 = vadd.f32 %v240, %v602
  %v604 = vpop.f32.mrb[0].mxu0
  %605 = vmatprep.mubr.bf16.mxu0 0
  %606 = vmatmul.mubr.bf16.gmra.mrb[0].mxu0 %v291
  %v607 = vpop.f32.mrb[0].mxu0
  %v608 = vadd.f32 %v240, %v607
  %v609 = vpop.f32.mrb[0].mxu0
  %v610 = vpop.f32.mrb[0].mxu0
  %v611 = vadd.f32 %v240, %v610
  %v612 = vpop.f32.mrb[0].mxu0
  %613 = vmatprep.mubr.bf16.mxu0 0
  %614 = vmatmul.mubr.bf16.gmra.mrb[0].mxu0 %v294
  %v615 = vpop.f32.mrb[0].mxu0
  %v616 = vadd.f32 %v240, %v615
  %v617 = vpop.f32.mrb[0].mxu0
  %v618 = vpop.f32.mrb[0].mxu0
  %v619 = vadd.f32 %v240, %v618
  %v620 = vpop.f32.mrb[0].mxu0
  %621 = vmatprep.mubr.bf16.mxu0 0
  %622 = vmatmul.mubr.bf16.gmra.mrb[0].mxu0 %v297
  %v623 = vpop.f32.mrb[0].mxu0
  %v624 = vadd.f32 %v240, %v623
  %v625 = vpop.f32.mrb[0].mxu0
  %v626 = vpop.f32.mrb[0].mxu0
  %v627 = vadd.f32 %v240, %v626
  %v628 = vpop.f32.mrb[0].mxu0
  %629 = vmatprep.mubr.bf16.mxu0 0
  %630 = vmatmul.mubr.bf16.gmra.mrb[0].mxu0 %v300
  %v631 = vpop.f32.mrb[0].mxu0
  %v632 = vadd.f32 %v240, %v631
  %v633 = vpop.f32.mrb[0].mxu0
  %v634 = vpop.f32.mrb[0].mxu0
  %v635 = vadd.f32 %v240, %v634
  %v636 = vpop.f32.mrb[0].mxu0
  %637 = vmatprep.mubr.bf16.mxu0 0
  %638 = vmatmul.mubr.bf16.gmra.mrb[0].mxu0 %v303
  %v639 = vpop.f32.mrb[0].mxu0
  %v640 = vadd.f32 %v240, %v639
  %v641 = vpop.f32.mrb[0].mxu0
  %v642 = vpop.f32.mrb[0].mxu0
  %v643 = vadd.f32 %v240, %v642
  %v644 = vpop.f32.mrb[0].mxu0
  %645 = vmatprep.mubr.bf16.mxu0 0
  %646 = vmatmul.mubr.bf16.gmra.mrb[0].mxu0 %v306
  %v647 = vpop.f32.mrb[0].mxu0
  %v648 = vadd.f32 %v240, %v647
  %v649 = vpop.f32.mrb[0].mxu0
  %v650 = vpop.f32.mrb[0].mxu0
  %v651 = vadd.f32 %v240, %v650
  %v652 = vpop.f32.mrb[0].mxu0
  %653 = vmatprep.mubr.bf16.mxu0 0
  %654 = vmatmul.mubr.bf16.gmra.mrb[0].mxu0 %v309
  %v655 = vpop.f32.mrb[0].mxu0
  %v656 = vadd.f32 %v240, %v655
  %v657 = vpop.f32.mrb[0].mxu0
  %v658 = vpop.f32.mrb[0].mxu0
  %v659 = vadd.f32 %v240, %v658
  %v660 = vpop.f32.mrb[0].mxu0
  %661 = vmatprep.mubr.bf16.mxu0 0
  %662 = vmatmul.mubr.bf16.gmra.mrb[0].mxu0 %v312
  %v663 = vpop.f32.mrb[0].mxu0
  %v664 = vadd.f32 %v240, %v663
  %v665 = vpop.f32.mrb[0].mxu0
  %v666 = vpop.f32.mrb[0].mxu0
  %v667 = vadd.f32 %v240, %v666
  %v668 = vpop.f32.mrb[0].mxu0
  %669 = vmatprep.mubr.bf16.mxu0 0
  %670 = vmatmul.mubr.bf16.gmra.mrb[0].mxu0 %v315
  %v671 = vpop.f32.mrb[0].mxu0
  %v672 = vadd.f32 %v240, %v671
  %v673 = vpop.f32.mrb[0].mxu0
  %v674 = vpop.f32.mrb[0].mxu0
  %v675 = vadd.f32 %v240, %v674
  %v676 = vpop.f32.mrb[0].mxu0
  %677 = vmatprep.mubr.bf16.mxu0 0
  %678 = vmatmul.mubr.bf16.gmra.mrb[0].mxu0 %v318
  %v679 = vpop.f32.mrb[0].mxu0
  %v680 = vadd.f32 %v240, %v679
  %v681 = vpop.f32.mrb[0].mxu0
  %v682 = vpop.f32.mrb[0].mxu0
  %v683 = vadd.f32 %v240, %v682
  %v684 = vpop.f32.mrb[0].mxu0
  %685 = vmatprep.mubr.bf16.mxu0 0
  %686 = vmatmul.mubr.bf16.gmra.mrb[0].mxu0 %v321
  %v687 = vpop.f32.mrb[0].mxu0
  %v688 = vadd.f32 %v240, %v687
  %v689 = vpop.f32.mrb[0].mxu0
  %v690 = vpop.f32.mrb[0].mxu0
  %v691 = vadd.f32 %v240, %v690
  %v692 = vpop.f32.mrb[0].mxu0
  %693 = vmatprep.mubr.bf16.mxu0 0
  %694 = vmatmul.mubr.bf16.gmra.mrb[0].mxu0 %v324
  %v695 = vpop.f32.mrb[0].mxu0
  %v696 = vadd.f32 %v240, %v695
  %v697 = vpop.f32.mrb[0].mxu0
  %v698 = vpop.f32.mrb[0].mxu0
  %v699 = vadd.f32 %v240, %v698
  %v700 = vpop.f32.mrb[0].mxu0
  %701 = vmatprep.mubr.bf16.mxu0 0
  %702 = vmatmul.mubr.bf16.gmra.mrb[0].mxu0 %v327
  %v703 = vpop.f32.mrb[0].mxu0
  %v704 = vadd.f32 %v240, %v703
  %v705 = vpop.f32.mrb[0].mxu0
  %v706 = vpop.f32.mrb[0].mxu0
  %v707 = vadd.f32 %v240, %v706
  %v708 = vpop.f32.mrb[0].mxu0
  %709 = vmatprep.mubr.bf16.mxu0 0
  %710 = vmatmul.mubr.bf16.gmra.mrb[0].mxu0 %v330
  %v711 = vpop.f32.mrb[0].mxu0
  %v712 = vadd.f32 %v240, %v711
  %v713 = vpop.f32.mrb[0].mxu0
  %v714 = vpop.f32.mrb[0].mxu0
  %v715 = vadd.f32 %v240, %v714
  %v716 = vpop.f32.mrb[0].mxu0
  %717 = vmatprep.mubr.bf16.mxu0 0
  %718 = vmatmul.mubr.bf16.gmra.mrb[0].mxu0 %v333
  %v719 = vpop.f32.mrb[0].mxu0
  %v720 = vadd.f32 %v240, %v719
  %v721 = vpop.f32.mrb[0].mxu0
  %v722 = vpop.f32.mrb[0].mxu0
  %v723 = vadd.f32 %v240, %v722
  %v724 = vpop.f32.mrb[0].mxu0
  %725 = vmatprep.mubr.bf16.mxu0 0
  %726 = vmatmul.mubr.bf16.gmra.mrb[0].mxu0 %v336
  %v727 = vpop.f32.mrb[0].mxu0
  %v728 = vadd.f32 %v240, %v727
  %v729 = vpop.f32.mrb[0].mxu0
  %v730 = vpop.f32.mrb[0].mxu0
  %v731 = vadd.f32 %v240, %v730
  %v732 = vpop.f32.mrb[0].mxu0
  %733 = vmatprep.mubr.bf16.mxu0 0
  %734 = vmatmul.mubr.bf16.gmra.mrb[0].mxu0 %v339
  %v735 = vpop.f32.mrb[0].mxu0
  %v736 = vadd.f32 %v240, %v735
  %v737 = vpop.f32.mrb[0].mxu0
  %v738 = vpop.f32.mrb[0].mxu0
  %v739 = vadd.f32 %v240, %v738
  %v740 = vpop.f32.mrb[0].mxu0
  %741 = vmatprep.mubr.bf16.mxu0 0
  %742 = vmatmul.mubr.bf16.gmra.mrb[0].mxu0 %v342
  %v743 = vpop.f32.mrb[0].mxu0
  %v744 = vadd.f32 %v240, %v743
  %v745 = vpop.f32.mrb[0].mxu0
  %v746 = vpop.f32.mrb[0].mxu0
  %v747 = vadd.f32 %v240, %v746
  %v748 = vpop.f32.mrb[0].mxu0
  %749 = vmatprep.mubr.bf16.mxu0 0
  %750 = vmatmul.mubr.bf16.gmra.mrb[0].mxu0 %v345
  %v751 = vpop.f32.mrb[0].mxu0
  %v752 = vadd.f32 %v240, %v751
  %v753 = vpop.f32.mrb[0].mxu0
  %v754 = vpop.f32.mrb[0].mxu0
  %v755 = vadd.f32 %v240, %v754
  %v756 = vpop.f32.mrb[0].mxu0
  %757 = vmatprep.mubr.bf16.mxu0 0
  %758 = vmatmul.mubr.bf16.gmra.mrb[0].mxu0 %v348
  %v759 = vpop.f32.mrb[0].mxu0
  %v760 = vadd.f32 %v240, %v759
  %v761 = vpop.f32.mrb[0].mxu0
  %v762 = vpop.f32.mrb[0].mxu0
  %v763 = vadd.f32 %v240, %v762
  %v764 = vpop.f32.mrb[0].mxu0
  %765 = vmatprep.mubr.bf16.mxu0 0
  %766 = vmatmul.mubr.bf16.gmra.mrb[0].mxu0 %v351
  %v767 = vpop.f32.mrb[0].mxu0
  %v768 = vadd.f32 %v240, %v767
  %v769 = vpop.f32.mrb[0].mxu0
  %v770 = vpop.f32.mrb[0].mxu0
  %v771 = vadd.f32 %v240, %v770
  %v772 = vpop.f32.mrb[0].mxu0
  %773 = vmatprep.mubr.bf16.mxu0 0
  %774 = vmatmul.mubr.bf16.gmra.mrb[0].mxu0 %v354
  %v775 = vpop.f32.mrb[0].mxu0
  %v776 = vadd.f32 %v240, %v775
  %v777 = vpop.f32.mrb[0].mxu0
  %v778 = vpop.f32.mrb[0].mxu0
  %v779 = vadd.f32 %v240, %v778
  %v780 = vpop.f32.mrb[0].mxu0
  %781 = vmatprep.mubr.bf16.mxu0 0
  %782 = vmatmul.mubr.bf16.gmra.mrb[0].mxu0 %v357
  %v783 = vpop.f32.mrb[0].mxu0
  %v784 = vadd.f32 %v240, %v783
  %v785 = vpop.f32.mrb[0].mxu0
  %v786 = vpop.f32.mrb[0].mxu0
  %v787 = vadd.f32 %v240, %v786
  %v788 = vpop.f32.mrb[0].mxu0
  %789 = vmatprep.mubr.bf16.mxu0 0
  %790 = vmatmul.mubr.bf16.gmra.mrb[0].mxu0 %v360
  %v791 = vpop.f32.mrb[0].mxu0
  %v792 = vadd.f32 %v240, %v791
  %v793 = vpop.f32.mrb[0].mxu0
  %v794 = vpop.f32.mrb[0].mxu0
  %v795 = vadd.f32 %v240, %v794
  %v796 = vpop.f32.mrb[0].mxu0
  %797 = vmatprep.mubr.bf16.mxu0 0
  %798 = vmatmul.mubr.bf16.gmra.mrb[0].mxu0 %v363
  %v799 = vpop.f32.mrb[0].mxu0
  %v800 = vadd.f32 %v240, %v799
  %v801 = vpop.f32.mrb[0].mxu0
  %v802 = vpop.f32.mrb[0].mxu0
  %v803 = vadd.f32 %v240, %v802
  %v804 = vpop.f32.mrb[0].mxu0
  %805 = vmatprep.mubr.bf16.mxu0 0
  %806 = vmatmul.mubr.bf16.gmra.mrb[0].mxu0 %v366
  %v807 = vpop.f32.mrb[0].mxu0
  %v808 = vadd.f32 %v240, %v807
  %v809 = vpop.f32.mrb[0].mxu0
  %v810 = vpop.f32.mrb[0].mxu0
  %v811 = vadd.f32 %v240, %v810
  %v812 = vpop.f32.mrb[0].mxu0
  %813 = vmatprep.mubr.bf16.mxu0 0
  %814 = vmatmul.mubr.bf16.gmra.mrb[0].mxu0 %v369
  %v815 = vpop.f32.mrb[0].mxu0
  %v816 = vadd.f32 %v240, %v815
  %v817 = vpop.f32.mrb[0].mxu0
  %v818 = vpop.f32.mrb[0].mxu0
  %v819 = vadd.f32 %v240, %v818
  %v820 = vpop.f32.mrb[0].mxu0
  %821 = vmatprep.mubr.bf16.mxu0 0
  %822 = vmatmul.mubr.bf16.gmra.mrb[0].mxu0 %v372
  %v823 = vpop.f32.mrb[0].mxu0
  %v824 = vadd.f32 %v240, %v823
  %v825 = vpop.f32.mrb[0].mxu0
  %v826 = vpop.f32.mrb[0].mxu0
  %v827 = vadd.f32 %v240, %v826
  %v828 = vpop.f32.mrb[0].mxu0
  %829 = vmatprep.mubr.bf16.mxu0 0
  %830 = vmatmul.mubr.bf16.gmra.mrb[0].mxu0 %v375
  %v831 = vpop.f32.mrb[0].mxu0
  %v832 = vadd.f32 %v240, %v831
  %v833 = vpop.f32.mrb[0].mxu0
  %v834 = vpop.f32.mrb[0].mxu0
  %v835 = vadd.f32 %v240, %v834
  %v836 = vpop.f32.mrb[0].mxu0
  %837 = vmatprep.mubr.bf16.mxu0 0
  %838 = vmatmul.mubr.bf16.gmra.mrb[0].mxu0 %v378
  %v839 = vpop.f32.mrb[0].mxu0
  %v840 = vadd.f32 %v240, %v839
  %v841 = vpop.f32.mrb[0].mxu0
  %v842 = vpop.f32.mrb[0].mxu0
  %v843 = vadd.f32 %v240, %v842
  %v844 = vpop.f32.mrb[0].mxu0
  %845 = vmatprep.mubr.bf16.mxu0 0
  %846 = vmatmul.mubr.bf16.gmra.mrb[0].mxu0 %v381
  %v847 = vpop.f32.mrb[0].mxu0
  %v848 = vadd.f32 %v240, %v847
  %v849 = vpop.f32.mrb[0].mxu0
  %v850 = vpop.f32.mrb[0].mxu0
  %v851 = vadd.f32 %v240, %v850
  %v852 = vpop.f32.mrb[0].mxu0
  %853 = vmatprep.mubr.bf16.mxu0 0
  %854 = vmatmul.mubr.bf16.gmra.mrb[0].mxu0 %v384
  %v855 = vpop.f32.mrb[0].mxu0
  %v856 = vadd.f32 %v240, %v855
  %v857 = vpop.f32.mrb[0].mxu0
  %v858 = vpop.f32.mrb[0].mxu0
  %v859 = vadd.f32 %v240, %v858
  %v860 = vpop.f32.mrb[0].mxu0
  %861 = vmatprep.mubr.bf16.mxu0 0
  %862 = vmatmul.mubr.bf16.gmra.mrb[0].mxu0 %v387
  %v863 = vpop.f32.mrb[0].mxu0
  %v864 = vadd.f32 %v240, %v863
  %v865 = vpop.f32.mrb[0].mxu0
  %v866 = vpop.f32.mrb[0].mxu0
  %v867 = vadd.f32 %v240, %v866
  %v868 = vpop.f32.mrb[0].mxu0
  %869 = vmatprep.mubr.bf16.mxu0 0
  %870 = vmatmul.mubr.bf16.gmra.mrb[0].mxu0 %v390
  %v871 = vpop.f32.mrb[0].mxu0
  %v872 = vadd.f32 %v240, %v871
  %v873 = vpop.f32.mrb[0].mxu0
  %v874 = vpop.f32.mrb[0].mxu0
  %v875 = vadd.f32 %v240, %v874
  %v876 = vpop.f32.mrb[0].mxu0
  %877 = vmatprep.mubr.bf16.mxu0 0
  %878 = vmatmul.mubr.bf16.gmra.mrb[0].mxu0 %v393
  %v879 = vpop.f32.mrb[0].mxu0
  %v880 = vadd.f32 %v240, %v879
  %v881 = vpop.f32.mrb[0].mxu0
  %v882 = vpop.f32.mrb[0].mxu0
  %v883 = vadd.f32 %v240, %v882
  %v884 = vpop.f32.mrb[0].mxu0
  %885 = vmatprep.mubr.bf16.mxu0 0
  %886 = vmatmul.mubr.bf16.gmra.mrb[0].mxu0 %v396
  %v887 = vpop.f32.mrb[0].mxu0
  %v888 = vadd.f32 %v240, %v887
  %v889 = vpop.f32.mrb[0].mxu0
  %v890 = vpop.f32.mrb[0].mxu0
  %v891 = vadd.f32 %v240, %v890
  %v892 = vpop.f32.mrb[0].mxu0
  %893 = vmatprep.mubr.bf16.mxu0 0
  %894 = vmatmul.mubr.bf16.gmra.mrb[0].mxu0 %v399
  %v895 = vpop.f32.mrb[0].mxu0
  %v896 = vadd.f32 %v240, %v895
  %v897 = vpop.f32.mrb[0].mxu0
  %v898 = vpop.f32.mrb[0].mxu0
  %v899 = vadd.f32 %v240, %v898
  %v900 = vpop.f32.mrb[0].mxu0
  %901 = vmatprep.mubr.bf16.mxu0 0
  %902 = vmatmul.mubr.bf16.gmra.mrb[0].mxu0 %v402
  %v903 = vpop.f32.mrb[0].mxu0
  %v904 = vadd.f32 %v240, %v903
  %v905 = vpop.f32.mrb[0].mxu0
  %v906 = vpop.f32.mrb[0].mxu0
  %v907 = vadd.f32 %v240, %v906
  %v908 = vpop.f32.mrb[0].mxu0
  %909 = vmatprep.mubr.bf16.mxu0 0
  %910 = vmatmul.mubr.bf16.gmra.mrb[0].mxu0 %v405
  %v911 = vpop.f32.mrb[0].mxu0
  %v912 = vadd.f32 %v240, %v911
  %v913 = vpop.f32.mrb[0].mxu0
  %v914 = vpop.f32.mrb[0].mxu0
  %v915 = vadd.f32 %v240, %v914
  %v916 = vpop.f32.mrb[0].mxu0
  %917 = vmatprep.mubr.bf16.mxu0 0
  %918 = vmatmul.mubr.bf16.gmra.mrb[0].mxu0 %v408
  %v919 = vpop.f32.mrb[0].mxu0
  %v920 = vadd.f32 %v240, %v919
  %v921 = vpop.f32.mrb[0].mxu0
  %v922 = vpop.f32.mrb[0].mxu0
  %v923 = vadd.f32 %v240, %v922
  %v924 = vpop.f32.mrb[0].mxu0
  %925 = vmatprep.mubr.bf16.mxu0 0
  %926 = vmatmul.mubr.bf16.gmra.mrb[0].mxu0 %v411
  %v927 = vpop.f32.mrb[0].mxu0
  %v928 = vadd.f32 %v240, %v927
  %v929 = vpop.f32.mrb[0].mxu0
  %v930 = vpop.f32.mrb[0].mxu0
  %v931 = vadd.f32 %v240, %v930
  %v932 = vpop.f32.mrb[0].mxu0
  %933 = vmatprep.mubr.bf16.mxu0 0
  %934 = vmatmul.mubr.bf16.gmra.mrb[0].mxu0 %v414
  %v935 = vpop.f32.mrb[0].mxu0
  %v936 = vadd.f32 %v240, %v935
  %v937 = vpop.f32.mrb[0].mxu0
  %v938 = vpop.f32.mrb[0].mxu0
  %v939 = vadd.f32 %v240, %v938
  %v940 = vpop.f32.mrb[0].mxu0
  %941 = vmatprep.mubr.bf16.mxu0 0
  %942 = vmatmul.mubr.bf16.gmra.mrb[0].mxu0 %v417
  %v943 = vpop.f32.mrb[0].mxu0
  %v944 = vadd.f32 %v240, %v943
  %v945 = vpop.f32.mrb[0].mxu0
  %v946 = vpop.f32.mrb[0].mxu0
  %v947 = vadd.f32 %v240, %v946
  %v948 = vpop.f32.mrb[0].mxu0
  %949 = vmatprep.mubr.bf16.mxu0 0
  %950 = vmatmul.mubr.bf16.gmra.mrb[0].mxu0 %v420
  %v951 = vpop.f32.mrb[0].mxu0
  %v952 = vadd.f32 %v240, %v951
  %v953 = vpop.f32.mrb[0].mxu0
  %v954 = vpop.f32.mrb[0].mxu0
  %v955 = vadd.f32 %v240, %v954
  %v956 = vpop.f32.mrb[0].mxu0
  %957 = vmatprep.mubr.bf16.mxu0 0
  %958 = vmatmul.mubr.bf16.gmra.mrb[0].mxu0 %v423
  %v959 = vpop.f32.mrb[0].mxu0
  %v960 = vadd.f32 %v240, %v959
  %v961 = vpop.f32.mrb[0].mxu0
  %v962 = vpop.f32.mrb[0].mxu0
  %v963 = vadd.f32 %v240, %v962
  %v964 = vpop.f32.mrb[0].mxu0
  %965 = vmatprep.mubr.bf16.mxu0 0
  %966 = vmatmul.mubr.bf16.gmra.mrb[0].mxu0 %v426
  %v967 = vpop.f32.mrb[0].mxu0
  %v968 = vadd.f32 %v240, %v967
  %v969 = vpop.f32.mrb[0].mxu0
  %v970 = vpop.f32.mrb[0].mxu0
  %v971 = vadd.f32 %v240, %v970
  %v972 = vpop.f32.mrb[0].mxu0
  %973 = vmatprep.mubr.bf16.mxu0 0
  %974 = vmatmul.mubr.bf16.gmra.mrb[0].mxu0 %v429
  %v975 = vpop.f32.mrb[0].mxu0
  %v976 = vadd.f32 %v240, %v975
  %v977 = vpop.f32.mrb[0].mxu0
  %v978 = vpop.f32.mrb[0].mxu0
  %v979 = vadd.f32 %v240, %v978
  %v980 = vpop.f32.mrb[0].mxu0
  %981 = vmatprep.mubr.bf16.mxu0 0
  %982 = vmatmul.mubr.bf16.gmra.mrb[0].mxu0 %v432
  %v983 = vpop.f32.mrb[0].mxu0
  %v984 = vadd.f32 %v240, %v983
  %v985 = vpop.f32.mrb[0].mxu0
  %v986 = vpop.f32.mrb[0].mxu0
  %v987 = vadd.f32 %v240, %v986
  %v988 = vpop.f32.mrb[0].mxu0
  %989 = vmatprep.mubr.bf16.mxu0 0
  %990 = vmatmul.mubr.bf16.gmra.mrb[0].mxu0 %v435
  %v991 = vpop.f32.mrb[0].mxu0
  %v992 = vadd.f32 %v240, %v991
  %v993 = vpop.f32.mrb[0].mxu0
  %v994 = vpop.f32.mrb[0].mxu0
  %v995 = vadd.f32 %v240, %v994
  %v996 = vpop.f32.mrb[0].mxu0
  %997 = vmatprep.mubr.bf16.mxu0 0
  %998 = vmatmul.mubr.bf16.gmra.mrb[0].mxu0 %v438
  %v999 = vpop.f32.mrb[0].mxu0
  %v1000 = vadd.f32 %v240, %v999
  %v1001 = vpop.f32.mrb[0].mxu0
  %v1002 = vpop.f32.mrb[0].mxu0
  %v1003 = vadd.f32 %v240, %v1002
  %v1004 = vpop.f32.mrb[0].mxu0
  %1005 = vmatprep.mubr.bf16.mxu0 0
  %1006 = vmatmul.mubr.bf16.gmra.mrb[0].mxu0 %v441
  %v1007 = vpop.f32.mrb[0].mxu0
  %v1008 = vadd.f32 %v240, %v1007
  %v1009 = vpop.f32.mrb[0].mxu0
  %v1010 = vpop.f32.mrb[0].mxu0
  %v1011 = vadd.f32 %v240, %v1010
  %v1012 = vpop.f32.mrb[0].mxu0
  %1013 = vmatprep.mubr.bf16.mxu0 0
  %1014 = vmatmul.mubr.bf16.gmra.mrb[0].mxu0 %v444
  %v1015 = vpop.f32.mrb[0].mxu0
  %v1016 = vadd.f32 %v240, %v1015
  %v1017 = vpop.f32.mrb[0].mxu0
  %v1018 = vpop.f32.mrb[0].mxu0
  %v1019 = vadd.f32 %v240, %v1018
  %v1020 = vpop.f32.mrb[0].mxu0
  %1021 = vmatprep.mubr.bf16.mxu0 0
  %1022 = vmatmul.mubr.bf16.gmra.mrb[0].mxu0 %v447
  %v1023 = vpop.f32.mrb[0].mxu0
  %v1024 = vadd.f32 %v240, %v1023
  %v1025 = vpop.f32.mrb[0].mxu0
  %v1026 = vpop.f32.mrb[0].mxu0
  %v1027 = vadd.f32 %v240, %v1026
  %v1028 = vpop.f32.mrb[0].mxu0
  %1029 = vmatprep.mubr.bf16.mxu0 0
  %1030 = vmatmul.mubr.bf16.gmra.mrb[0].mxu0 %v450
  %v1031 = vpop.f32.mrb[0].mxu0
  %v1032 = vadd.f32 %v240, %v1031
  %v1033 = vpop.f32.mrb[0].mxu0
  %v1034 = vpop.f32.mrb[0].mxu0
  %v1035 = vadd.f32 %v240, %v1034
  %v1036 = vpop.f32.mrb[0].mxu0
  %1037 = vmatprep.mubr.bf16.mxu0 0
  %1038 = vmatmul.mubr.bf16.gmra.mrb[0].mxu0 %v453
  %v1039 = vpop.f32.mrb[0].mxu0
  %v1040 = vadd.f32 %v240, %v1039
  %v1041 = vpop.f32.mrb[0].mxu0
  %v1042 = vpop.f32.mrb[0].mxu0
  %v1043 = vadd.f32 %v240, %v1042
  %v1044 = vpop.f32.mrb[0].mxu0
  %1045 = vmatprep.mubr.bf16.mxu0 0
  %1046 = vmatmul.mubr.bf16.gmra.mrb[0].mxu0 %v456
  %v1047 = vpop.f32.mrb[0].mxu0
  %v1048 = vadd.f32 %v240, %v1047
  %v1049 = vpop.f32.mrb[0].mxu0
  %v1050 = vpop.f32.mrb[0].mxu0
  %v1051 = vadd.f32 %v240, %v1050
  %v1052 = vpop.f32.mrb[0].mxu0
  %1053 = vmatprep.mubr.bf16.mxu0 0
  %1054 = vmatmul.mubr.bf16.gmra.mrb[0].mxu0 %v459
  %v1055 = vpop.f32.mrb[0].mxu0
  %v1056 = vadd.f32 %v240, %v1055
  %v1057 = vpop.f32.mrb[0].mxu0
  %v1058 = vpop.f32.mrb[0].mxu0
  %v1059 = vadd.f32 %v240, %v1058
  %v1060 = vpop.f32.mrb[0].mxu0
  %1061 = vmatprep.mubr.bf16.mxu0 0
  %1062 = vmatmul.mubr.bf16.gmra.mrb[0].mxu0 %v462
  %v1063 = vpop.f32.mrb[0].mxu0
  %v1064 = vadd.f32 %v240, %v1063
  %v1065 = vpop.f32.mrb[0].mxu0
  %v1066 = vpop.f32.mrb[0].mxu0
  %v1067 = vadd.f32 %v240, %v1066
  %v1068 = vpop.f32.mrb[0].mxu0
  %1069 = vmatprep.mubr.bf16.mxu0 0
  %1070 = vmatmul.mubr.bf16.gmra.mrb[0].mxu0 %v465
  %v1071 = vpop.f32.mrb[0].mxu0
  %v1072 = vadd.f32 %v240, %v1071
  %v1073 = vpop.f32.mrb[0].mxu0
  %v1074 = vpop.f32.mrb[0].mxu0
  %v1075 = vadd.f32 %v240, %v1074
  %v1076 = vpop.f32.mrb[0].mxu0
  %1077 = vmatprep.mubr.bf16.mxu0 0
  %1078 = vmatmul.mubr.bf16.gmra.mrb[0].mxu0 %v468
  %v1079 = vpop.f32.mrb[0].mxu0
  %v1080 = vadd.f32 %v240, %v1079
  %v1081 = vpop.f32.mrb[0].mxu0
  %v1082 = vpop.f32.mrb[0].mxu0
  %v1083 = vadd.f32 %v240, %v1082
  %v1084 = vpop.f32.mrb[0].mxu0
  %1085 = vdwg.mxu0
  %v1086 = vmax.f32 %v512, 0.0
  %v1087 = vmax.f32 %v515, 0.0
  %v1088 = vmax.f32 %v520, 0.0
  %v1089 = vmax.f32 %v523, 0.0
  %v1090 = vmax.f32 %v528, 0.0
  %v1091 = vmax.f32 %v531, 0.0
  %v1092 = vmax.f32 %v536, 0.0
  %v1093 = vmax.f32 %v539, 0.0
  %v1094 = vmax.f32 %v544, 0.0
  %v1095 = vmax.f32 %v547, 0.0
  %v1096 = vmax.f32 %v552, 0.0
  %v1097 = vmax.f32 %v555, 0.0
  %v1098 = vmax.f32 %v560, 0.0
  %v1099 = vmax.f32 %v563, 0.0
  %v1100 = vmax.f32 %v568, 0.0
  %v1101 = vmax.f32 %v571, 0.0
  %v1102 = vmax.f32 %v576, 0.0
  %v1103 = vmax.f32 %v579, 0.0
  %v1104 = vmax.f32 %v584, 0.0
  %v1105 = vmax.f32 %v587, 0.0
  %v1106 = vmax.f32 %v592, 0.0
  %v1107 = vmax.f32 %v595, 0.0
  %v1108 = vmax.f32 %v600, 0.0
  %v1109 = vmax.f32 %v603, 0.0
  %v1110 = vmax.f32 %v608, 0.0
  %v1111 = vmax.f32 %v611, 0.0
  %v1112 = vmax.f32 %v616, 0.0
  %v1113 = vmax.f32 %v619, 0.0
  %v1114 = vmax.f32 %v624, 0.0
  %v1115 = vmax.f32 %v627, 0.0
  %v1116 = vmax.f32 %v632, 0.0
  %v1117 = vmax.f32 %v635, 0.0
  %v1118 = vmax.f32 %v640, 0.0
  %v1119 = vmax.f32 %v643, 0.0
  %v1120 = vmax.f32 %v648, 0.0
  %v1121 = vmax.f32 %v651, 0.0
  %v1122 = vmax.f32 %v656, 0.0
  %v1123 = vmax.f32 %v659, 0.0
  %v1124 = vmax.f32 %v664, 0.0
  %v1125 = vmax.f32 %v667, 0.0
  %v1126 = vmax.f32 %v672, 0.0
  %v1127 = vmax.f32 %v675, 0.0
  %v1128 = vmax.f32 %v680, 0.0
  %v1129 = vmax.f32 %v683, 0.0
  %v1130 = vmax.f32 %v688, 0.0
  %v1131 = vmax.f32 %v691, 0.0
  %v1132 = vmax.f32 %v696, 0.0
  %v1133 = vmax.f32 %v699, 0.0
  %v1134 = vmax.f32 %v704, 0.0
  %v1135 = vmax.f32 %v707, 0.0
  %v1136 = vmax.f32 %v712, 0.0
  %v1137 = vmax.f32 %v715, 0.0
  %v1138 = vmax.f32 %v720, 0.0
  %v1139 = vmax.f32 %v723, 0.0
  %v1140 = vmax.f32 %v728, 0.0
  %v1141 = vmax.f32 %v731, 0.0
  %v1142 = vmax.f32 %v736, 0.0
  %v1143 = vmax.f32 %v739, 0.0
  %v1144 = vmax.f32 %v744, 0.0
  %v1145 = vmax.f32 %v747, 0.0
  %v1146 = vmax.f32 %v752, 0.0
  %v1147 = vmax.f32 %v755, 0.0
  %v1148 = vmax.f32 %v760, 0.0
  %v1149 = vmax.f32 %v763, 0.0
  %v1150 = vmax.f32 %v768, 0.0
  %v1151 = vmax.f32 %v771, 0.0
  %v1152 = vmax.f32 %v776, 0.0
  %v1153 = vmax.f32 %v779, 0.0
  %v1154 = vmax.f32 %v784, 0.0
  %v1155 = vmax.f32 %v787, 0.0
  %v1156 = vmax.f32 %v792, 0.0
  %v1157 = vmax.f32 %v795, 0.0
  %v1158 = vmax.f32 %v800, 0.0
  %v1159 = vmax.f32 %v803, 0.0
  %v1160 = vmax.f32 %v808, 0.0
  %v1161 = vmax.f32 %v811, 0.0
  %v1162 = vmax.f32 %v816, 0.0
  %v1163 = vmax.f32 %v819, 0.0
  %v1164 = vmax.f32 %v824, 0.0
  %v1165 = vmax.f32 %v827, 0.0
  %v1166 = vmax.f32 %v832, 0.0
  %v1167 = vmax.f32 %v835, 0.0
  %v1168 = vmax.f32 %v840, 0.0
  %v1169 = vmax.f32 %v843, 0.0
  %v1170 = vmax.f32 %v848, 0.0
  %v1171 = vmax.f32 %v851, 0.0
  %v1172 = vmax.f32 %v856, 0.0
  %v1173 = vmax.f32 %v859, 0.0
  %v1174 = vmax.f32 %v864, 0.0
  %v1175 = vmax.f32 %v867, 0.0
  %v1176 = vmax.f32 %v872, 0.0
  %v1177 = vmax.f32 %v875, 0.0
  %v1178 = vmax.f32 %v880, 0.0
  %v1179 = vmax.f32 %v883, 0.0
  %v1180 = vmax.f32 %v888, 0.0
  %v1181 = vmax.f32 %v891, 0.0
  %v1182 = vmax.f32 %v896, 0.0
  %v1183 = vmax.f32 %v899, 0.0
  %v1184 = vmax.f32 %v904, 0.0
  %v1185 = vmax.f32 %v907, 0.0
  %v1186 = vmax.f32 %v912, 0.0
  %v1187 = vmax.f32 %v915, 0.0
  %v1188 = vmax.f32 %v920, 0.0
  %v1189 = vmax.f32 %v923, 0.0
  %v1190 = vmax.f32 %v928, 0.0
  %v1191 = vmax.f32 %v931, 0.0
  %v1192 = vmax.f32 %v936, 0.0
  %v1193 = vmax.f32 %v939, 0.0
  %v1194 = vmax.f32 %v944, 0.0
  %v1195 = vmax.f32 %v947, 0.0
  %v1196 = vmax.f32 %v952, 0.0
  %v1197 = vmax.f32 %v955, 0.0
  %v1198 = vmax.f32 %v960, 0.0
  %v1199 = vmax.f32 %v963, 0.0
  %v1200 = vmax.f32 %v968, 0.0
  %v1201 = vmax.f32 %v971, 0.0
  %v1202 = vmax.f32 %v976, 0.0
  %v1203 = vmax.f32 %v979, 0.0
  %v1204 = vmax.f32 %v984, 0.0
  %v1205 = vmax.f32 %v987, 0.0
  %v1206 = vmax.f32 %v992, 0.0
  %v1207 = vmax.f32 %v995, 0.0
  %v1208 = vmax.f32 %v1000, 0.0
  %v1209 = vmax.f32 %v1003, 0.0
  %v1210 = vmax.f32 %v1008, 0.0
  %v1211 = vmax.f32 %v1011, 0.0
  %v1212 = vmax.f32 %v1016, 0.0
  %v1213 = vmax.f32 %v1019, 0.0
  %v1214 = vmax.f32 %v1024, 0.0
  %v1215 = vmax.f32 %v1027, 0.0
  %v1216 = vmax.f32 %v1032, 0.0
  %v1217 = vmax.f32 %v1035, 0.0
  %v1218 = vmax.f32 %v1040, 0.0
  %v1219 = vmax.f32 %v1043, 0.0
  %v1220 = vmax.f32 %v1048, 0.0
  %v1221 = vmax.f32 %v1051, 0.0
  %v1222 = vmax.f32 %v1056, 0.0
  %v1223 = vmax.f32 %v1059, 0.0
  %v1224 = vmax.f32 %v1064, 0.0
  %v1225 = vmax.f32 %v1067, 0.0
  %v1226 = vmax.f32 %v1072, 0.0
  %v1227 = vmax.f32 %v1075, 0.0
  %v1228 = vmax.f32 %v1080, 0.0
  %v1229 = vmax.f32 %v1083, 0.0
  %1230 = vst [vmem:[%s3] sm:$0xff] %v1086
  %1231 = vst [vmem:[%s3 + $0x8] sm:$0xff] %v1087
  %1232 = vst [vmem:[%s3 + $0x10] sm:$0xff] %v1088
  %1233 = vst [vmem:[%s3 + $0x18] sm:$0xff] %v1089
  %1234 = vst [vmem:[%s3 + $0x20] sm:$0xff] %v1090
  %1235 = vst [vmem:[%s3 + $0x28] sm:$0xff] %v1091
  %1236 = vst [vmem:[%s3 + $0x30] sm:$0xff] %v1092
  %1237 = vst [vmem:[%s3 + $0x38] sm:$0xff] %v1093
  %1238 = vst [vmem:[%s3 + $0x40] sm:$0xff] %v1094
  %1239 = vst [vmem:[%s3 + $0x48] sm:$0xff] %v1095
  %1240 = vst [vmem:[%s3 + $0x50] sm:$0xff] %v1096
  %1241 = vst [vmem:[%s3 + $0x58] sm:$0xff] %v1097
  %1242 = vst [vmem:[%s3 + $0x60] sm:$0xff] %v1098
  %1243 = vst [vmem:[%s3 + $0x68] sm:$0xff] %v1099
  %1244 = vst [vmem:[%s3 + $0x70] sm:$0xff] %v1100
  %1245 = vst [vmem:[%s3 + $0x78] sm:$0xff] %v1101
  %1246 = vst [vmem:[%s3 + $0x80] sm:$0xff] %v1102
  %1247 = vst [vmem:[%s3 + $0x88] sm:$0xff] %v1103
  %1248 = vst [vmem:[%s3 + $0x90] sm:$0xff] %v1104
  %1249 = vst [vmem:[%s3 + $0x98] sm:$0xff] %v1105
  %1250 = vst [vmem:[%s3 + $0xa0] sm:$0xff] %v1106
  %1251 = vst [vmem:[%s3 + $0xa8] sm:$0xff] %v1107
  %1252 = vst [vmem:[%s3 + $0xb0] sm:$0xff] %v1108
  %1253 = vst [vmem:[%s3 + $0xb8] sm:$0xff] %v1109
  %1254 = vst [vmem:[%s3 + $0xc0] sm:$0xff] %v1110
  %1255 = vst [vmem:[%s3 + $0xc8] sm:$0xff] %v1111
  %1256 = vst [vmem:[%s3 + $0xd0] sm:$0xff] %v1112
  %1257 = vst [vmem:[%s3 + $0xd8] sm:$0xff] %v1113
  %1258 = vst [vmem:[%s3 + $0xe0] sm:$0xff] %v1114
  %1259 = vst [vmem:[%s3 + $0xe8] sm:$0xff] %v1115
  %1260 = vst [vmem:[%s3 + $0xf0] sm:$0xff] %v1116
  %1261 = vst [vmem:[%s3 + $0xf8] sm:$0xff] %v1117
  %1262 = vst [vmem:[%s3 + $0x100] sm:$0xff] %v1118
  %1263 = vst [vmem:[%s3 + $0x108] sm:$0xff] %v1119
  %1264 = vst [vmem:[%s3 + $0x110] sm:$0xff] %v1120
  %1265 = vst [vmem:[%s3 + $0x118] sm:$0xff] %v1121
  %1266 = vst [vmem:[%s3 + $0x120] sm:$0xff] %v1122
  %1267 = vst [vmem:[%s3 + $0x128] sm:$0xff] %v1123
  %1268 = vst [vmem:[%s3 + $0x130] sm:$0xff] %v1124
  %1269 = vst [vmem:[%s3 + $0x138] sm:$0xff] %v1125
  %1270 = vst [vmem:[%s3 + $0x140] sm:$0xff] %v1126
  %1271 = vst [vmem:[%s3 + $0x148] sm:$0xff] %v1127
  %1272 = vst [vmem:[%s3 + $0x150] sm:$0xff] %v1128
  %1273 = vst [vmem:[%s3 + $0x158] sm:$0xff] %v1129
  %1274 = vst [vmem:[%s3 + $0x160] sm:$0xff] %v1130
  %1275 = vst [vmem:[%s3 + $0x168] sm:$0xff] %v1131
  %1276 = vst [vmem:[%s3 + $0x170] sm:$0xff] %v1132
  %1277 = vst [vmem:[%s3 + $0x178] sm:$0xff] %v1133
  %1278 = vst [vmem:[%s3 + $0x180] sm:$0xff] %v1134
  %1279 = vst [vmem:[%s3 + $0x188] sm:$0xff] %v1135
  %1280 = vst [vmem:[%s3 + $0x190] sm:$0xff] %v1136
  %1281 = vst [vmem:[%s3 + $0x198] sm:$0xff] %v1137
  %1282 = vst [vmem:[%s3 + $0x1a0] sm:$0xff] %v1138
  %1283 = vst [vmem:[%s3 + $0x1a8] sm:$0xff] %v1139
  %1284 = vst [vmem:[%s3 + $0x1b0] sm:$0xff] %v1140
  %1285 = vst [vmem:[%s3 + $0x1b8] sm:$0xff] %v1141
  %1286 = vst [vmem:[%s3 + $0x1c0] sm:$0xff] %v1142
  %1287 = vst [vmem:[%s3 + $0x1c8] sm:$0xff] %v1143
  %1288 = vst [vmem:[%s3 + $0x1d0] sm:$0xff] %v1144
  %1289 = vst [vmem:[%s3 + $0x1d8] sm:$0xff] %v1145
  %1290 = vst [vmem:[%s3 + $0x1e0] sm:$0xff] %v1146
  %1291 = vst [vmem:[%s3 + $0x1e8] sm:$0xff] %v1147
  %1292 = vst [vmem:[%s3 + $0x1f0] sm:$0xff] %v1148
  %1293 = vst [vmem:[%s3 + $0x1f8] sm:$0xff] %v1149
  %1294 = vst [vmem:[%s3 + $0x200] sm:$0xff] %v1150
  %1295 = vst [vmem:[%s3 + $0x208] sm:$0xff] %v1151
  %1296 = vst [vmem:[%s3 + $0x210] sm:$0xff] %v1152
  %1297 = vst [vmem:[%s3 + $0x218] sm:$0xff] %v1153
  %1298 = vst [vmem:[%s3 + $0x220] sm:$0xff] %v1154
  %1299 = vst [vmem:[%s3 + $0x228] sm:$0xff] %v1155
  %1300 = vst [vmem:[%s3 + $0x230] sm:$0xff] %v1156
  %1301 = vst [vmem:[%s3 + $0x238] sm:$0xff] %v1157
  %1302 = vst [vmem:[%s3 + $0x240] sm:$0xff] %v1158
  %1303 = vst [vmem:[%s3 + $0x248] sm:$0xff] %v1159
  %1304 = vst [vmem:[%s3 + $0x250] sm:$0xff] %v1160
  %1305 = vst [vmem:[%s3 + $0x258] sm:$0xff] %v1161
  %1306 = vst [vmem:[%s3 + $0x260] sm:$0xff] %v1162
  %1307 = vst [vmem:[%s3 + $0x268] sm:$0xff] %v1163
  %1308 = vst [vmem:[%s3 + $0x270] sm:$0xff] %v1164
  %1309 = vst [vmem:[%s3 + $0x278] sm:$0xff] %v1165
  %1310 = vst [vmem:[%s3 + $0x280] sm:$0xff] %v1166
  %1311 = vst [vmem:[%s3 + $0x288] sm:$0xff] %v1167
  %1312 = vst [vmem:[%s3 + $0x290] sm:$0xff] %v1168
  %1313 = vst [vmem:[%s3 + $0x298] sm:$0xff] %v1169
  %1314 = vst [vmem:[%s3 + $0x2a0] sm:$0xff] %v1170
  %1315 = vst [vmem:[%s3 + $0x2a8] sm:$0xff] %v1171
  %1316 = vst [vmem:[%s3 + $0x2b0] sm:$0xff] %v1172
  %1317 = vst [vmem:[%s3 + $0x2b8] sm:$0xff] %v1173
  %1318 = vst [vmem:[%s3 + $0x2c0] sm:$0xff] %v1174
  %1319 = vst [vmem:[%s3 + $0x2c8] sm:$0xff] %v1175
  %1320 = vst [vmem:[%s3 + $0x2d0] sm:$0xff] %v1176
  %1321 = vst [vmem:[%s3 + $0x2d8] sm:$0xff] %v1177
  %1322 = vst [vmem:[%s3 + $0x2e0] sm:$0xff] %v1178
  %1323 = vst [vmem:[%s3 + $0x2e8] sm:$0xff] %v1179
  %1324 = vst [vmem:[%s3 + $0x2f0] sm:$0xff] %v1180
  %1325 = vst [vmem:[%s3 + $0x2f8] sm:$0xff] %v1181
  %1326 = vst [vmem:[%s3 + $0x300] sm:$0xff] %v1182
  %1327 = vst [vmem:[%s3 + $0x308] sm:$0xff] %v1183
  %1328 = vst [vmem:[%s3 + $0x310] sm:$0xff] %v1184
  %1329 = vst [vmem:[%s3 + $0x318] sm:$0xff] %v1185
  %1330 = vst [vmem:[%s3 + $0x320] sm:$0xff] %v1186
  %1331 = vst [vmem:[%s3 + $0x328] sm:$0xff] %v1187
  %1332 = vst [vmem:[%s3 + $0x330] sm:$0xff] %v1188
  %1333 = vst [vmem:[%s3 + $0x338] sm:$0xff] %v1189
  %1334 = vst [vmem:[%s3 + $0x340] sm:$0xff] %v1190
  %1335 = vst [vmem:[%s3 + $0x348] sm:$0xff] %v1191
  %1336 = vst [vmem:[%s3 + $0x350] sm:$0xff] %v1192
  %1337 = vst [vmem:[%s3 + $0x358] sm:$0xff] %v1193
  %1338 = vst [vmem:[%s3 + $0x360] sm:$0xff] %v1194
  %1339 = vst [vmem:[%s3 + $0x368] sm:$0xff] %v1195
  %1340 = vst [vmem:[%s3 + $0x370] sm:$0xff] %v1196
  %1341 = vst [vmem:[%s3 + $0x378] sm:$0xff] %v1197
  %1342 = vst [vmem:[%s3 + $0x380] sm:$0xff] %v1198
  %1343 = vst [vmem:[%s3 + $0x388] sm:$0xff] %v1199
  %1344 = vst [vmem:[%s3 + $0x390] sm:$0xff] %v1200
  %1345 = vst [vmem:[%s3 + $0x398] sm:$0xff] %v1201
  %1346 = vst [vmem:[%s3 + $0x3a0] sm:$0xff] %v1202
  %1347 = vst [vmem:[%s3 + $0x3a8] sm:$0xff] %v1203
  %1348 = vst [vmem:[%s3 + $0x3b0] sm:$0xff] %v1204
  %1349 = vst [vmem:[%s3 + $0x3b8] sm:$0xff] %v1205
  %1350 = vst [vmem:[%s3 + $0x3c0] sm:$0xff] %v1206
  %1351 = vst [vmem:[%s3 + $0x3c8] sm:$0xff] %v1207
  %1352 = vst [vmem:[%s3 + $0x3d0] sm:$0xff] %v1208
  %1353 = vst [vmem:[%s3 + $0x3d8] sm:$0xff] %v1209
  %1354 = vst [vmem:[%s3 + $0x3e0] sm:$0xff] %v1210
  %1355 = vst [vmem:[%s3 + $0x3e8] sm:$0xff] %v1211
  %1356 = vst [vmem:[%s3 + $0x3f0] sm:$0xff] %v1212
  %1357 = vst [vmem:[%s3 + $0x3f8] sm:$0xff] %v1213
  %1358 = vst [vmem:[%s3 + $0x400] sm:$0xff] %v1214
  %1359 = vst [vmem:[%s3 + $0x408] sm:$0xff] %v1215
  %1360 = vst [vmem:[%s3 + $0x410] sm:$0xff] %v1216
  %1361 = vst [vmem:[%s3 + $0x418] sm:$0xff] %v1217
  %1362 = vst [vmem:[%s3 + $0x420] sm:$0xff] %v1218
  %1363 = vst [vmem:[%s3 + $0x428] sm:$0xff] %v1219
  %1364 = vst [vmem:[%s3 + $0x430] sm:$0xff] %v1220
  %1365 = vst [vmem:[%s3 + $0x438] sm:$0xff] %v1221
  %1366 = vst [vmem:[%s3 + $0x440] sm:$0xff] %v1222
  %1367 = vst [vmem:[%s3 + $0x448] sm:$0xff] %v1223
  %1368 = vst [vmem:[%s3 + $0x450] sm:$0xff] %v1224
  %1369 = vst [vmem:[%s3 + $0x458] sm:$0xff] %v1225
  %1370 = vst [vmem:[%s3 + $0x460] sm:$0xff] %v1226
  %1371 = vst [vmem:[%s3 + $0x468] sm:$0xff] %v1227
  %1372 = vst [vmem:[%s3 + $0x470] sm:$0xff] %v1228
  %1373 = vst [vmem:[%s3 + $0x478] sm:$0xff] %v1229
  // Predicated region
  $region14: #{net_forward.12} parent=0 // pred_check
    _
  $region15: #{net_forward.12} parent=0 // pred_check_branch
    %1375 = sbr.rel (0) target = $region17
  $region16: #{net_forward.12} parent=0 // pred_region
    _
  $region17: #{net_forward.12} parent=0 // pred_fallthru
    _
  // Predicated region
  $region18: #{net_forward.12} parent=0 // pred_check
    _
  $region19: #{net_forward.12} parent=0 // pred_check_branch
    %1377 = sbr.rel (0) target = $region21
  $region20: #{net_forward.12} parent=0 // pred_region
    _
  $region21: #{net_forward.12} parent=0 // pred_fallthru
    _

// kernel: net_forward.13
$region0: #{net_forward.13}
  #allocation0 [shape = 'u32[]', space=smem, size = 0x4, offset = 0x4, fixed_abs, tag = 'smem constant byte address 0x4 - core index']
  #allocation1 [shape = 'u32[144,128]{1,0:T(1,128)}', space=vmem, size = 0x12000, scoped, tag = 'internal scratch']
  %s0 = inlined_call_operand.vmem [shape: f32[128,250], index: 0, kind: input, shape index: {}]
  %s1 = inlined_call_operand.vmem [shape: bf16[250,128], index: 1, kind: input, shape index: {}]
  %s2 = inlined_call_operand.vmem [shape: f32[1,128], index: 2, kind: input, shape index: {}]
  %s3 = inlined_call_operand.vmem [shape: f32[128,128], index: 3, kind: output, shape index: {}]
  %s4 = sld [smem:[#allocation0]]
  $region22: #{net_forward.13} parent=0
    _
  %s6 = ssub.s32 1, %s4
  %s7 = scalar_select 0, %s6, %s4
  // Predicated region
  $region2: #{net_forward.13} parent=0 // pred_check
    _
  $region3: #{net_forward.13} parent=0 // pred_check_branch
    %9 = sbr.rel (0) target = $region5
  $region4: #{net_forward.13} parent=0 // pred_region
    _
  $region5: #{net_forward.13} parent=0 // pred_fallthru
    _
  // Predicated region
  $region6: #{net_forward.13} parent=0 // pred_check
    _
  $region7: #{net_forward.13} parent=0 // pred_check_branch
    %11 = sbr.rel (0) target = $region9
  $region8: #{net_forward.13} parent=0 // pred_region
    _
  $region9: #{net_forward.13} parent=0 // pred_fallthru
    _
  // Predicated region
  $region10: #{net_forward.13} parent=0 // pred_check
    _
  $region11: #{net_forward.13} parent=0 // pred_check_branch
    %13 = sbr.rel (0) target = $region13
  $region12: #{net_forward.13} parent=0 // pred_region
    _
  $region13: #{net_forward.13} parent=0 // pred_fallthru
    _
  %v15 = vld [vmem:[%s0] sm:$0xff]
  %v16 = vld [vmem:[%s0 + $0x8] sm:$0xff]
  %v17 = vld [vmem:[%s0 + $0x10] sm:$0xff]
  %v18 = vld [vmem:[%s0 + $0x18] sm:$0xff]
  %v19 = vld [vmem:[%s0 + $0x20] sm:$0xff]
  %v20 = vld [vmem:[%s0 + $0x28] sm:$0xff]
  %v21 = vld [vmem:[%s0 + $0x30] sm:$0xff]
  %v22 = vld [vmem:[%s0 + $0x38] sm:$0xff]
  %v23 = vld [vmem:[%s0 + $0x40] sm:$0xff]
  %v24 = vld [vmem:[%s0 + $0x48] sm:$0xff]
  %v25 = vld [vmem:[%s0 + $0x50] sm:$0xff]
  %v26 = vld [vmem:[%s0 + $0x58] sm:$0xff]
  %v27 = vld [vmem:[%s0 + $0x60] sm:$0xff]
  %v28 = vld [vmem:[%s0 + $0x68] sm:$0xff]
  %v29 = vld [vmem:[%s0 + $0x70] sm:$0xff]
  %v30 = vld [vmem:[%s0 + $0x78] sm:$0xff]
  %v31 = vld [vmem:[%s0 + $0x80] sm:$0xff]
  %v32 = vld [vmem:[%s0 + $0x88] sm:$0xff]
  %v33 = vld [vmem:[%s0 + $0x90] sm:$0xff]
  %v34 = vld [vmem:[%s0 + $0x98] sm:$0xff]
  %v35 = vld [vmem:[%s0 + $0xa0] sm:$0xff]
  %v36 = vld [vmem:[%s0 + $0xa8] sm:$0xff]
  %v37 = vld [vmem:[%s0 + $0xb0] sm:$0xff]
  %v38 = vld [vmem:[%s0 + $0xb8] sm:$0xff]
  %v39 = vld [vmem:[%s0 + $0xc0] sm:$0xff]
  %v40 = vld [vmem:[%s0 + $0xc8] sm:$0xff]
  %v41 = vld [vmem:[%s0 + $0xd0] sm:$0xff]
  %v42 = vld [vmem:[%s0 + $0xd8] sm:$0xff]
  %v43 = vld [vmem:[%s0 + $0xe0] sm:$0xff]
  %v44 = vld [vmem:[%s0 + $0xe8] sm:$0xff]
  %v45 = vld [vmem:[%s0 + $0xf0] sm:$0xff]
  %v46 = vld [vmem:[%s0 + $0xf8] sm:$0xff]
  %v47 = vpack.c.bf16 %v17, %v15
  %v48 = vpack.c.bf16 %v18, %v16
  %v49 = vpack.c.bf16 %v21, %v19
  %v50 = vpack.c.bf16 %v22, %v20
  %v51 = vpack.c.bf16 %v25, %v23
  %v52 = vpack.c.bf16 %v26, %v24
  %v53 = vpack.c.bf16 %v29, %v27
  %v54 = vpack.c.bf16 %v30, %v28
  %v55 = vpack.c.bf16 %v33, %v31
  %v56 = vpack.c.bf16 %v34, %v32
  %v57 = vpack.c.bf16 %v37, %v35
  %v58 = vpack.c.bf16 %v38, %v36
  %v59 = vpack.c.bf16 %v41, %v39
  %v60 = vpack.c.bf16 %v42, %v40
  %v61 = vpack.c.bf16 %v45, %v43
  %v62 = vpack.c.bf16 %v46, %v44
  %v63 = vld [vmem:[%s1] sm:$0xf]
  %v64 = vld [vmem:[%s1 + $0x4] sm:$0xf]
  %v65 = vld [vmem:[%s1 + $0x8] sm:$0xf]
  %v66 = vld [vmem:[%s1 + $0xc] sm:$0xf]
  %v67 = vld [vmem:[%s1 + $0x10] sm:$0xf]
  %v68 = vld [vmem:[%s1 + $0x14] sm:$0xf]
  %v69 = vld [vmem:[%s1 + $0x18] sm:$0xf]
  %v70 = vld [vmem:[%s1 + $0x1c] sm:$0xf]
  %v71 = vld [vmem:[%s1 + $0x20] sm:$0xf]
  %v72 = vld [vmem:[%s1 + $0x24] sm:$0xf]
  %v73 = vld [vmem:[%s1 + $0x28] sm:$0xf]
  %v74 = vld [vmem:[%s1 + $0x2c] sm:$0xf]
  %v75 = vld [vmem:[%s1 + $0x30] sm:$0xf]
  %v76 = vld [vmem:[%s1 + $0x34] sm:$0xf]
  %v77 = vld [vmem:[%s1 + $0x38] sm:$0xf]
  %v78 = vld [vmem:[%s1 + $0x3c] sm:$0xf]
  %v79 = vld [vmem:[%s1 + $0x40] sm:$0xf]
  %v80 = vld [vmem:[%s1 + $0x44] sm:$0xf]
  %v81 = vld [vmem:[%s1 + $0x48] sm:$0xf]
  %v82 = vld [vmem:[%s1 + $0x4c] sm:$0xf]
  %v83 = vld [vmem:[%s1 + $0x50] sm:$0xf]
  %v84 = vld [vmem:[%s1 + $0x54] sm:$0xf]
  %v85 = vld [vmem:[%s1 + $0x58] sm:$0xf]
  %v86 = vld [vmem:[%s1 + $0x5c] sm:$0xf]
  %v87 = vld [vmem:[%s1 + $0x60] sm:$0xf]
  %v88 = vld [vmem:[%s1 + $0x64] sm:$0xf]
  %v89 = vld [vmem:[%s1 + $0x68] sm:$0xf]
  %v90 = vld [vmem:[%s1 + $0x6c] sm:$0xf]
  %v91 = vld [vmem:[%s1 + $0x70] sm:$0xf]
  %v92 = vld [vmem:[%s1 + $0x74] sm:$0xf]
  %v93 = vld [vmem:[%s1 + $0x78] sm:$0xf]
  %v94 = vld [vmem:[%s1 + $0x7c] sm:$0x1]
  %v95 = vld [vmem:[%s2] sm:$0x1]
  %v97 = vlaneseq
  %v98 = vshrl.u32 %v97, 7
  %v99 = vsub.s32 0, %v98
  %v100 = vrot.slane %v95, %v99
  %v134 = vunpack.c.l.b16 %v63
  %v135 = vunpack.c.l.b16 %v64
  %v136 = vunpack.c.l.b16 %v65
  %v137 = vunpack.c.l.b16 %v66
  %v138 = vunpack.c.l.b16 %v67
  %v139 = vunpack.c.l.b16 %v68
  %v140 = vunpack.c.l.b16 %v69
  %v141 = vunpack.c.l.b16 %v70
  %v142 = vunpack.c.l.b16 %v71
  %v143 = vunpack.c.l.b16 %v72
  %v144 = vunpack.c.l.b16 %v73
  %v145 = vunpack.c.l.b16 %v74
  %v146 = vunpack.c.l.b16 %v75
  %v147 = vunpack.c.l.b16 %v76
  %v148 = vunpack.c.l.b16 %v77
  %v149 = vunpack.c.l.b16 %v78
  %v150 = vunpack.c.l.b16 %v79
  %v151 = vunpack.c.l.b16 %v80
  %v152 = vunpack.c.l.b16 %v81
  %v153 = vunpack.c.l.b16 %v82
  %v154 = vunpack.c.l.b16 %v83
  %v155 = vunpack.c.l.b16 %v84
  %v156 = vunpack.c.l.b16 %v85
  %v157 = vunpack.c.l.b16 %v86
  %v158 = vunpack.c.l.b16 %v87
  %v159 = vunpack.c.l.b16 %v88
  %v160 = vunpack.c.l.b16 %v89
  %v161 = vunpack.c.l.b16 %v90
  %v162 = vunpack.c.l.b16 %v91
  %v163 = vunpack.c.l.b16 %v92
  %v164 = vunpack.c.l.b16 %v93
  %v165 = vunpack.c.l.b16 %v94
  %v166 = vpack.c.b16 %v135, %v134
  %v167 = vpack.c.b16 %v137, %v136
  %v168 = vpack.c.b16 %v139, %v138
  %v169 = vpack.c.b16 %v141, %v140
  %v170 = vpack.c.b16 %v143, %v142
  %v171 = vpack.c.b16 %v145, %v144
  %v172 = vpack.c.b16 %v147, %v146
  %v173 = vpack.c.b16 %v149, %v148
  %v174 = vpack.c.b16 %v151, %v150
  %v175 = vpack.c.b16 %v153, %v152
  %v176 = vpack.c.b16 %v155, %v154
  %v177 = vpack.c.b16 %v157, %v156
  %v178 = vpack.c.b16 %v159, %v158
  %v179 = vpack.c.b16 %v161, %v160
  %v180 = vpack.c.b16 %v163, %v162
  %v181 = vpack.c.b16 %v165, %v164
  %vm197 = vcmask 998400
  %v199 = vsel %vm197, %v48, 0
  %v202 = vsel %vm197, %v50, 0
  %v205 = vsel %vm197, %v52, 0
  %v208 = vsel %vm197, %v54, 0
  %v211 = vsel %vm197, %v56, 0
  %v214 = vsel %vm197, %v58, 0
  %v217 = vsel %vm197, %v60, 0
  %v220 = vsel %vm197, %v62, 0
  %vm222 = vcmask 1044480
  %v224 = vsel %vm222, %v181, 0
  %226 = vmatprep.subr.bf16.mxu0 0
  %227 = vmatpush1.bf16.msra.mxu0 %v166
  %228 = vmatprep.subr.bf16.mxu0 0
  %229 = vmatpush1.bf16.msra.mxu0 %v167
  %230 = vmatprep.subr.bf16.mxu0 0
  %231 = vmatpush1.bf16.msra.mxu0 %v168
  %232 = vmatprep.subr.bf16.mxu0 0
  %233 = vmatpush1.bf16.msra.mxu0 %v169
  %234 = vmatprep.subr.bf16.mxu0 0
  %235 = vmatpush1.bf16.msra.mxu0 %v170
  %236 = vmatprep.subr.bf16.mxu0 0
  %237 = vmatpush1.bf16.msra.mxu0 %v171
  %238 = vmatprep.subr.bf16.mxu0 0
  %239 = vmatpush1.bf16.msra.mxu0 %v172
  %240 = vmatprep.subr.bf16.mxu0 0
  %241 = vmatpush1.bf16.msra.mxu0 %v173
  %242 = vmatprep.subr.bf16.mxu0 0
  %243 = vmatpush1.bf16.msra.mxu0 %v174
  %244 = vmatprep.subr.bf16.mxu0 0
  %245 = vmatpush1.bf16.msra.mxu0 %v175
  %246 = vmatprep.subr.bf16.mxu0 0
  %247 = vmatpush1.bf16.msra.mxu0 %v176
  %248 = vmatprep.subr.bf16.mxu0 0
  %249 = vmatpush1.bf16.msra.mxu0 %v177
  %250 = vmatprep.subr.bf16.mxu0 0
  %251 = vmatpush1.bf16.msra.mxu0 %v178
  %252 = vmatprep.subr.bf16.mxu0 0
  %253 = vmatpush1.bf16.msra.mxu0 %v179
  %254 = vmatprep.subr.bf16.mxu0 0
  %255 = vmatpush1.bf16.msra.mxu0 %v180
  %256 = vmatprep.subr.bf16.mxu0 0
  %257 = vmatpush1.bf16.msra.mxu0 %v224
  %258 = vmatprep.mubr.bf16.mxu0 %v199
  %259 = vmatmul.mubr.bf16.gmra.mrb[0].mxu0 %v47
  %v260 = vpop.f32.mrb[0].mxu0
  %v261 = vadd.f32 %v100, %v260
  %v262 = vpop.f32.mrb[0].mxu0
  %v263 = vpop.f32.mrb[0].mxu0
  %v264 = vadd.f32 %v100, %v263
  %v265 = vpop.f32.mrb[0].mxu0
  %266 = vmatprep.mubr.bf16.mxu0 %v202
  %267 = vmatmul.mubr.bf16.gmra.mrb[0].mxu0 %v49
  %v268 = vpop.f32.mrb[0].mxu0
  %v269 = vadd.f32 %v100, %v268
  %v270 = vpop.f32.mrb[0].mxu0
  %v271 = vpop.f32.mrb[0].mxu0
  %v272 = vadd.f32 %v100, %v271
  %v273 = vpop.f32.mrb[0].mxu0
  %274 = vmatprep.mubr.bf16.mxu0 %v205
  %275 = vmatmul.mubr.bf16.gmra.mrb[0].mxu0 %v51
  %v276 = vpop.f32.mrb[0].mxu0
  %v277 = vadd.f32 %v100, %v276
  %v278 = vpop.f32.mrb[0].mxu0
  %v279 = vpop.f32.mrb[0].mxu0
  %v280 = vadd.f32 %v100, %v279
  %v281 = vpop.f32.mrb[0].mxu0
  %282 = vmatprep.mubr.bf16.mxu0 %v208
  %283 = vmatmul.mubr.bf16.gmra.mrb[0].mxu0 %v53
  %v284 = vpop.f32.mrb[0].mxu0
  %v285 = vadd.f32 %v100, %v284
  %v286 = vpop.f32.mrb[0].mxu0
  %v287 = vpop.f32.mrb[0].mxu0
  %v288 = vadd.f32 %v100, %v287
  %v289 = vpop.f32.mrb[0].mxu0
  %290 = vmatprep.mubr.bf16.mxu0 %v211
  %291 = vmatmul.mubr.bf16.gmra.mrb[0].mxu0 %v55
  %v292 = vpop.f32.mrb[0].mxu0
  %v293 = vadd.f32 %v100, %v292
  %v294 = vpop.f32.mrb[0].mxu0
  %v295 = vpop.f32.mrb[0].mxu0
  %v296 = vadd.f32 %v100, %v295
  %v297 = vpop.f32.mrb[0].mxu0
  %298 = vmatprep.mubr.bf16.mxu0 %v214
  %299 = vmatmul.mubr.bf16.gmra.mrb[0].mxu0 %v57
  %v300 = vpop.f32.mrb[0].mxu0
  %v301 = vadd.f32 %v100, %v300
  %v302 = vpop.f32.mrb[0].mxu0
  %v303 = vpop.f32.mrb[0].mxu0
  %v304 = vadd.f32 %v100, %v303
  %v305 = vpop.f32.mrb[0].mxu0
  %306 = vmatprep.mubr.bf16.mxu0 %v217
  %307 = vmatmul.mubr.bf16.gmra.mrb[0].mxu0 %v59
  %v308 = vpop.f32.mrb[0].mxu0
  %v309 = vadd.f32 %v100, %v308
  %v310 = vpop.f32.mrb[0].mxu0
  %v311 = vpop.f32.mrb[0].mxu0
  %v312 = vadd.f32 %v100, %v311
  %v313 = vpop.f32.mrb[0].mxu0
  %314 = vmatprep.mubr.bf16.mxu0 %v220
  %315 = vmatmul.mubr.bf16.gmra.mrb[0].mxu0 %v61
  %v316 = vpop.f32.mrb[0].mxu0
  %v317 = vadd.f32 %v100, %v316
  %v318 = vpop.f32.mrb[0].mxu0
  %v319 = vpop.f32.mrb[0].mxu0
  %v320 = vadd.f32 %v100, %v319
  %v321 = vpop.f32.mrb[0].mxu0
  %322 = vdwg.mxu0
  %v323 = vmax.f32 %v261, 0.0
  %v324 = vmax.f32 %v264, 0.0
  %v325 = vmax.f32 %v269, 0.0
  %v326 = vmax.f32 %v272, 0.0
  %v327 = vmax.f32 %v277, 0.0
  %v328 = vmax.f32 %v280, 0.0
  %v329 = vmax.f32 %v285, 0.0
  %v330 = vmax.f32 %v288, 0.0
  %v331 = vmax.f32 %v293, 0.0
  %v332 = vmax.f32 %v296, 0.0
  %v333 = vmax.f32 %v301, 0.0
  %v334 = vmax.f32 %v304, 0.0
  %v335 = vmax.f32 %v309, 0.0
  %v336 = vmax.f32 %v312, 0.0
  %v337 = vmax.f32 %v317, 0.0
  %v338 = vmax.f32 %v320, 0.0
  %339 = vst [vmem:[%s3] sm:$0xff] %v323
  %340 = vst [vmem:[%s3 + $0x8] sm:$0xff] %v324
  %341 = vst [vmem:[%s3 + $0x10] sm:$0xff] %v325
  %342 = vst [vmem:[%s3 + $0x18] sm:$0xff] %v326
  %343 = vst [vmem:[%s3 + $0x20] sm:$0xff] %v327
  %344 = vst [vmem:[%s3 + $0x28] sm:$0xff] %v328
  %345 = vst [vmem:[%s3 + $0x30] sm:$0xff] %v329
  %346 = vst [vmem:[%s3 + $0x38] sm:$0xff] %v330
  %347 = vst [vmem:[%s3 + $0x40] sm:$0xff] %v331
  %348 = vst [vmem:[%s3 + $0x48] sm:$0xff] %v332
  %349 = vst [vmem:[%s3 + $0x50] sm:$0xff] %v333
  %350 = vst [vmem:[%s3 + $0x58] sm:$0xff] %v334
  %351 = vst [vmem:[%s3 + $0x60] sm:$0xff] %v335
  %352 = vst [vmem:[%s3 + $0x68] sm:$0xff] %v336
  %353 = vst [vmem:[%s3 + $0x70] sm:$0xff] %v337
  %354 = vst [vmem:[%s3 + $0x78] sm:$0xff] %v338
  // Predicated region
  $region14: #{net_forward.13} parent=0 // pred_check
    _
  $region15: #{net_forward.13} parent=0 // pred_check_branch
    %356 = sbr.rel (0) target = $region17
  $region16: #{net_forward.13} parent=0 // pred_region
    _
  $region17: #{net_forward.13} parent=0 // pred_fallthru
    _
  // Predicated region
  $region18: #{net_forward.13} parent=0 // pred_check
    _
  $region19: #{net_forward.13} parent=0 // pred_check_branch
    %358 = sbr.rel (0) target = $region21
  $region20: #{net_forward.13} parent=0 // pred_region
    _
  $region21: #{net_forward.13} parent=0 // pred_fallthru
    _

// kernel: net_forward.14
$region0: #{net_forward.14}
  #allocation0 [shape = 'u32[]', space=smem, size = 0x4, offset = 0x4, fixed_abs, tag = 'smem constant byte address 0x4 - core index']
  #allocation1 [shape = 'u32[144,128]{1,0:T(1,128)}', space=vmem, size = 0x12000, scoped, tag = 'internal scratch']
  %s0 = inlined_call_operand.vmem [shape: f32[2,320], index: 0, kind: input, shape index: {}]
  %s1 = inlined_call_operand.vmem [shape: bf16[320,128], index: 1, kind: input, shape index: {}]
  %s2 = inlined_call_operand.vmem [shape: f32[1,128], index: 2, kind: input, shape index: {}]
  %s3 = inlined_call_operand.vmem [shape: f32[2,128], index: 3, kind: output, shape index: {}]
  %s4 = sld [smem:[#allocation0]]
  $region22: #{net_forward.14} parent=0
    _
  %s6 = ssub.s32 1, %s4
  %s7 = scalar_select 0, %s6, %s4
  // Predicated region
  $region2: #{net_forward.14} parent=0 // pred_check
    _
  $region3: #{net_forward.14} parent=0 // pred_check_branch
    %9 = sbr.rel (0) target = $region5
  $region4: #{net_forward.14} parent=0 // pred_region
    _
  $region5: #{net_forward.14} parent=0 // pred_fallthru
    _
  // Predicated region
  $region6: #{net_forward.14} parent=0 // pred_check
    _
  $region7: #{net_forward.14} parent=0 // pred_check_branch
    %11 = sbr.rel (0) target = $region9
  $region8: #{net_forward.14} parent=0 // pred_region
    _
  $region9: #{net_forward.14} parent=0 // pred_fallthru
    _
  // Predicated region
  $region10: #{net_forward.14} parent=0 // pred_check
    _
  $region11: #{net_forward.14} parent=0 // pred_check_branch
    %13 = sbr.rel (0) target = $region13
  $region12: #{net_forward.14} parent=0 // pred_region
    _
  $region13: #{net_forward.14} parent=0 // pred_fallthru
    _
  %v15 = vld [vmem:[%s0] sm:$0x3f]
  %v17 = vcombine.high %v15, %v15
  %v19 = vunpack.c.l.s4 1983009808
  %v20 = vunpack.c.0.s8 %v19
  %v21 = vlaneseq
  %v22 = vshrl.u32 %v21, 7
  %v23 = vsub.s32 %v20, %v22
  %v24 = vrot.slane %v15, %v23
  %v26 = vunpack.c.l.s4 1983009808
  %v27 = vunpack.c.0.s8 %v26
  %v28 = vlaneseq
  %v29 = vshrl.u32 %v28, 7
  %v30 = vsub.s32 %v27, %v29
  %v31 = vrot.slane %v17, %v30
  %v32 = vcombine.high %v24, %v24
  %v36 = vpack.c.bf16 %v24, %v24
  %v37 = vpack.c.bf16 %v32, %v32
  %v38 = vpack.c.bf16 %v31, %v31
  %v39 = vld [vmem:[%s1] sm:$0xf]
  %v40 = vld [vmem:[%s1 + $0x4] sm:$0xf]
  %v41 = vld [vmem:[%s1 + $0x8] sm:$0xf]
  %v42 = vld [vmem:[%s1 + $0xc] sm:$0xf]
  %v43 = vld [vmem:[%s1 + $0x10] sm:$0xf]
  %v44 = vld [vmem:[%s1 + $0x14] sm:$0xf]
  %v45 = vld [vmem:[%s1 + $0x18] sm:$0xf]
  %v46 = vld [vmem:[%s1 + $0x1c] sm:$0xf]
  %v47 = vld [vmem:[%s1 + $0x20] sm:$0xf]
  %v48 = vld [vmem:[%s1 + $0x24] sm:$0xf]
  %v49 = vld [vmem:[%s1 + $0x28] sm:$0xf]
  %v50 = vld [vmem:[%s1 + $0x2c] sm:$0xf]
  %v51 = vld [vmem:[%s1 + $0x30] sm:$0xf]
  %v52 = vld [vmem:[%s1 + $0x34] sm:$0xf]
  %v53 = vld [vmem:[%s1 + $0x38] sm:$0xf]
  %v54 = vld [vmem:[%s1 + $0x3c] sm:$0xf]
  %v55 = vld [vmem:[%s1 + $0x40] sm:$0xf]
  %v56 = vld [vmem:[%s1 + $0x44] sm:$0xf]
  %v57 = vld [vmem:[%s1 + $0x48] sm:$0xf]
  %v58 = vld [vmem:[%s1 + $0x4c] sm:$0xf]
  %v59 = vld [vmem:[%s1 + $0x50] sm:$0xf]
  %v60 = vld [vmem:[%s1 + $0x54] sm:$0xf]
  %v61 = vld [vmem:[%s1 + $0x58] sm:$0xf]
  %v62 = vld [vmem:[%s1 + $0x5c] sm:$0xf]
  %v63 = vld [vmem:[%s1 + $0x60] sm:$0xf]
  %v64 = vld [vmem:[%s1 + $0x64] sm:$0xf]
  %v65 = vld [vmem:[%s1 + $0x68] sm:$0xf]
  %v66 = vld [vmem:[%s1 + $0x6c] sm:$0xf]
  %v67 = vld [vmem:[%s1 + $0x70] sm:$0xf]
  %v68 = vld [vmem:[%s1 + $0x74] sm:$0xf]
  %v69 = vld [vmem:[%s1 + $0x78] sm:$0xf]
  %v70 = vld [vmem:[%s1 + $0x7c] sm:$0xf]
  %v71 = vld [vmem:[%s1 + $0x80] sm:$0xf]
  %v72 = vld [vmem:[%s1 + $0x84] sm:$0xf]
  %v73 = vld [vmem:[%s1 + $0x88] sm:$0xf]
  %v74 = vld [vmem:[%s1 + $0x8c] sm:$0xf]
  %v75 = vld [vmem:[%s1 + $0x90] sm:$0xf]
  %v76 = vld [vmem:[%s1 + $0x94] sm:$0xf]
  %v77 = vld [vmem:[%s1 + $0x98] sm:$0xf]
  %v78 = vld [vmem:[%s1 + $0x9c] sm:$0xf]
  %v79 = vld [vmem:[%s2] sm:$0x1]
  %v81 = vlaneseq
  %v82 = vshrl.u32 %v81, 7
  %v83 = vsub.s32 0, %v82
  %v84 = vrot.slane %v79, %v83
  %v126 = vunpack.c.l.b16 %v39
  %v127 = vunpack.c.l.b16 %v40
  %v128 = vunpack.c.l.b16 %v41
  %v129 = vunpack.c.l.b16 %v42
  %v130 = vunpack.c.l.b16 %v43
  %v131 = vunpack.c.l.b16 %v44
  %v132 = vunpack.c.l.b16 %v45
  %v133 = vunpack.c.l.b16 %v46
  %v134 = vunpack.c.l.b16 %v47
  %v135 = vunpack.c.l.b16 %v48
  %v136 = vunpack.c.l.b16 %v49
  %v137 = vunpack.c.l.b16 %v50
  %v138 = vunpack.c.l.b16 %v51
  %v139 = vunpack.c.l.b16 %v52
  %v140 = vunpack.c.l.b16 %v53
  %v141 = vunpack.c.l.b16 %v54
  %v142 = vunpack.c.l.b16 %v55
  %v143 = vunpack.c.l.b16 %v56
  %v144 = vunpack.c.l.b16 %v57
  %v145 = vunpack.c.l.b16 %v58
  %v146 = vunpack.c.l.b16 %v59
  %v147 = vunpack.c.l.b16 %v60
  %v148 = vunpack.c.l.b16 %v61
  %v149 = vunpack.c.l.b16 %v62
  %v150 = vunpack.c.l.b16 %v63
  %v151 = vunpack.c.l.b16 %v64
  %v152 = vunpack.c.l.b16 %v65
  %v153 = vunpack.c.l.b16 %v66
  %v154 = vunpack.c.l.b16 %v67
  %v155 = vunpack.c.l.b16 %v68
  %v156 = vunpack.c.l.b16 %v69
  %v157 = vunpack.c.l.b16 %v70
  %v158 = vunpack.c.l.b16 %v71
  %v159 = vunpack.c.l.b16 %v72
  %v160 = vunpack.c.l.b16 %v73
  %v161 = vunpack.c.l.b16 %v74
  %v162 = vunpack.c.l.b16 %v75
  %v163 = vunpack.c.l.b16 %v76
  %v164 = vunpack.c.l.b16 %v77
  %v165 = vunpack.c.l.b16 %v78
  %v166 = vpack.c.b16 %v127, %v126
  %v167 = vpack.c.b16 %v129, %v128
  %v168 = vpack.c.b16 %v131, %v130
  %v169 = vpack.c.b16 %v133, %v132
  %v170 = vpack.c.b16 %v135, %v134
  %v171 = vpack.c.b16 %v137, %v136
  %v172 = vpack.c.b16 %v139, %v138
  %v173 = vpack.c.b16 %v141, %v140
  %v174 = vpack.c.b16 %v143, %v142
  %v175 = vpack.c.b16 %v145, %v144
  %v176 = vpack.c.b16 %v147, %v146
  %v177 = vpack.c.b16 %v149, %v148
  %v178 = vpack.c.b16 %v151, %v150
  %v179 = vpack.c.b16 %v153, %v152
  %v180 = vpack.c.b16 %v155, %v154
  %v181 = vpack.c.b16 %v157, %v156
  %v182 = vpack.c.b16 %v159, %v158
  %v183 = vpack.c.b16 %v161, %v160
  %v184 = vpack.c.b16 %v163, %v162
  %v185 = vpack.c.b16 %v165, %v164
  %vm206 = vcmask 523264
  %v208 = vsel %vm206, %v38, 0
  %210 = vmatprep.subr.bf16.mxu0 0
  %211 = vmatpush1.bf16.msra.mxu0 %v166
  %212 = vmatprep.subr.bf16.mxu0 0
  %213 = vmatpush1.bf16.msra.mxu0 %v167
  %214 = vmatprep.subr.bf16.mxu0 0
  %215 = vmatpush1.bf16.msra.mxu0 %v168
  %216 = vmatprep.subr.bf16.mxu0 0
  %217 = vmatpush1.bf16.msra.mxu0 %v169
  %218 = vmatprep.subr.bf16.mxu0 0
  %219 = vmatpush1.bf16.msra.mxu0 %v170
  %220 = vmatprep.subr.bf16.mxu0 0
  %221 = vmatpush1.bf16.msra.mxu0 %v171
  %222 = vmatprep.subr.bf16.mxu0 0
  %223 = vmatpush1.bf16.msra.mxu0 %v172
  %224 = vmatprep.subr.bf16.mxu0 0
  %225 = vmatpush1.bf16.msra.mxu0 %v173
  %226 = vmatprep.subr.bf16.mxu0 0
  %227 = vmatpush1.bf16.msra.mxu0 %v174
  %228 = vmatprep.subr.bf16.mxu0 0
  %229 = vmatpush1.bf16.msra.mxu0 %v175
  %230 = vmatprep.subr.bf16.mxu0 0
  %231 = vmatpush1.bf16.msra.mxu0 %v176
  %232 = vmatprep.subr.bf16.mxu0 0
  %233 = vmatpush1.bf16.msra.mxu0 %v177
  %234 = vmatprep.subr.bf16.mxu0 0
  %235 = vmatpush1.bf16.msra.mxu0 %v178
  %236 = vmatprep.subr.bf16.mxu0 0
  %237 = vmatpush1.bf16.msra.mxu0 %v179
  %238 = vmatprep.subr.bf16.mxu0 0
  %239 = vmatpush1.bf16.msra.mxu0 %v180
  %240 = vmatprep.subr.bf16.mxu0 0
  %241 = vmatpush1.bf16.msra.mxu0 %v181
  %242 = vmatprep.mubr.bf16.mxu0 %v37
  %243 = vmatmul.mubr.bf16.gmra.mrb[0].mxu0 %v36
  %v244 = vpop.f32.mrb[0].mxu0
  %v245 = vadd.f32 %v84, %v244
  %v246 = vpop.f32.mrb[0].mxu0
  %v247 = vpop.f32.mrb[0].mxu0
  %v248 = vpop.f32.mrb[0].mxu0
  %249 = vdwg.mxu0
  %250 = vmatprep.subr.bf16.mxu0 0
  %251 = vmatpush1.bf16.msra.mxu0 %v182
  %252 = vmatprep.subr.bf16.mxu0 0
  %253 = vmatpush1.bf16.msra.mxu0 %v183
  %254 = vmatprep.subr.bf16.mxu0 0
  %255 = vmatpush1.bf16.msra.mxu0 %v184
  %256 = vmatprep.subr.bf16.mxu0 0
  %257 = vmatpush1.bf16.msra.mxu0 %v185
  %258 = vmatprep.subr.bf16.mxu0 0
  %259 = vmatpush1.bf16.msra.mxu0 0
  %260 = vmatprep.subr.bf16.mxu0 0
  %261 = vmatpush1.bf16.msra.mxu0 0
  %262 = vmatprep.subr.bf16.mxu0 0
  %263 = vmatpush1.bf16.msra.mxu0 0
  %264 = vmatprep.subr.bf16.mxu0 0
  %265 = vmatpush1.bf16.msra.mxu0 0
  %266 = vmatprep.subr.bf16.mxu0 0
  %267 = vmatpush1.bf16.msra.mxu0 0
  %268 = vmatprep.subr.bf16.mxu0 0
  %269 = vmatpush1.bf16.msra.mxu0 0
  %270 = vmatprep.subr.bf16.mxu0 0
  %271 = vmatpush1.bf16.msra.mxu0 0
  %272 = vmatprep.subr.bf16.mxu0 0
  %273 = vmatpush1.bf16.msra.mxu0 0
  %274 = vmatprep.subr.bf16.mxu0 0
  %275 = vmatpush1.bf16.msra.mxu0 0
  %276 = vmatprep.subr.bf16.mxu0 0
  %277 = vmatpush1.bf16.msra.mxu0 0
  %278 = vmatprep.subr.bf16.mxu0 0
  %279 = vmatpush1.bf16.msra.mxu0 0
  %280 = vmatprep.subr.bf16.mxu0 0
  %281 = vmatpush1.bf16.msra.mxu0 0
  %282 = vmatprep.mubr.bf16.mxu0 0
  %283 = vmatmul.mubr.bf16.gmra.mrb[0].mxu0 %v208
  %v284 = vpop.f32.mrb[0].mxu0
  %v285 = vadd.f32 %v245, %v284
  %v286 = vpop.f32.mrb[0].mxu0
  %v287 = vpop.f32.mrb[0].mxu0
  %v288 = vpop.f32.mrb[0].mxu0
  %289 = vdwg.mxu0
  %v290 = vmax.f32 %v285, 0.0
  %291 = vst [vmem:[%s3] sm:$0x3] %v290
  // Predicated region
  $region14: #{net_forward.14} parent=0 // pred_check
    _
  $region15: #{net_forward.14} parent=0 // pred_check_branch
    %293 = sbr.rel (0) target = $region17
  $region16: #{net_forward.14} parent=0 // pred_region
    _
  $region17: #{net_forward.14} parent=0 // pred_fallthru
    _
  // Predicated region
  $region18: #{net_forward.14} parent=0 // pred_check
    _
  $region19: #{net_forward.14} parent=0 // pred_check_branch
    %295 = sbr.rel (0) target = $region21
  $region20: #{net_forward.14} parent=0 // pred_region
    _
  $region21: #{net_forward.14} parent=0 // pred_fallthru
    _

// kernel: net_forward.15
$region0: #{net_forward.15}
  #allocation0 [shape = 'u32[]', space=smem, size = 0x4, offset = 0x4, fixed_abs, tag = 'smem constant byte address 0x4 - core index']
  #allocation1 [shape = 'u32[144,128]{1,0:T(1,128)}', space=vmem, size = 0x12000, scoped, tag = 'internal scratch']
  %s0 = inlined_call_operand.vmem [shape: f32[2,128], index: 0, kind: input, shape index: {}]
  %s1 = inlined_call_operand.vmem [shape: bf16[128,128], index: 1, kind: input, shape index: {}]
  %s2 = inlined_call_operand.vmem [shape: f32[1,128], index: 2, kind: input, shape index: {}]
  %s3 = inlined_call_operand.hbm [shape: f32[2,128], index: 3, kind: output, shape index: {}]
  %s4 = sld [smem:[#allocation0]]
  $region22: #{net_forward.15} parent=0
    _
  %s6 = ssub.s32 1, %s4
  %s7 = scalar_select 0, %s6, %s4
  $region1: #{net_forward.15} parent=0
    #allocation2 [shape = 'u8[1024]{0}', space=vmem, size = 0x400, scoped, tag = 'output window, operand 0, single buffered']
    #allocation3 [shape = 's32[1]{0}', space=sflag, size = 0x4, scoped, tag = 'scoped memory for net_forward.15']
    %8 = vsyncpa [#allocation3], 0
    // Predicated region
    $region2: #{net_forward.15} parent=1 // pred_check
      _
    $region3: #{net_forward.15} parent=1 // pred_check_branch
      %10 = sbr.rel (0) target = $region5
    $region4: #{net_forward.15} parent=1 // pred_region
      _
    $region5: #{net_forward.15} parent=1 // pred_fallthru
      _
    // Predicated region
    $region6: #{net_forward.15} parent=1 // pred_check
      _
    $region7: #{net_forward.15} parent=1 // pred_check_branch
      %12 = sbr.rel (0) target = $region9
    $region8: #{net_forward.15} parent=1 // pred_region
      _
    $region9: #{net_forward.15} parent=1 // pred_fallthru
      _
    // Predicated region
    $region10: #{net_forward.15} parent=1 // pred_check
      _
    $region11: #{net_forward.15} parent=1 // pred_check_branch
      %14 = sbr.rel (0) target = $region13
    $region12: #{net_forward.15} parent=1 // pred_region
      _
    $region13: #{net_forward.15} parent=1 // pred_fallthru
      _
    %v16 = vld [vmem:[%s0] sm:$0x3]
    %v17 = vpack.c.bf16 %v16, %v16
    %v18 = vld [vmem:[%s1] sm:$0xf]
    %v19 = vld [vmem:[%s1 + $0x4] sm:$0xf]
    %v20 = vld [vmem:[%s1 + $0x8] sm:$0xf]
    %v21 = vld [vmem:[%s1 + $0xc] sm:$0xf]
    %v22 = vld [vmem:[%s1 + $0x10] sm:$0xf]
    %v23 = vld [vmem:[%s1 + $0x14] sm:$0xf]
    %v24 = vld [vmem:[%s1 + $0x18] sm:$0xf]
    %v25 = vld [vmem:[%s1 + $0x1c] sm:$0xf]
    %v26 = vld [vmem:[%s1 + $0x20] sm:$0xf]
    %v27 = vld [vmem:[%s1 + $0x24] sm:$0xf]
    %v28 = vld [vmem:[%s1 + $0x28] sm:$0xf]
    %v29 = vld [vmem:[%s1 + $0x2c] sm:$0xf]
    %v30 = vld [vmem:[%s1 + $0x30] sm:$0xf]
    %v31 = vld [vmem:[%s1 + $0x34] sm:$0xf]
    %v32 = vld [vmem:[%s1 + $0x38] sm:$0xf]
    %v33 = vld [vmem:[%s1 + $0x3c] sm:$0xf]
    %v34 = vld [vmem:[%s2] sm:$0x1]
    %v36 = vlaneseq
    %v37 = vshrl.u32 %v36, 7
    %v38 = vsub.s32 0, %v37
    %v39 = vrot.slane %v34, %v38
    %v57 = vunpack.c.l.b16 %v18
    %v58 = vunpack.c.l.b16 %v19
    %v59 = vunpack.c.l.b16 %v20
    %v60 = vunpack.c.l.b16 %v21
    %v61 = vunpack.c.l.b16 %v22
    %v62 = vunpack.c.l.b16 %v23
    %v63 = vunpack.c.l.b16 %v24
    %v64 = vunpack.c.l.b16 %v25
    %v65 = vunpack.c.l.b16 %v26
    %v66 = vunpack.c.l.b16 %v27
    %v67 = vunpack.c.l.b16 %v28
    %v68 = vunpack.c.l.b16 %v29
    %v69 = vunpack.c.l.b16 %v30
    %v70 = vunpack.c.l.b16 %v31
    %v71 = vunpack.c.l.b16 %v32
    %v72 = vunpack.c.l.b16 %v33
    %v73 = vpack.c.b16 %v58, %v57
    %v74 = vpack.c.b16 %v60, %v59
    %v75 = vpack.c.b16 %v62, %v61
    %v76 = vpack.c.b16 %v64, %v63
    %v77 = vpack.c.b16 %v66, %v65
    %v78 = vpack.c.b16 %v68, %v67
    %v79 = vpack.c.b16 %v70, %v69
    %v80 = vpack.c.b16 %v72, %v71
    %89 = vmatprep.subr.bf16.mxu0 0
    %90 = vmatpush1.bf16.msra.mxu0 %v73
    %91 = vmatprep.subr.bf16.mxu0 0
    %92 = vmatpush1.bf16.msra.mxu0 %v74
    %93 = vmatprep.subr.bf16.mxu0 0
    %94 = vmatpush1.bf16.msra.mxu0 %v75
    %95 = vmatprep.subr.bf16.mxu0 0
    %96 = vmatpush1.bf16.msra.mxu0 %v76
    %97 = vmatprep.subr.bf16.mxu0 0
    %98 = vmatpush1.bf16.msra.mxu0 %v77
    %99 = vmatprep.subr.bf16.mxu0 0
    %100 = vmatpush1.bf16.msra.mxu0 %v78
    %101 = vmatprep.subr.bf16.mxu0 0
    %102 = vmatpush1.bf16.msra.mxu0 %v79
    %103 = vmatprep.subr.bf16.mxu0 0
    %104 = vmatpush1.bf16.msra.mxu0 %v80
    %105 = vmatprep.subr.bf16.mxu0 0
    %106 = vmatpush1.bf16.msra.mxu0 0
    %107 = vmatprep.subr.bf16.mxu0 0
    %108 = vmatpush1.bf16.msra.mxu0 0
    %109 = vmatprep.subr.bf16.mxu0 0
    %110 = vmatpush1.bf16.msra.mxu0 0
    %111 = vmatprep.subr.bf16.mxu0 0
    %112 = vmatpush1.bf16.msra.mxu0 0
    %113 = vmatprep.subr.bf16.mxu0 0
    %114 = vmatpush1.bf16.msra.mxu0 0
    %115 = vmatprep.subr.bf16.mxu0 0
    %116 = vmatpush1.bf16.msra.mxu0 0
    %117 = vmatprep.subr.bf16.mxu0 0
    %118 = vmatpush1.bf16.msra.mxu0 0
    %119 = vmatprep.subr.bf16.mxu0 0
    %120 = vmatpush1.bf16.msra.mxu0 0
    %121 = vmatprep.mubr.bf16.mxu0 0
    %122 = vmatmul.mubr.bf16.gmra.mrb[0].mxu0 %v17
    %v123 = vpop.f32.mrb[0].mxu0
    %v124 = vadd.f32 %v39, %v123
    %v125 = vpop.f32.mrb[0].mxu0
    %v126 = vpop.f32.mrb[0].mxu0
    %v127 = vpop.f32.mrb[0].mxu0
    %128 = vdwg.mxu0
    %v129 = vlaneseq
    %v130 = vand.u32 %v129, 127
    %vm131 = vcmp.lt.s32.totalorder %v130, 10
    %v132 = vsel %vm131, %v124, -1e+30
    %vm133 = vcmask 1041408
    %v134 = vsel %vm133, %v132, -inf
    %135 = vmax.xlane.f32.xlu0 %v134
    %v136 = vpop.xlane.xlu0 %135
    %v137 = vsub.f32 %v132, %v136
    %v138 = vmul.f32 %v137, 1.442695
    %v139 = vpow.pop %v138
    %v140 = vsel %vm133, %v139, 0.0
    %141 = vadd.xlane.f32.xlu0 %v140
    %v142 = vpop.xlane.xlu0 %141
    %v143 = vlog2.pop %v142
    %v144 = vmul.f32 %v143, 0.6931472
    %v145 = vsub.f32 %v137, %v144
    %146 = vst [vmem:[#allocation2] sm:$0x3] %v145
    // Predicated region
    $region14: #{net_forward.15} parent=1 // pred_check
      _
    $region15: #{net_forward.15} parent=1 // pred_check_branch
      %148 = sbr.rel (0) target = $region17
    $region16: #{net_forward.15} parent=1 // pred_region
      %s150 = ssub.s32 32, 32
      %151 = vsyncadd [#allocation3], %s150
      %s153 = sshll.u32 [#allocation2], 4
      %s154 = int_to_ptr.vmem [resolvable:$true] %s153
      %156 = dma.vmem_to_hbm [thread:$0]  %s154, 32, %s3, [#allocation3]
    $region17: #{net_forward.15} parent=1 // pred_fallthru
      _
    // Predicated region
    $region18: #{net_forward.15} parent=1 // pred_check
      _
    $region19: #{net_forward.15} parent=1 // pred_check_branch
      %158 = sbr.rel (0) target = $region21
    $region20: #{net_forward.15} parent=1 // pred_region
      %159 = dma.done [#allocation3], 32
    $region21: #{net_forward.15} parent=1 // pred_fallthru
      _
    %160 = vsyncpa [#allocation3], 1

</llo_original>
